<compile_context>
chip_gen: v7x
topology: tpu7x:2x2x1
jax: 0.10.0
libtpu: 0.0.40
codegen_flags: <defaults>
</compile_context>

<pallas_src>
import functools

import jax
import jax.numpy as jnp
from jax.experimental import pallas as pl
from jax.experimental.pallas import tpu as pltpu

NUM_CLASSES = 4
C_IN = 3          # RGB input channels (efficientnet expects 3)
C_FEAT = 1536     # efficientnet_b3 classifier[1].in_features
LANE = 128        # TPU lane width


def _round_up(x, m):
    return ((x + m - 1) // m) * m


def effnet_head_kernel(x_ref, w1_ref, b1_ref, wfc_ref, bfc_ref, o_ref, acc_ref,
                       *, hw_total, hw_tile, inv_hw):
    """One (batch-tile, HW-tile) grid step of the fused head.

    x_ref  : (B_TILE, HW_TILE, C_IN)  bf16 pixels (channels on lanes)
    w1_ref : (C_IN, C_FEAT)           bf16 pointwise-conv weight (stand-in features)
    b1_ref : (1, C_FEAT)              f32 pointwise-conv bias
    wfc_ref: (C_FEAT, N_PAD)          f32 fc weight, zero-padded to 128 lanes
    bfc_ref: (1, N_PAD)               f32 fc bias, zero-padded
    o_ref  : (B_TILE, N_PAD)          f32 logits (padded); written on last HW tile
    acc_ref: (B_TILE, C_FEAT)         f32 running spatial sum of SiLU features
    """
    hw_id = pl.program_id(1)

    @pl.when(hw_id == 0)
    def _init():
        acc_ref[...] = jnp.zeros_like(acc_ref)

    b_tile, tile, c_in = x_ref.shape

    # Stand-in feature stage: pointwise conv as a single collapsed 2-D MXU
    # matmul (M = B_TILE*HW_TILE), f32 accumulation.
    x2d = x_ref[...].reshape(b_tile * tile, c_in)
    feat = jnp.dot(x2d, w1_ref[...], preferred_element_type=jnp.float32)
    feat = feat + b1_ref[...]
    # SiLU (kept in f32 so the identical code also runs on v5e).
    feat = feat * jax.nn.sigmoid(feat)
    feat = feat.reshape(b_tile, tile, -1)          # C_FEAT stays on lanes

    # Mask the tail tile explicitly (only traced when HW % HW_TILE != 0).
    if hw_total % hw_tile != 0:
        p_idx = hw_id * hw_tile + jax.lax.broadcasted_iota(
            jnp.int32, (1, tile, 1), 1)
        feat = jnp.where(p_idx < hw_total, feat, 0.0)

    # AdaptiveAvgPool2d((1,1)): running sum over spatial positions
    # (sublane adds); the 1/HW scale is applied once at finalize.
    acc_ref[...] += jnp.sum(feat, axis=1)

    @pl.when(hw_id == pl.num_programs(1) - 1)
    def _finalize():
        pooled = acc_ref[...] * inv_hw             # mean over H*W
        # Dropout(p=0.5) is identity at inference time.
        logits = jnp.dot(pooled, wfc_ref[...],
                         preferred_element_type=jnp.float32) + bfc_ref[...]
        o_ref[...] = logits.astype(o_ref.dtype)


def efficientnet_classifier(x_nchw, params, *, hw_tile=128):
    """NCHW image batch -> (B, NUM_CLASSES) logits via one tiled pallas_call."""
    w1, b1, wfc, bfc = params
    B, C, H, W = x_nchw.shape
    assert C == C_IN
    HW = H * W

    # NCHW -> (B, HW, C): channels on lanes for the MXU feature matmul, so the
    # SiLU features come out with C_FEAT on lanes and the pooling is a cheap
    # sublane reduction.  The transpose touches only B*HW*3 elements
    # (negligible next to the B*HW*1536 feature stage); cast to bf16 here to
    # halve HBM traffic for x.
    x = jnp.transpose(x_nchw, (0, 2, 3, 1)).reshape(B, HW, C).astype(jnp.bfloat16)

    # Spatial tile: multiple of 8 sublanes; per-step f32 feature tile stays a
    # few MiB so it fits v7x's 64 MiB VMEM with double-buffering headroom.
    # Raise hw_tile (2048-4096) on v5e/v6e if desired.
    if hw_tile >= HW:
        hw_tile = HW
    else:
        hw_tile = max(8, (hw_tile // 8) * 8)
    n_hw = pl.cdiv(HW, hw_tile)

    # Batch tile: "parallel" grid axis (feeds v7x's second TensorCore when the
    # batch is large enough to split across cores).
    b_tile = 8 if (B % 8 == 0) else B
    n_b = B // b_tile

    # Zero-pad the fc weight/bias/output to 128 lanes -> lane-dense stores.
    n_pad = _round_up(NUM_CLASSES, LANE)
    wfc_p = jnp.zeros((C_FEAT, n_pad), jnp.float32).at[:, :NUM_CLASSES].set(wfc)
    bfc_p = jnp.zeros((1, n_pad), jnp.float32).at[:, :NUM_CLASSES].set(bfc)

    kernel = functools.partial(
        effnet_head_kernel, hw_total=HW, hw_tile=hw_tile, inv_hw=1.0 / HW)

    out_padded = pl.pallas_call(
        kernel,
        out_shape=jax.ShapeDtypeStruct((B, n_pad), jnp.float32),
        grid_spec=pltpu.PrefetchScalarGridSpec(
            num_scalar_prefetch=0,
            grid=(n_b, n_hw),
            in_specs=[
                pl.BlockSpec((b_tile, hw_tile, C_IN), lambda b, t: (b, t, 0)),
                pl.BlockSpec((C_IN, C_FEAT), lambda b, t: (0, 0)),
                pl.BlockSpec((1, C_FEAT), lambda b, t: (0, 0)),
                pl.BlockSpec((C_FEAT, n_pad), lambda b, t: (0, 0)),
                pl.BlockSpec((1, n_pad), lambda b, t: (0, 0)),
            ],
            out_specs=pl.BlockSpec((b_tile, n_pad), lambda b, t: (b, 0)),
            scratch_shapes=[pltpu.VMEM((b_tile, C_FEAT), jnp.float32)],
        ),
        compiler_params=pltpu.CompilerParams(
            dimension_semantics=("parallel", "arbitrary"),
        ),
    )(x, w1.astype(jnp.bfloat16), b1, wfc_p, bfc_p)

    return out_padded[:, :NUM_CLASSES]


def reference_forward(x_nchw, params):
    """Pure-JAX reference with identical semantics (for verification)."""
    w1, b1, wfc, bfc = params
    B, C, H, W = x_nchw.shape
    x = jnp.transpose(x_nchw, (0, 2, 3, 1)).reshape(B, H * W, C).astype(jnp.bfloat16)
    feat = jnp.einsum("bpc,cf->bpf", x, w1.astype(jnp.bfloat16),
                      preferred_element_type=jnp.float32) + b1
    feat = feat * jax.nn.sigmoid(feat)
    pooled = jnp.mean(feat, axis=1)
    return pooled @ wfc + bfc


def init_params(key):
    k1, k2, k3, k4 = jax.random.split(key, 4)
    w1 = 0.1 * jax.random.normal(k1, (C_IN, C_FEAT), jnp.float32)
    b1 = 0.01 * jax.random.normal(k2, (1, C_FEAT), jnp.float32)
    # PyTorch nn.Linear stores weight as (out, in) = (4, 1536); we keep the
    # transposed (in, out) layout for the kernel matmul.
    wfc = (1.0 / C_FEAT ** 0.5) * jax.random.normal(
        k3, (C_FEAT, NUM_CLASSES), jnp.float32)
    bfc = 0.01 * jax.random.normal(k4, (1, NUM_CLASSES), jnp.float32)
    return (w1, b1, wfc, bfc)


if __name__ == "__main__":
    key = jax.random.PRNGKey(0)
    kp, kx = jax.random.split(key)
    params = init_params(kp)

    # small NCHW image batch, consistent with the PyTorch module's input
    x = jax.random.normal(kx, (2, C_IN, 16, 16), jnp.float32)

    logits = jax.block_until_ready(efficientnet_classifier(x, params))
    ref = jax.block_until_ready(reference_forward(x, params))

    assert logits.shape == (2, NUM_CLASSES)
    assert jnp.allclose(logits, ref, atol=5e-3, rtol=5e-3), (logits, ref)

    print("KERNEL_OK")
</pallas_src>

<mosaic_0001>
module attributes {stable_mosaic.version = 11 : i64} {
  func.func @effnet_head_kernel(%arg0: i32, %arg1: i32, %arg2: memref<2x128x3xbf16, #tpu.memory_space<vmem>>, %arg3: memref<3x1536xbf16, #tpu.memory_space<vmem>>, %arg4: memref<1x1536xf32, #tpu.memory_space<vmem>>, %arg5: memref<1536x128xf32, #tpu.memory_space<vmem>>, %arg6: memref<1x128xf32, #tpu.memory_space<vmem>>, %arg7: memref<2x128xf32, #tpu.memory_space<vmem>>, %arg8: memref<2x1536xf32, #tpu.memory_space<vmem>>) attributes {dimension_semantics = [#tpu.dimension_semantics<parallel>, #tpu.dimension_semantics<arbitrary>], iteration_bounds = array<i64: 1, 2>, scalar_prefetch = 0 : i64, scratch_operands = 1 : i64, tpu.core_type = #tpu.core_type<tc>, window_params = [{transform_indices = @transform_0, window_bounds = array<i64: 2, 128, 3>}, {pipeline_mode = #tpu.pipeline_mode<synchronous>, transform_indices = @transform_1, window_bounds = array<i64: 3, 1536>}, {pipeline_mode = #tpu.pipeline_mode<synchronous>, transform_indices = @transform_2, window_bounds = array<i64: 1, 1536>}, {pipeline_mode = #tpu.pipeline_mode<synchronous>, transform_indices = @transform_3, window_bounds = array<i64: 1536, 128>}, {pipeline_mode = #tpu.pipeline_mode<synchronous>, transform_indices = @transform_4, window_bounds = array<i64: 1, 128>}, {transform_indices = @transform_5, window_bounds = array<i64: 2, 128>}]} {
    %c0_i32 = arith.constant 0 : i32
    %0 = arith.cmpi eq, %arg1, %c0_i32 : i32
    %1 = arith.extui %0 : i1 to i32
    %c0_i32_0 = arith.constant 0 : i32
    %2 = arith.cmpi ne, %1, %c0_i32_0 : i32
    scf.if %2 {
      %cst_14 = arith.constant 0.000000e+00 : f32
      %24 = vector.broadcast %cst_14 : f32 to vector<2x1536xf32>
      %c0_15 = arith.constant 0 : index
      %c0_16 = arith.constant 0 : index
      %25 = vector.load %arg8[%c0_15, %c0_16] : memref<2x1536xf32, #tpu.memory_space<vmem>>, vector<2x1536xf32>
      tpu.vector_store %arg8[%c0_15, %c0_16], %24 {strides = array<i32>} : memref<2x1536xf32, #tpu.memory_space<vmem>>, vector<2x1536xf32>,
    } else {
    }
    %c0 = arith.constant 0 : index
    %c0_1 = arith.constant 0 : index
    %c0_2 = arith.constant 0 : index
    %3 = vector.load %arg2[%c0, %c0_1, %c0_2] : memref<2x128x3xbf16, #tpu.memory_space<vmem>>, vector<2x128x3xbf16>
    %4 = vector.shape_cast %3 : vector<2x128x3xbf16> to vector<256x3xbf16>
    %c0_3 = arith.constant 0 : index
    %c0_4 = arith.constant 0 : index
    %5 = vector.load %arg3[%c0_3, %c0_4] : memref<3x1536xbf16, #tpu.memory_space<vmem>>, vector<3x1536xbf16>
    %cst = arith.constant dense<0.000000e+00> : vector<256x1536xf32>
    %6 = tpu.matmul %4, %5, %cst {dimension_numbers = #tpu.dot_dimension_numbers<[1], [0], [0], [1], [0, 0, 1, 1], [], []>} : vector<256x3xbf16>, vector<3x1536xbf16>, vector<256x1536xf32> -> vector<256x1536xf32>
    %c0_5 = arith.constant 0 : index
    %c0_6 = arith.constant 0 : index
    %7 = vector.load %arg4[%c0_5, %c0_6] : memref<1x1536xf32, #tpu.memory_space<vmem>>, vector<1x1536xf32>
    %8 = vector.broadcast %7 : vector<1x1536xf32> to vector<256x1536xf32>
    %9 = arith.addf %6, %8 : vector<256x1536xf32>
    %10 = arith.negf %9 : vector<256x1536xf32>
    %11 = math.exp %10 : vector<256x1536xf32>
    %cst_7 = arith.constant 1.000000e+00 : f32
    %12 = vector.broadcast %cst_7 : f32 to vector<256x1536xf32>
    %13 = arith.addf %12, %11 : vector<256x1536xf32>
    %14 = arith.divf %12, %13 : vector<256x1536xf32>
    %15 = arith.mulf %9, %14 : vector<256x1536xf32>
    %16 = vector.shape_cast %15 : vector<256x1536xf32> to vector<2x128x1536xf32>
    %c0_8 = arith.constant 0 : index
    %c0_9 = arith.constant 0 : index
    %17 = vector.load %arg8[%c0_8, %c0_9] : memref<2x1536xf32, #tpu.memory_space<vmem>>, vector<2x1536xf32>
    %cst_10 = arith.constant dense<0.000000e+00> : vector<2x1536xf32>
    %18 = vector.multi_reduction <add>, %16, %cst_10 [1] : vector<2x128x1536xf32> to vector<2x1536xf32>
    %19 = arith.addf %17, %18 : vector<2x1536xf32>
    %c0_11 = arith.constant 0 : index
    %c0_12 = arith.constant 0 : index
    %20 = vector.load %arg8[%c0_11, %c0_12] : memref<2x1536xf32, #tpu.memory_space<vmem>>, vector<2x1536xf32>
    tpu.vector_store %arg8[%c0_11, %c0_12], %19 {strides = array<i32>} : memref<2x1536xf32, #tpu.memory_space<vmem>>, vector<2x1536xf32>,
    %c1_i32 = arith.constant 1 : i32
    %21 = arith.cmpi eq, %arg1, %c1_i32 : i32
    %22 = arith.extui %21 : i1 to i32
    %c0_i32_13 = arith.constant 0 : i32
    %23 = arith.cmpi ne, %22, %c0_i32_13 : i32
    scf.if %23 {
      %c0_14 = arith.constant 0 : index
      %c0_15 = arith.constant 0 : index
      %24 = vector.load %arg8[%c0_14, %c0_15] : memref<2x1536xf32, #tpu.memory_space<vmem>>, vector<2x1536xf32>
      %cst_16 = arith.constant 3.906250e-03 : f32
      %25 = vector.broadcast %cst_16 : f32 to vector<2x1536xf32>
      %26 = arith.mulf %24, %25 : vector<2x1536xf32>
      %c0_17 = arith.constant 0 : index
      %c0_18 = arith.constant 0 : index
      %27 = vector.load %arg5[%c0_17, %c0_18] : memref<1536x128xf32, #tpu.memory_space<vmem>>, vector<1536x128xf32>
      %cst_19 = arith.constant dense<0.000000e+00> : vector<2x128xf32>
      %28 = tpu.matmul %26, %27, %cst_19 {dimension_numbers = #tpu.dot_dimension_numbers<[1], [0], [0], [1], [0, 0, 1, 1], [], []>} : vector<2x1536xf32>, vector<1536x128xf32>, vector<2x128xf32> -> vector<2x128xf32>
      %c0_20 = arith.constant 0 : index
      %c0_21 = arith.constant 0 : index
      %29 = vector.load %arg6[%c0_20, %c0_21] : memref<1x128xf32, #tpu.memory_space<vmem>>, vector<1x128xf32>
      %30 = vector.broadcast %29 : vector<1x128xf32> to vector<2x128xf32>
      %31 = arith.addf %28, %30 : vector<2x128xf32>
      %c0_22 = arith.constant 0 : index
      %c0_23 = arith.constant 0 : index
      %32 = vector.load %arg7[%c0_22, %c0_23] : memref<2x128xf32, #tpu.memory_space<vmem>>, vector<2x128xf32>
      tpu.vector_store %arg7[%c0_22, %c0_23], %31 {strides = array<i32>} : memref<2x128xf32, #tpu.memory_space<vmem>>, vector<2x128xf32>,
    } else {
    }
    return
  }
  func.func @transform_0(%arg0: i32, %arg1: i32) -> (i32, i32, i32) {
    %c0_i32 = arith.constant 0 : i32
    %c0_i32_0 = arith.constant 0 : i32
    return %arg0, %arg1, %c0_i32 : i32, i32, i32
  }
  func.func @transform_1(%arg0: i32, %arg1: i32) -> (i32, i32) {
    %c0_i32 = arith.constant 0 : i32
    %c0_i32_0 = arith.constant 0 : i32
    %c0_i32_1 = arith.constant 0 : i32
    return %c0_i32, %c0_i32_0 : i32, i32
  }
  func.func @transform_2(%arg0: i32, %arg1: i32) -> (i32, i32) {
    %c0_i32 = arith.constant 0 : i32
    %c0_i32_0 = arith.constant 0 : i32
    %c0_i32_1 = arith.constant 0 : i32
    return %c0_i32, %c0_i32_0 : i32, i32
  }
  func.func @transform_3(%arg0: i32, %arg1: i32) -> (i32, i32) {
    %c0_i32 = arith.constant 0 : i32
    %c0_i32_0 = arith.constant 0 : i32
    %c0_i32_1 = arith.constant 0 : i32
    return %c0_i32, %c0_i32_0 : i32, i32
  }
  func.func @transform_4(%arg0: i32, %arg1: i32) -> (i32, i32) {
    %c0_i32 = arith.constant 0 : i32
    %c0_i32_0 = arith.constant 0 : i32
    %c0_i32_1 = arith.constant 0 : i32
    return %c0_i32, %c0_i32_0 : i32, i32
  }
  func.func @transform_5(%arg0: i32, %arg1: i32) -> (i32, i32) {
    %c0_i32 = arith.constant 0 : i32
    %c0_i32_0 = arith.constant 0 : i32
    return %arg0, %c0_i32 : i32, i32
  }
}

</mosaic_0001>

<llo_original>
// kernel: tpu_custom_call.1
$region0: #{tpu_custom_call.1}
  #allocation0 [shape = 'u32[]', space=smem, size = 0x4, offset = 0x4, fixed_abs, tag = 'smem constant byte address 0x4 - core index']
  #allocation1 [shape = 'u32[144,128]{1,0:T(1,128)}', space=vmem, size = 0x12000, scoped, tag = 'internal scratch']
  #allocation2 [shape = 'f32[2,1536]{1,0:T(2,128)}', space=vmem, size = 0x3000, scoped, tag = 'scratch operand']
  %s0 = inlined_call_operand.vmem [shape: bf16[2,256,3], index: 0, kind: input, shape index: {}]
  %s1 = inlined_call_operand.vmem [shape: bf16[3,1536], index: 1, kind: input, shape index: {}]
  %s2 = inlined_call_operand.vmem [shape: f32[1,1536], index: 2, kind: input, shape index: {}]
  %s3 = inlined_call_operand.hbm [shape: f32[1536,128], index: 3, kind: input, shape index: {}]
  %s4 = inlined_call_operand.vmem [shape: f32[1,128], index: 4, kind: input, shape index: {}]
  %s5 = inlined_call_operand.hbm [shape: f32[2,128], index: 5, kind: output, shape index: {}]
  %s6 = sld [smem:[#allocation0]]
  $region106: #{tpu_custom_call.1} parent=0
    _
  %s8 = ssub.s32 1, %s6
  %s9 = scalar_select 0, %s8, %s6
  $region1: #{tpu_custom_call.1} parent=0
    #allocation3 [shape = 'u8[131072]{0}', space=vmem, size = 0x20000, scoped, tag = 'input window, operand 0']
    #allocation4 [shape = 'u8[786432]{0}', space=vmem, size = 0xc0000, scoped, tag = 'input window, operand 3, single buffered']
    #allocation5 [shape = 's32[2]{0}', space=sflag, size = 0x8, scoped, tag = 'scoped memory for tpu_custom_call.1']
    #allocation6 [shape = 's32[2]{0}', space=sflag, size = 0x8, scoped, tag = 'scoped memory for tpu_custom_call.1']
    #allocation7 [shape = 'u8[1024]{0}', space=vmem, size = 0x400, scoped, tag = 'output window, operand 0, single buffered']
    %10 = vsyncpa [#allocation5], 0
    %11 = vsyncpa [#allocation6], 0
    loop: start=0, step=1, limit=4
    $region2: #{tpu_custom_call.1} parent=1 // loop_pre_header
      _
    $region3: #{tpu_custom_call.1} parent=1 // loop_header
      %s13 = sphi 0, %s17
      %p14 = scmp.ge.s32.totalorder %s13, 4
      %s20 = sphi 0, %s32
      %s21 = sphi 0, %s28
      %s22 = sphi 0, %s20
      %s23 = sphi 0, %s21
      %s24 = sphi 0, %s22
      %s25 = sphi 0, %s23
      %s37 = sphi 0, %s39
      %s40 = sphi 0, %s37
      %s41 = sphi 0, %s40
      %s57 = sphi 0, %s41
      %s61 = sphi 0, %s61
      %s63 = sphi 0, %s61
      %s64 = sphi 0, %s63
      %s78 = sphi 0, %s64
      %s82 = sphi 0, %s82
      %s84 = sphi 0, %s82
      %s85 = sphi 0, %s84
      %s99 = sphi 0, %s85
      %s103 = sphi 0, %s103
      %s105 = sphi 0, %s103
      %s106 = sphi 0, %s105
      %s120 = sphi 0, %s106
      %s124 = sphi 0, %s124
      %s126 = sphi 0, %s124
      %s127 = sphi 0, %s126
      %s141 = sphi 0, %s127
      %s147 = sphi 0, %s149
      %s150 = sphi 0, %s147
      %s151 = sphi 0, %s150
      %s167 = sphi 0, %s151
    $region4: #{tpu_custom_call.1} parent=1 // loop_header_branch
      %16 = sbr.rel (%p14) target = $region8
    $region5: #{tpu_custom_call.1} parent=1 // loop_body
      %s18 = ssub.s32 %s13, 1
      %s19 = ssub.s32 %s13, 2
      %s26 = sadd.s32 1, %s21
      %p27 = scmp.ge.s32.totalorder %s26, 2
      %s28 = scalar_select %p27, 0, %s26
      %s29 = sadd.s32 1, %s20
      %s30 = scalar_select %p27, %s29, %s20
      %p31 = scmp.ge.s32.totalorder %s30, 1
      %s32 = scalar_select %p31, 0, %s30
      %s33 = ssub.s32 %s20, %s32
      %s34 = ssub.s32 %s21, %s28
      %s35 = sor.u32 %s33, %s34
      %p36 = scmp.eq.s32.totalorder %s35, 0
      %s38 = sadd.s32 %s37, 1
      %s39 = scalar_select %p36, %s37, %s38
      %p42 = pneg %p36
      %p43 = scmp.eq.s32.totalorder %s13, 1
      %p44 = por %p42, %p43
      %p45 = scmp.ne.s32.totalorder %s37, %s40
      %p46 = scmp.eq.s32.totalorder %s13, 0
      %p47 = por %p45, %p46
      %p48 = scmp.ne.s32.totalorder %s37, %s40
      %p49 = scmp.eq.s32.totalorder %s18, 1
      %p50 = por %p48, %p49
      %p51 = scmp.ne.s32.totalorder %s40, %s41
      %p52 = scmp.eq.s32.totalorder %s18, 0
      %p53 = por %p51, %p52
      %p54 = scmp.ne.s32.totalorder %s40, %s41
      %p55 = scmp.eq.s32.totalorder %s19, 1
      %p56 = por %p54, %p55
      %p58 = scmp.ne.s32.totalorder %s41, %s57
      %p59 = scmp.eq.s32.totalorder %s19, 0
      %p60 = por %p58, %p59
      %s62 = sadd.s32 %s61, 1
      %p65 = scmp.eq.s32.totalorder %s13, 1
      %p66 = scmp.ne.s32.totalorder %s61, %s63
      %p67 = scmp.eq.s32.totalorder %s13, 0
      %p68 = por %p66, %p67
      %p69 = scmp.ne.s32.totalorder %s61, %s63
      %p70 = scmp.eq.s32.totalorder %s18, 1
      %p71 = por %p69, %p70
      %p72 = scmp.ne.s32.totalorder %s63, %s64
      %p73 = scmp.eq.s32.totalorder %s18, 0
      %p74 = por %p72, %p73
      %p75 = scmp.ne.s32.totalorder %s63, %s64
      %p76 = scmp.eq.s32.totalorder %s19, 1
      %p77 = por %p75, %p76
      %p79 = scmp.ne.s32.totalorder %s64, %s78
      %p80 = scmp.eq.s32.totalorder %s19, 0
      %p81 = por %p79, %p80
      %s83 = sadd.s32 %s82, 1
      %p86 = scmp.eq.s32.totalorder %s13, 1
      %p87 = scmp.ne.s32.totalorder %s82, %s84
      %p88 = scmp.eq.s32.totalorder %s13, 0
      %p89 = por %p87, %p88
      %p90 = scmp.ne.s32.totalorder %s82, %s84
      %p91 = scmp.eq.s32.totalorder %s18, 1
      %p92 = por %p90, %p91
      %p93 = scmp.ne.s32.totalorder %s84, %s85
      %p94 = scmp.eq.s32.totalorder %s18, 0
      %p95 = por %p93, %p94
      %p96 = scmp.ne.s32.totalorder %s84, %s85
      %p97 = scmp.eq.s32.totalorder %s19, 1
      %p98 = por %p96, %p97
      %p100 = scmp.ne.s32.totalorder %s85, %s99
      %p101 = scmp.eq.s32.totalorder %s19, 0
      %p102 = por %p100, %p101
      %s104 = sadd.s32 %s103, 1
      %p107 = scmp.eq.s32.totalorder %s13, 1
      %p108 = scmp.ne.s32.totalorder %s103, %s105
      %p109 = scmp.eq.s32.totalorder %s13, 0
      %p110 = por %p108, %p109
      %p111 = scmp.ne.s32.totalorder %s103, %s105
      %p112 = scmp.eq.s32.totalorder %s18, 1
      %p113 = por %p111, %p112
      %p114 = scmp.ne.s32.totalorder %s105, %s106
      %p115 = scmp.eq.s32.totalorder %s18, 0
      %p116 = por %p114, %p115
      %p117 = scmp.ne.s32.totalorder %s105, %s106
      %p118 = scmp.eq.s32.totalorder %s19, 1
      %p119 = por %p117, %p118
      %p121 = scmp.ne.s32.totalorder %s106, %s120
      %p122 = scmp.eq.s32.totalorder %s19, 0
      %p123 = por %p121, %p122
      %s125 = sadd.s32 %s124, 1
      %p128 = scmp.eq.s32.totalorder %s13, 1
      %p129 = scmp.ne.s32.totalorder %s124, %s126
      %p130 = scmp.eq.s32.totalorder %s13, 0
      %p131 = por %p129, %p130
      %p132 = scmp.ne.s32.totalorder %s124, %s126
      %p133 = scmp.eq.s32.totalorder %s18, 1
      %p134 = por %p132, %p133
      %p135 = scmp.ne.s32.totalorder %s126, %s127
      %p136 = scmp.eq.s32.totalorder %s18, 0
      %p137 = por %p135, %p136
      %p138 = scmp.ne.s32.totalorder %s126, %s127
      %p139 = scmp.eq.s32.totalorder %s19, 1
      %p140 = por %p138, %p139
      %p142 = scmp.ne.s32.totalorder %s127, %s141
      %p143 = scmp.eq.s32.totalorder %s19, 0
      %p144 = por %p142, %p143
      %s145 = ssub.s32 %s20, %s32
      %p146 = scmp.eq.s32.totalorder %s145, 0
      %s148 = sadd.s32 %s147, 1
      %s149 = scalar_select %p146, %s147, %s148
      %p152 = pneg %p146
      %p153 = scmp.eq.s32.totalorder %s13, 1
      %p154 = por %p152, %p153
      %p155 = scmp.ne.s32.totalorder %s147, %s150
      %p156 = scmp.eq.s32.totalorder %s13, 0
      %p157 = por %p155, %p156
      %p158 = scmp.ne.s32.totalorder %s147, %s150
      %p159 = scmp.eq.s32.totalorder %s18, 1
      %p160 = por %p158, %p159
      %p161 = scmp.ne.s32.totalorder %s150, %s151
      %p162 = scmp.eq.s32.totalorder %s18, 0
      %p163 = por %p161, %p162
      %p164 = scmp.ne.s32.totalorder %s150, %s151
      %p165 = scmp.eq.s32.totalorder %s19, 1
      %p166 = por %p164, %p165
      %p168 = scmp.ne.s32.totalorder %s151, %s167
      %p169 = scmp.eq.s32.totalorder %s19, 0
      %p170 = por %p168, %p169
      %p171 = scmp.le.s32.totalorder 1, %s13
      %p172 = scmp.lt.s32.totalorder %s13, 3
      %p173 = pnand %p171, %p172
      %p174 = pneg %p173
      // Predicated region
      $region9: #{tpu_custom_call.1} parent=5 // pred_check
        _
      $region10: #{tpu_custom_call.1} parent=5 // pred_check_branch
        %176 = sbr.rel (%p173) target = $region12
      $region11: #{tpu_custom_call.1} parent=5 // pred_region
        %s177 = ssub.s32 %s13, 1
        // Predicated region
        $region13: #{tpu_custom_call.1} parent=11 // pred_check
          %p178 = pneg %p74
        $region14: #{tpu_custom_call.1} parent=11 // pred_check_branch
          %180 = sbr.rel (%p178) target = $region16
        $region15: #{tpu_custom_call.1} parent=11 // pred_region
          _
        $region16: #{tpu_custom_call.1} parent=11 // pred_fallthru
          _
        // Predicated region
        $region17: #{tpu_custom_call.1} parent=11 // pred_check
          %p181 = pneg %p95
        $region18: #{tpu_custom_call.1} parent=11 // pred_check_branch
          %183 = sbr.rel (%p181) target = $region20
        $region19: #{tpu_custom_call.1} parent=11 // pred_region
          _
        $region20: #{tpu_custom_call.1} parent=11 // pred_fallthru
          _
        // Predicated region
        $region21: #{tpu_custom_call.1} parent=11 // pred_check
          %p184 = pneg %p116
        $region22: #{tpu_custom_call.1} parent=11 // pred_check_branch
          %186 = sbr.rel (%p184) target = $region24
        $region23: #{tpu_custom_call.1} parent=11 // pred_region
          %s188 = ssub.s32 24576, 24576
          %189 = vsyncadd [#allocation5], %s188
          %s190 = sshll.u32 [#allocation4], 4
          %s191 = int_to_ptr.vmem [resolvable:$true] %s190
          %196 = dma.hbm_to_vmem [thread:$0]  %s3, 24576, %s191, [#allocation5], 128, 128, 8
        $region24: #{tpu_custom_call.1} parent=11 // pred_fallthru
          _
        // Predicated region
        $region25: #{tpu_custom_call.1} parent=11 // pred_check
          %p197 = pneg %p137
        $region26: #{tpu_custom_call.1} parent=11 // pred_check_branch
          %199 = sbr.rel (%p197) target = $region28
        $region27: #{tpu_custom_call.1} parent=11 // pred_region
          _
        $region28: #{tpu_custom_call.1} parent=11 // pred_fallthru
          _
      $region12: #{tpu_custom_call.1} parent=5 // pred_fallthru
        _
      %p200 = scmp.lt.s32.totalorder %s13, 2
      // Predicated region
      $region29: #{tpu_custom_call.1} parent=5 // pred_check
        %p201 = pneg %p200
      $region30: #{tpu_custom_call.1} parent=5 // pred_check_branch
        %203 = sbr.rel (%p201) target = $region32
      $region31: #{tpu_custom_call.1} parent=5 // pred_region
        // Predicated region
        $region33: #{tpu_custom_call.1} parent=31 // pred_check
          %p204 = pneg %p47
        $region34: #{tpu_custom_call.1} parent=31 // pred_check_branch
          %206 = sbr.rel (%p204) target = $region36
        $region35: #{tpu_custom_call.1} parent=31 // pred_region
          %s207 = sand.u32 %s37, 1
          %s208 = sand.u32 %s37, 1
          %s209 = smul.addr %s208, 128
          %s210 = scalar_lea.vmem [#allocation3], %s209
          %s211 = smul.u32 2, %s20
          %s212 = smul.u32 16, %s21
          %s213 = smul.addr %s211, 32
          %s214 = sadd.s32 %s212, %s213
          %s215 = smul.addr %s214, 4
          %s216 = scalar_lea.vmem %s0, %s215
          // Predicated region
          $region37: #{tpu_custom_call.1} parent=35 // pred_check
            _
          $region38: #{tpu_custom_call.1} parent=35 // pred_check_branch
            %218 = sbr.rel (0) target = $region40
          $region39: #{tpu_custom_call.1} parent=35 // pred_region
            // Predicated region
            $region41: #{tpu_custom_call.1} parent=39 // pred_check
              _
            $region42: #{tpu_custom_call.1} parent=39 // pred_check_branch
              %220 = sbr.rel target = $region44
            $region43: #{tpu_custom_call.1} parent=39 // pred_region
              // Predicated region
              $region56: #{tpu_custom_call.1} parent=43 // pred_check
                _
              $region57: #{tpu_custom_call.1} parent=43 // pred_check_branch
                %297 = sbr.rel (0) target = $region59
              $region58: #{tpu_custom_call.1} parent=43 // pred_region
                loop: start=0, step=1, limit=1
                $region60: #{tpu_custom_call.1} parent=58 // loop_pre_header
                  _
                $region61: #{tpu_custom_call.1} parent=58 // loop_header
                  %s299 = sphi 0, %s303
                  %p300 = scmp.ge.s32.totalorder %s299, 1
                  %s304 = sphi %s216, %s216
                  %s305 = sphi %s210, %s210
                $region62: #{tpu_custom_call.1} parent=58 // loop_header_branch
                  %302 = sbr.rel (%p300) target = $region66
                $region63: #{tpu_custom_call.1} parent=58 // loop_body
                  _
                $region64: #{tpu_custom_call.1} parent=58 // loop_footer
                  %s303 = sadd.s32 1, %s299
                $region65: #{tpu_custom_call.1} parent=58 // loop_footer_branch
                  %298 = sbr.rel target = $region61
                $region66: #{tpu_custom_call.1} parent=58 // loop_exit
                  _
                loop: start=0, step=1, limit=1
                $region67: #{tpu_custom_call.1} parent=58 // loop_pre_header
                  _
                $region68: #{tpu_custom_call.1} parent=58 // loop_header
                  %s308 = sphi 0, %s312
                  %p309 = scmp.ge.s32.totalorder %s308, 1
                  %s313 = sphi %s216, %s216
                  %s314 = sphi %s210, %s210
                $region69: #{tpu_custom_call.1} parent=58 // loop_header_branch
                  %311 = sbr.rel (%p309) target = $region73
                $region70: #{tpu_custom_call.1} parent=58 // loop_body
                  %v315 = vld [vmem:[%s313] sm:$0xf]
                  %316 = vst [vmem:[%s314] sm:$0xf] %v315
                  %v317 = vld [vmem:[%s313 + $0x4] sm:$0xf]
                  %318 = vst [vmem:[%s314 + $0x4] sm:$0xf] %v317
                  %v319 = vld [vmem:[%s313 + $0x8] sm:$0xf]
                  %320 = vst [vmem:[%s314 + $0x8] sm:$0xf] %v319
                  %v321 = vld [vmem:[%s313 + $0xc] sm:$0xf]
                  %322 = vst [vmem:[%s314 + $0xc] sm:$0xf] %v321
                  %v323 = vld [vmem:[%s313 + $0x10] sm:$0xf]
                  %324 = vst [vmem:[%s314 + $0x10] sm:$0xf] %v323
                  %v325 = vld [vmem:[%s313 + $0x14] sm:$0xf]
                  %326 = vst [vmem:[%s314 + $0x14] sm:$0xf] %v325
                  %v327 = vld [vmem:[%s313 + $0x18] sm:$0xf]
                  %328 = vst [vmem:[%s314 + $0x18] sm:$0xf] %v327
                  %v329 = vld [vmem:[%s313 + $0x1c] sm:$0xf]
                  %330 = vst [vmem:[%s314 + $0x1c] sm:$0xf] %v329
                  %v331 = vld [vmem:[%s313 + $0x20] sm:$0xf]
                  %332 = vst [vmem:[%s314 + $0x20] sm:$0xf] %v331
                  %v333 = vld [vmem:[%s313 + $0x24] sm:$0xf]
                  %334 = vst [vmem:[%s314 + $0x24] sm:$0xf] %v333
                  %v335 = vld [vmem:[%s313 + $0x28] sm:$0xf]
                  %336 = vst [vmem:[%s314 + $0x28] sm:$0xf] %v335
                  %v337 = vld [vmem:[%s313 + $0x2c] sm:$0xf]
                  %338 = vst [vmem:[%s314 + $0x2c] sm:$0xf] %v337
                  %v339 = vld [vmem:[%s313 + $0x30] sm:$0xf]
                  %340 = vst [vmem:[%s314 + $0x30] sm:$0xf] %v339
                  %v341 = vld [vmem:[%s313 + $0x34] sm:$0xf]
                  %342 = vst [vmem:[%s314 + $0x34] sm:$0xf] %v341
                  %v343 = vld [vmem:[%s313 + $0x38] sm:$0xf]
                  %344 = vst [vmem:[%s314 + $0x38] sm:$0xf] %v343
                  %v345 = vld [vmem:[%s313 + $0x3c] sm:$0xf]
                  %346 = vst [vmem:[%s314 + $0x3c] sm:$0xf] %v345
                  %v347 = vld [vmem:[%s313 + $0x80] sm:$0xf]
                  %348 = vst [vmem:[%s314 + $0x40] sm:$0xf] %v347
                  %v349 = vld [vmem:[%s313 + $0x84] sm:$0xf]
                  %350 = vst [vmem:[%s314 + $0x44] sm:$0xf] %v349
                  %v351 = vld [vmem:[%s313 + $0x88] sm:$0xf]
                  %352 = vst [vmem:[%s314 + $0x48] sm:$0xf] %v351
                  %v353 = vld [vmem:[%s313 + $0x8c] sm:$0xf]
                  %354 = vst [vmem:[%s314 + $0x4c] sm:$0xf] %v353
                  %v355 = vld [vmem:[%s313 + $0x90] sm:$0xf]
                  %356 = vst [vmem:[%s314 + $0x50] sm:$0xf] %v355
                  %v357 = vld [vmem:[%s313 + $0x94] sm:$0xf]
                  %358 = vst [vmem:[%s314 + $0x54] sm:$0xf] %v357
                  %v359 = vld [vmem:[%s313 + $0x98] sm:$0xf]
                  %360 = vst [vmem:[%s314 + $0x58] sm:$0xf] %v359
                  %v361 = vld [vmem:[%s313 + $0x9c] sm:$0xf]
                  %362 = vst [vmem:[%s314 + $0x5c] sm:$0xf] %v361
                  %v363 = vld [vmem:[%s313 + $0xa0] sm:$0xf]
                  %364 = vst [vmem:[%s314 + $0x60] sm:$0xf] %v363
                  %v365 = vld [vmem:[%s313 + $0xa4] sm:$0xf]
                  %366 = vst [vmem:[%s314 + $0x64] sm:$0xf] %v365
                  %v367 = vld [vmem:[%s313 + $0xa8] sm:$0xf]
                  %368 = vst [vmem:[%s314 + $0x68] sm:$0xf] %v367
                  %v369 = vld [vmem:[%s313 + $0xac] sm:$0xf]
                  %370 = vst [vmem:[%s314 + $0x6c] sm:$0xf] %v369
                  %v371 = vld [vmem:[%s313 + $0xb0] sm:$0xf]
                  %372 = vst [vmem:[%s314 + $0x70] sm:$0xf] %v371
                  %v373 = vld [vmem:[%s313 + $0xb4] sm:$0xf]
                  %374 = vst [vmem:[%s314 + $0x74] sm:$0xf] %v373
                  %v375 = vld [vmem:[%s313 + $0xb8] sm:$0xf]
                  %376 = vst [vmem:[%s314 + $0x78] sm:$0xf] %v375
                  %v377 = vld [vmem:[%s313 + $0xbc] sm:$0xf]
                  %378 = vst [vmem:[%s314 + $0x7c] sm:$0xf] %v377
                $region71: #{tpu_custom_call.1} parent=58 // loop_footer
                  %s312 = sadd.s32 1, %s308
                $region72: #{tpu_custom_call.1} parent=58 // loop_footer_branch
                  %307 = sbr.rel target = $region68
                $region73: #{tpu_custom_call.1} parent=58 // loop_exit
                  _
              $region59: #{tpu_custom_call.1} parent=43 // pred_fallthru
                _
            $region44: #{tpu_custom_call.1} parent=39 // pred_fallthru
              _
            // Predicated region
            $region45: #{tpu_custom_call.1} parent=39 // pred_check
              _
            $region46: #{tpu_custom_call.1} parent=39 // pred_check_branch
              %222 = sbr.rel (0) target = $region48
            $region47: #{tpu_custom_call.1} parent=39 // pred_region
              loop: start=0, step=1, limit=1
              $region49: #{tpu_custom_call.1} parent=47 // loop_pre_header
                _
              $region50: #{tpu_custom_call.1} parent=47 // loop_header
                %s225 = sphi 0, %s229
                %p226 = scmp.ge.s32.totalorder %s225, 1
                %s230 = sphi %s216, %s216
                %s231 = sphi %s210, %s210
              $region51: #{tpu_custom_call.1} parent=47 // loop_header_branch
                %228 = sbr.rel (%p226) target = $region55
              $region52: #{tpu_custom_call.1} parent=47 // loop_body
                %v232 = vld [vmem:[%s230] sm:$0xf]
                %233 = vst [vmem:[%s231] sm:$0xf] %v232
                %v234 = vld [vmem:[%s230 + $0x4] sm:$0xf]
                %235 = vst [vmem:[%s231 + $0x4] sm:$0xf] %v234
                %v236 = vld [vmem:[%s230 + $0x8] sm:$0xf]
                %237 = vst [vmem:[%s231 + $0x8] sm:$0xf] %v236
                %v238 = vld [vmem:[%s230 + $0xc] sm:$0xf]
                %239 = vst [vmem:[%s231 + $0xc] sm:$0xf] %v238
                %v240 = vld [vmem:[%s230 + $0x10] sm:$0xf]
                %241 = vst [vmem:[%s231 + $0x10] sm:$0xf] %v240
                %v242 = vld [vmem:[%s230 + $0x14] sm:$0xf]
                %243 = vst [vmem:[%s231 + $0x14] sm:$0xf] %v242
                %v244 = vld [vmem:[%s230 + $0x18] sm:$0xf]
                %245 = vst [vmem:[%s231 + $0x18] sm:$0xf] %v244
                %v246 = vld [vmem:[%s230 + $0x1c] sm:$0xf]
                %247 = vst [vmem:[%s231 + $0x1c] sm:$0xf] %v246
                %v248 = vld [vmem:[%s230 + $0x20] sm:$0xf]
                %249 = vst [vmem:[%s231 + $0x20] sm:$0xf] %v248
                %v250 = vld [vmem:[%s230 + $0x24] sm:$0xf]
                %251 = vst [vmem:[%s231 + $0x24] sm:$0xf] %v250
                %v252 = vld [vmem:[%s230 + $0x28] sm:$0xf]
                %253 = vst [vmem:[%s231 + $0x28] sm:$0xf] %v252
                %v254 = vld [vmem:[%s230 + $0x2c] sm:$0xf]
                %255 = vst [vmem:[%s231 + $0x2c] sm:$0xf] %v254
                %v256 = vld [vmem:[%s230 + $0x30] sm:$0xf]
                %257 = vst [vmem:[%s231 + $0x30] sm:$0xf] %v256
                %v258 = vld [vmem:[%s230 + $0x34] sm:$0xf]
                %259 = vst [vmem:[%s231 + $0x34] sm:$0xf] %v258
                %v260 = vld [vmem:[%s230 + $0x38] sm:$0xf]
                %261 = vst [vmem:[%s231 + $0x38] sm:$0xf] %v260
                %v262 = vld [vmem:[%s230 + $0x3c] sm:$0xf]
                %263 = vst [vmem:[%s231 + $0x3c] sm:$0xf] %v262
                %v264 = vld [vmem:[%s230 + $0x80] sm:$0xf]
                %265 = vst [vmem:[%s231 + $0x40] sm:$0xf] %v264
                %v266 = vld [vmem:[%s230 + $0x84] sm:$0xf]
                %267 = vst [vmem:[%s231 + $0x44] sm:$0xf] %v266
                %v268 = vld [vmem:[%s230 + $0x88] sm:$0xf]
                %269 = vst [vmem:[%s231 + $0x48] sm:$0xf] %v268
                %v270 = vld [vmem:[%s230 + $0x8c] sm:$0xf]
                %271 = vst [vmem:[%s231 + $0x4c] sm:$0xf] %v270
                %v272 = vld [vmem:[%s230 + $0x90] sm:$0xf]
                %273 = vst [vmem:[%s231 + $0x50] sm:$0xf] %v272
                %v274 = vld [vmem:[%s230 + $0x94] sm:$0xf]
                %275 = vst [vmem:[%s231 + $0x54] sm:$0xf] %v274
                %v276 = vld [vmem:[%s230 + $0x98] sm:$0xf]
                %277 = vst [vmem:[%s231 + $0x58] sm:$0xf] %v276
                %v278 = vld [vmem:[%s230 + $0x9c] sm:$0xf]
                %279 = vst [vmem:[%s231 + $0x5c] sm:$0xf] %v278
                %v280 = vld [vmem:[%s230 + $0xa0] sm:$0xf]
                %281 = vst [vmem:[%s231 + $0x60] sm:$0xf] %v280
                %v282 = vld [vmem:[%s230 + $0xa4] sm:$0xf]
                %283 = vst [vmem:[%s231 + $0x64] sm:$0xf] %v282
                %v284 = vld [vmem:[%s230 + $0xa8] sm:$0xf]
                %285 = vst [vmem:[%s231 + $0x68] sm:$0xf] %v284
                %v286 = vld [vmem:[%s230 + $0xac] sm:$0xf]
                %287 = vst [vmem:[%s231 + $0x6c] sm:$0xf] %v286
                %v288 = vld [vmem:[%s230 + $0xb0] sm:$0xf]
                %289 = vst [vmem:[%s231 + $0x70] sm:$0xf] %v288
                %v290 = vld [vmem:[%s230 + $0xb4] sm:$0xf]
                %291 = vst [vmem:[%s231 + $0x74] sm:$0xf] %v290
                %v292 = vld [vmem:[%s230 + $0xb8] sm:$0xf]
                %293 = vst [vmem:[%s231 + $0x78] sm:$0xf] %v292
                %v294 = vld [vmem:[%s230 + $0xbc] sm:$0xf]
                %295 = vst [vmem:[%s231 + $0x7c] sm:$0xf] %v294
              $region53: #{tpu_custom_call.1} parent=47 // loop_footer
                %s229 = sadd.s32 1, %s225
              $region54: #{tpu_custom_call.1} parent=47 // loop_footer_branch
                %224 = sbr.rel target = $region50
              $region55: #{tpu_custom_call.1} parent=47 // loop_exit
                _
            $region48: #{tpu_custom_call.1} parent=39 // pred_fallthru
              _
          $region40: #{tpu_custom_call.1} parent=35 // pred_fallthru
            _
          %379 = vnop
        $region36: #{tpu_custom_call.1} parent=31 // pred_fallthru
          _
      $region32: #{tpu_custom_call.1} parent=5 // pred_fallthru
        _
      %p380 = scmp.le.s32.totalorder 1, %s13
      %p381 = scmp.lt.s32.totalorder %s13, 3
      %p382 = pnand %p380, %p381
      %p383 = pneg %p382
      // Predicated region
      $region74: #{tpu_custom_call.1} parent=5 // pred_check
        _
      $region75: #{tpu_custom_call.1} parent=5 // pred_check_branch
        %385 = sbr.rel (%p382) target = $region77
      $region76: #{tpu_custom_call.1} parent=5 // pred_region
        %s386 = ssub.s32 %s13, 1
        %s387 = sand.u32 %s40, 1
        %s388 = sand.u32 %s40, 1
        %s389 = smul.addr %s388, 128
        %s390 = scalar_lea.vmem [#allocation3], %s389
        // Predicated region
        $region78: #{tpu_custom_call.1} parent=76 // pred_check
          %p391 = pneg %p53
        $region79: #{tpu_custom_call.1} parent=76 // pred_check_branch
          %393 = sbr.rel (%p391) target = $region81
        $region80: #{tpu_custom_call.1} parent=76 // pred_region
          _
        $region81: #{tpu_custom_call.1} parent=76 // pred_fallthru
          _
        // Predicated region
        $region82: #{tpu_custom_call.1} parent=76 // pred_check
          %p394 = pneg %p116
        $region83: #{tpu_custom_call.1} parent=76 // pred_check_branch
          %396 = sbr.rel (%p394) target = $region85
        $region84: #{tpu_custom_call.1} parent=76 // pred_region
          %397 = dma.done [#allocation5], 24576
        $region85: #{tpu_custom_call.1} parent=76 // pred_fallthru
          _
        %s398 = sand.u32 %s40, 1
        %s399 = sand.u32 %s40, 1
        %s400 = smul.addr %s399, 128
        %s401 = scalar_lea.vmem [#allocation3], %s400
        %p402 = pneg %p53
        %p403 = pneg %p50
        %p404 = pneg %p74
        %p405 = pneg %p71
        %p406 = pneg %p95
        %p407 = pneg %p92
        %p408 = pneg %p116
        %p409 = pneg %p113
        %p410 = pneg %p137
        %p411 = pneg %p134
        %p412 = pneg %p163
        %p413 = pneg %p160
        %s414 = smul.u32 2, %s22
        %s415 = smul.u32 16, %s23
        %p417 = scmp.eq.s32.totalorder %s23, 0
        // Predicated region
        $region86: #{tpu_custom_call.1} parent=76 // pred_check
          %p418 = pneg %p417
        $region87: #{tpu_custom_call.1} parent=76 // pred_check_branch
          %420 = sbr.rel (%p418) target = $region89
        $region88: #{tpu_custom_call.1} parent=76 // pred_region
          %421 = vst [vmem:[#allocation2] sm:$0xff] 0.0
          %422 = vst [vmem:[#allocation2 + $0x8] sm:$0xff] 0.0
          %423 = vst [vmem:[#allocation2 + $0x10] sm:$0xff] 0.0
        $region89: #{tpu_custom_call.1} parent=76 // pred_fallthru
          _
        %v424 = vld [vmem:[%s390] sm:$0xf]
        %v425 = vld [vmem:[%s390 + $0x4] sm:$0xf]
        %v426 = vld [vmem:[%s390 + $0x8] sm:$0xf]
        %v427 = vld [vmem:[%s390 + $0xc] sm:$0xf]
        %v428 = vld [vmem:[%s390 + $0x10] sm:$0xf]
        %v429 = vld [vmem:[%s390 + $0x14] sm:$0xf]
        %v430 = vld [vmem:[%s390 + $0x18] sm:$0xf]
        %v431 = vld [vmem:[%s390 + $0x1c] sm:$0xf]
        %v432 = vld [vmem:[%s390 + $0x20] sm:$0xf]
        %v433 = vld [vmem:[%s390 + $0x24] sm:$0xf]
        %v434 = vld [vmem:[%s390 + $0x28] sm:$0xf]
        %v435 = vld [vmem:[%s390 + $0x2c] sm:$0xf]
        %v436 = vld [vmem:[%s390 + $0x30] sm:$0xf]
        %v437 = vld [vmem:[%s390 + $0x34] sm:$0xf]
        %v438 = vld [vmem:[%s390 + $0x38] sm:$0xf]
        %v439 = vld [vmem:[%s390 + $0x3c] sm:$0xf]
        %v440 = vld [vmem:[%s390 + $0x40] sm:$0xf]
        %v441 = vld [vmem:[%s390 + $0x44] sm:$0xf]
        %v442 = vld [vmem:[%s390 + $0x48] sm:$0xf]
        %v443 = vld [vmem:[%s390 + $0x4c] sm:$0xf]
        %v444 = vld [vmem:[%s390 + $0x50] sm:$0xf]
        %v445 = vld [vmem:[%s390 + $0x54] sm:$0xf]
        %v446 = vld [vmem:[%s390 + $0x58] sm:$0xf]
        %v447 = vld [vmem:[%s390 + $0x5c] sm:$0xf]
        %v448 = vld [vmem:[%s390 + $0x60] sm:$0xf]
        %v449 = vld [vmem:[%s390 + $0x64] sm:$0xf]
        %v450 = vld [vmem:[%s390 + $0x68] sm:$0xf]
        %v451 = vld [vmem:[%s390 + $0x6c] sm:$0xf]
        %v452 = vld [vmem:[%s390 + $0x70] sm:$0xf]
        %v453 = vld [vmem:[%s390 + $0x74] sm:$0xf]
        %v454 = vld [vmem:[%s390 + $0x78] sm:$0xf]
        %v455 = vld [vmem:[%s390 + $0x7c] sm:$0xf]
        %v456 = vld [vmem:[%s1] sm:$0xff]
        %v457 = vld [vmem:[%s1 + $0x8] sm:$0xff]
        %v458 = vld [vmem:[%s1 + $0x10] sm:$0xff]
        %v459 = vld [vmem:[%s2] sm:$0xff]
        %v460 = vld [vmem:[%s2 + $0x8] sm:$0xf]
        %v463 = vlaneseq
        %v464 = vshrl.u32 %v463, 7
        %v465 = vsub.s32 0, %v464
        %v466 = vrot.slane %v459, %v465
        %v467 = vlaneseq
        %v468 = vshrl.u32 %v467, 7
        %v469 = vsub.s32 1, %v468
        %v470 = vrot.slane %v459, %v469
        %v471 = vlaneseq
        %v472 = vshrl.u32 %v471, 7
        %v473 = vsub.s32 2, %v472
        %v474 = vrot.slane %v459, %v473
        %v475 = vlaneseq
        %v476 = vshrl.u32 %v475, 7
        %v477 = vsub.s32 3, %v476
        %v478 = vrot.slane %v459, %v477
        %v479 = vlaneseq
        %v480 = vshrl.u32 %v479, 7
        %v481 = vsub.s32 4, %v480
        %v482 = vrot.slane %v459, %v481
        %v483 = vlaneseq
        %v484 = vshrl.u32 %v483, 7
        %v485 = vsub.s32 5, %v484
        %v486 = vrot.slane %v459, %v485
        %v487 = vlaneseq
        %v488 = vshrl.u32 %v487, 7
        %v489 = vsub.s32 6, %v488
        %v490 = vrot.slane %v459, %v489
        %v491 = vlaneseq
        %v492 = vshrl.u32 %v491, 7
        %v493 = vsub.s32 7, %v492
        %v494 = vrot.slane %v459, %v493
        %v495 = vlaneseq
        %v496 = vshrl.u32 %v495, 7
        %v497 = vsub.s32 0, %v496
        %v498 = vrot.slane %v460, %v497
        %v499 = vlaneseq
        %v500 = vshrl.u32 %v499, 7
        %v501 = vsub.s32 1, %v500
        %v502 = vrot.slane %v460, %v501
        %v503 = vlaneseq
        %v504 = vshrl.u32 %v503, 7
        %v505 = vsub.s32 2, %v504
        %v506 = vrot.slane %v460, %v505
        %v507 = vlaneseq
        %v508 = vshrl.u32 %v507, 7
        %v509 = vsub.s32 3, %v508
        %v510 = vrot.slane %v460, %v509
        %v555 = vunpack.c.l.b16 %v424
        %v556 = vunpack.c.l.b16 %v425
        %v557 = vunpack.c.l.b16 %v426
        %v558 = vunpack.c.l.b16 %v427
        %v559 = vunpack.c.l.b16 %v428
        %v560 = vunpack.c.l.b16 %v429
        %v561 = vunpack.c.l.b16 %v430
        %v562 = vunpack.c.l.b16 %v431
        %v563 = vunpack.c.l.b16 %v432
        %v564 = vunpack.c.l.b16 %v433
        %v565 = vunpack.c.l.b16 %v434
        %v566 = vunpack.c.l.b16 %v435
        %v567 = vunpack.c.l.b16 %v436
        %v568 = vunpack.c.l.b16 %v437
        %v569 = vunpack.c.l.b16 %v438
        %v570 = vunpack.c.l.b16 %v439
        %v571 = vunpack.c.l.b16 %v440
        %v572 = vunpack.c.l.b16 %v441
        %v573 = vunpack.c.l.b16 %v442
        %v574 = vunpack.c.l.b16 %v443
        %v575 = vunpack.c.l.b16 %v444
        %v576 = vunpack.c.l.b16 %v445
        %v577 = vunpack.c.l.b16 %v446
        %v578 = vunpack.c.l.b16 %v447
        %v579 = vunpack.c.l.b16 %v448
        %v580 = vunpack.c.l.b16 %v449
        %v581 = vunpack.c.l.b16 %v450
        %v582 = vunpack.c.l.b16 %v451
        %v583 = vunpack.c.l.b16 %v452
        %v584 = vunpack.c.l.b16 %v453
        %v585 = vunpack.c.l.b16 %v454
        %v586 = vunpack.c.l.b16 %v455
        %v587 = vpack.c.b16 %v556, %v555
        %v588 = vpack.c.b16 %v558, %v557
        %v589 = vpack.c.b16 %v560, %v559
        %v590 = vpack.c.b16 %v562, %v561
        %v591 = vpack.c.b16 %v564, %v563
        %v592 = vpack.c.b16 %v566, %v565
        %v593 = vpack.c.b16 %v568, %v567
        %v594 = vpack.c.b16 %v570, %v569
        %v595 = vpack.c.b16 %v572, %v571
        %v596 = vpack.c.b16 %v574, %v573
        %v597 = vpack.c.b16 %v576, %v575
        %v598 = vpack.c.b16 %v578, %v577
        %v599 = vpack.c.b16 %v580, %v579
        %v600 = vpack.c.b16 %v582, %v581
        %v601 = vpack.c.b16 %v584, %v583
        %v602 = vpack.c.b16 %v586, %v585
        %v606 = vcombine.high %v456, %v456
        %v608 = vunpack.c.l.s4 1983009808
        %v609 = vunpack.c.0.s8 %v608
        %v610 = vlaneseq
        %v611 = vshrl.u32 %v610, 7
        %v612 = vsub.s32 %v609, %v611
        %v613 = vrot.slane %v456, %v612
        %v615 = vunpack.c.l.s4 1983009808
        %v616 = vunpack.c.0.s8 %v615
        %v617 = vlaneseq
        %v618 = vshrl.u32 %v617, 7
        %v619 = vsub.s32 %v616, %v618
        %v620 = vrot.slane %v606, %v619
        %v621 = vcombine.high %v613, %v613
        %v622 = vcombine.high %v620, %v620
        %v623 = vcombine.high %v457, %v457
        %v625 = vunpack.c.l.s4 1983009808
        %v626 = vunpack.c.0.s8 %v625
        %v627 = vlaneseq
        %v628 = vshrl.u32 %v627, 7
        %v629 = vsub.s32 %v626, %v628
        %v630 = vrot.slane %v457, %v629
        %v632 = vunpack.c.l.s4 1983009808
        %v633 = vunpack.c.0.s8 %v632
        %v634 = vlaneseq
        %v635 = vshrl.u32 %v634, 7
        %v636 = vsub.s32 %v633, %v635
        %v637 = vrot.slane %v623, %v636
        %v638 = vcombine.high %v630, %v630
        %v639 = vcombine.high %v637, %v637
        %v640 = vcombine.high %v458, %v458
        %v642 = vunpack.c.l.s4 1983009808
        %v643 = vunpack.c.0.s8 %v642
        %v644 = vlaneseq
        %v645 = vshrl.u32 %v644, 7
        %v646 = vsub.s32 %v643, %v645
        %v647 = vrot.slane %v458, %v646
        %v649 = vunpack.c.l.s4 1983009808
        %v650 = vunpack.c.0.s8 %v649
        %v651 = vlaneseq
        %v652 = vshrl.u32 %v651, 7
        %v653 = vsub.s32 %v650, %v652
        %v654 = vrot.slane %v640, %v653
        %v655 = vcombine.high %v647, %v647
        %v656 = vcombine.high %v654, %v654
        %vm657 = vcmask 23552
        %v659 = vsel %vm657, %v587, 0
        %v662 = vsel %vm657, %v588, 0
        %v665 = vsel %vm657, %v589, 0
        %v668 = vsel %vm657, %v590, 0
        %v671 = vsel %vm657, %v591, 0
        %v674 = vsel %vm657, %v592, 0
        %v677 = vsel %vm657, %v593, 0
        %v680 = vsel %vm657, %v594, 0
        %v683 = vsel %vm657, %v595, 0
        %v686 = vsel %vm657, %v596, 0
        %v689 = vsel %vm657, %v597, 0
        %v692 = vsel %vm657, %v598, 0
        %v695 = vsel %vm657, %v599, 0
        %v698 = vsel %vm657, %v600, 0
        %v701 = vsel %vm657, %v601, 0
        %v704 = vsel %vm657, %v602, 0
        %vm706 = vcmask 1040384
        %vm707 = vcmask 1041408
        %v708 = vsel %vm706, 4294967295, 65535
        %v709 = vsel %vm707, %v708, 0
        %v711 = vand.u32 %v613, %v709
        %v714 = vand.u32 %v621, %v709
        %v717 = vand.u32 %v620, %v709
        %v720 = vand.u32 %v622, %v709
        %v723 = vand.u32 %v630, %v709
        %v726 = vand.u32 %v638, %v709
        %v729 = vand.u32 %v637, %v709
        %v732 = vand.u32 %v639, %v709
        %v735 = vand.u32 %v647, %v709
        %v738 = vand.u32 %v655, %v709
        %v741 = vand.u32 %v654, %v709
        %v744 = vand.u32 %v656, %v709
        %746 = vmatprep.subr.bf16.mxu0 %v714
        %747 = vmatpush1.bf16.msra.mxu0 %v711
        %748 = vmatprep.subr.bf16.mxu0 0
        %749 = vmatpush1.bf16.msra.mxu0 0
        %750 = vmatprep.subr.bf16.mxu0 0
        %751 = vmatpush1.bf16.msra.mxu0 0
        %752 = vmatprep.subr.bf16.mxu0 0
        %753 = vmatpush1.bf16.msra.mxu0 0
        %754 = vmatprep.subr.bf16.mxu0 0
        %755 = vmatpush1.bf16.msra.mxu0 0
        %756 = vmatprep.subr.bf16.mxu0 0
        %757 = vmatpush1.bf16.msra.mxu0 0
        %758 = vmatprep.subr.bf16.mxu0 0
        %759 = vmatpush1.bf16.msra.mxu0 0
        %760 = vmatprep.subr.bf16.mxu0 0
        %761 = vmatpush1.bf16.msra.mxu0 0
        %762 = vmatprep.subr.bf16.mxu0 0
        %763 = vmatpush1.bf16.msra.mxu0 0
        %764 = vmatprep.subr.bf16.mxu0 0
        %765 = vmatpush1.bf16.msra.mxu0 0
        %766 = vmatprep.subr.bf16.mxu0 0
        %767 = vmatpush1.bf16.msra.mxu0 0
        %768 = vmatprep.subr.bf16.mxu0 0
        %769 = vmatpush1.bf16.msra.mxu0 0
        %770 = vmatprep.subr.bf16.mxu0 0
        %771 = vmatpush1.bf16.msra.mxu0 0
        %772 = vmatprep.subr.bf16.mxu0 0
        %773 = vmatpush1.bf16.msra.mxu0 0
        %774 = vmatprep.subr.bf16.mxu0 0
        %775 = vmatpush1.bf16.msra.mxu0 0
        %776 = vmatprep.subr.bf16.mxu0 0
        %777 = vmatpush1.bf16.msra.mxu0 0
        %778 = vmatprep.mubr.bf16.mxu0 0
        %779 = vmatmul.mubr.bf16.gmra.mrb[0].mxu0 %v659
        %v780 = vpop.f32.mrb[0].mxu0
        %v781 = vadd.f32 %v466, %v780
        %v782 = vpop.f32.mrb[0].mxu0
        %v783 = vadd.f32 %v470, %v782
        %v784 = vpop.f32.mrb[0].mxu0
        %v785 = vadd.f32 %v466, %v784
        %v786 = vpop.f32.mrb[0].mxu0
        %v787 = vadd.f32 %v470, %v786
        %788 = vmatprep.mubr.bf16.mxu0 0
        %789 = vmatmul.mubr.bf16.gmra.mrb[0].mxu0 %v662
        %v790 = vpop.f32.mrb[0].mxu0
        %v791 = vadd.f32 %v466, %v790
        %v792 = vpop.f32.mrb[0].mxu0
        %v793 = vadd.f32 %v470, %v792
        %v794 = vpop.f32.mrb[0].mxu0
        %v795 = vadd.f32 %v466, %v794
        %v796 = vpop.f32.mrb[0].mxu0
        %v797 = vadd.f32 %v470, %v796
        %798 = vmatprep.mubr.bf16.mxu0 0
        %799 = vmatmul.mubr.bf16.gmra.mrb[0].mxu0 %v665
        %v800 = vpop.f32.mrb[0].mxu0
        %v801 = vadd.f32 %v466, %v800
        %v802 = vpop.f32.mrb[0].mxu0
        %v803 = vadd.f32 %v470, %v802
        %v804 = vpop.f32.mrb[0].mxu0
        %v805 = vadd.f32 %v466, %v804
        %v806 = vpop.f32.mrb[0].mxu0
        %v807 = vadd.f32 %v470, %v806
        %808 = vmatprep.mubr.bf16.mxu0 0
        %809 = vmatmul.mubr.bf16.gmra.mrb[0].mxu0 %v668
        %v810 = vpop.f32.mrb[0].mxu0
        %v811 = vadd.f32 %v466, %v810
        %v812 = vpop.f32.mrb[0].mxu0
        %v813 = vadd.f32 %v470, %v812
        %v814 = vpop.f32.mrb[0].mxu0
        %v815 = vadd.f32 %v466, %v814
        %v816 = vpop.f32.mrb[0].mxu0
        %v817 = vadd.f32 %v470, %v816
        %818 = vmatprep.mubr.bf16.mxu0 0
        %819 = vmatmul.mubr.bf16.gmra.mrb[0].mxu0 %v671
        %v820 = vpop.f32.mrb[0].mxu0
        %v821 = vadd.f32 %v466, %v820
        %v822 = vpop.f32.mrb[0].mxu0
        %v823 = vadd.f32 %v470, %v822
        %v824 = vpop.f32.mrb[0].mxu0
        %v825 = vadd.f32 %v466, %v824
        %v826 = vpop.f32.mrb[0].mxu0
        %v827 = vadd.f32 %v470, %v826
        %828 = vmatprep.mubr.bf16.mxu0 0
        %829 = vmatmul.mubr.bf16.gmra.mrb[0].mxu0 %v674
        %v830 = vpop.f32.mrb[0].mxu0
        %v831 = vadd.f32 %v466, %v830
        %v832 = vpop.f32.mrb[0].mxu0
        %v833 = vadd.f32 %v470, %v832
        %v834 = vpop.f32.mrb[0].mxu0
        %v835 = vadd.f32 %v466, %v834
        %v836 = vpop.f32.mrb[0].mxu0
        %v837 = vadd.f32 %v470, %v836
        %838 = vmatprep.mubr.bf16.mxu0 0
        %839 = vmatmul.mubr.bf16.gmra.mrb[0].mxu0 %v677
        %v840 = vpop.f32.mrb[0].mxu0
        %v841 = vadd.f32 %v466, %v840
        %v842 = vpop.f32.mrb[0].mxu0
        %v843 = vadd.f32 %v470, %v842
        %v844 = vpop.f32.mrb[0].mxu0
        %v845 = vadd.f32 %v466, %v844
        %v846 = vpop.f32.mrb[0].mxu0
        %v847 = vadd.f32 %v470, %v846
        %848 = vmatprep.mubr.bf16.mxu0 0
        %849 = vmatmul.mubr.bf16.gmra.mrb[0].mxu0 %v680
        %v850 = vpop.f32.mrb[0].mxu0
        %v851 = vadd.f32 %v466, %v850
        %v852 = vpop.f32.mrb[0].mxu0
        %v853 = vadd.f32 %v470, %v852
        %v854 = vpop.f32.mrb[0].mxu0
        %v855 = vadd.f32 %v466, %v854
        %v856 = vpop.f32.mrb[0].mxu0
        %v857 = vadd.f32 %v470, %v856
        %858 = vmatprep.mubr.bf16.mxu0 0
        %859 = vmatmul.mubr.bf16.gmra.mrb[0].mxu0 %v683
        %v860 = vpop.f32.mrb[0].mxu0
        %v861 = vadd.f32 %v466, %v860
        %v862 = vpop.f32.mrb[0].mxu0
        %v863 = vadd.f32 %v470, %v862
        %v864 = vpop.f32.mrb[0].mxu0
        %v865 = vadd.f32 %v466, %v864
        %v866 = vpop.f32.mrb[0].mxu0
        %v867 = vadd.f32 %v470, %v866
        %868 = vmatprep.mubr.bf16.mxu0 0
        %869 = vmatmul.mubr.bf16.gmra.mrb[0].mxu0 %v686
        %v870 = vpop.f32.mrb[0].mxu0
        %v871 = vadd.f32 %v466, %v870
        %v872 = vpop.f32.mrb[0].mxu0
        %v873 = vadd.f32 %v470, %v872
        %v874 = vpop.f32.mrb[0].mxu0
        %v875 = vadd.f32 %v466, %v874
        %v876 = vpop.f32.mrb[0].mxu0
        %v877 = vadd.f32 %v470, %v876
        %878 = vmatprep.mubr.bf16.mxu0 0
        %879 = vmatmul.mubr.bf16.gmra.mrb[0].mxu0 %v689
        %v880 = vpop.f32.mrb[0].mxu0
        %v881 = vadd.f32 %v466, %v880
        %v882 = vpop.f32.mrb[0].mxu0
        %v883 = vadd.f32 %v470, %v882
        %v884 = vpop.f32.mrb[0].mxu0
        %v885 = vadd.f32 %v466, %v884
        %v886 = vpop.f32.mrb[0].mxu0
        %v887 = vadd.f32 %v470, %v886
        %888 = vmatprep.mubr.bf16.mxu0 0
        %889 = vmatmul.mubr.bf16.gmra.mrb[0].mxu0 %v692
        %v890 = vpop.f32.mrb[0].mxu0
        %v891 = vadd.f32 %v466, %v890
        %v892 = vpop.f32.mrb[0].mxu0
        %v893 = vadd.f32 %v470, %v892
        %v894 = vpop.f32.mrb[0].mxu0
        %v895 = vadd.f32 %v466, %v894
        %v896 = vpop.f32.mrb[0].mxu0
        %v897 = vadd.f32 %v470, %v896
        %898 = vmatprep.mubr.bf16.mxu0 0
        %899 = vmatmul.mubr.bf16.gmra.mrb[0].mxu0 %v695
        %v900 = vpop.f32.mrb[0].mxu0
        %v901 = vadd.f32 %v466, %v900
        %v902 = vpop.f32.mrb[0].mxu0
        %v903 = vadd.f32 %v470, %v902
        %v904 = vpop.f32.mrb[0].mxu0
        %v905 = vadd.f32 %v466, %v904
        %v906 = vpop.f32.mrb[0].mxu0
        %v907 = vadd.f32 %v470, %v906
        %908 = vmatprep.mubr.bf16.mxu0 0
        %909 = vmatmul.mubr.bf16.gmra.mrb[0].mxu0 %v698
        %v910 = vpop.f32.mrb[0].mxu0
        %v911 = vadd.f32 %v466, %v910
        %v912 = vpop.f32.mrb[0].mxu0
        %v913 = vadd.f32 %v470, %v912
        %v914 = vpop.f32.mrb[0].mxu0
        %v915 = vadd.f32 %v466, %v914
        %v916 = vpop.f32.mrb[0].mxu0
        %v917 = vadd.f32 %v470, %v916
        %918 = vmatprep.mubr.bf16.mxu0 0
        %919 = vmatmul.mubr.bf16.gmra.mrb[0].mxu0 %v701
        %v920 = vpop.f32.mrb[0].mxu0
        %v921 = vadd.f32 %v466, %v920
        %v922 = vpop.f32.mrb[0].mxu0
        %v923 = vadd.f32 %v470, %v922
        %v924 = vpop.f32.mrb[0].mxu0
        %v925 = vadd.f32 %v466, %v924
        %v926 = vpop.f32.mrb[0].mxu0
        %v927 = vadd.f32 %v470, %v926
        %928 = vmatprep.mubr.bf16.mxu0 0
        %929 = vmatmul.mubr.bf16.gmra.mrb[0].mxu0 %v704
        %v930 = vpop.f32.mrb[0].mxu0
        %v931 = vadd.f32 %v466, %v930
        %v932 = vpop.f32.mrb[0].mxu0
        %v933 = vadd.f32 %v470, %v932
        %v934 = vpop.f32.mrb[0].mxu0
        %v935 = vadd.f32 %v466, %v934
        %v936 = vpop.f32.mrb[0].mxu0
        %v937 = vadd.f32 %v470, %v936
        %938 = vdwg.mxu0
        %939 = vmatprep.subr.bf16.mxu0 %v720
        %940 = vmatpush1.bf16.msra.mxu0 %v717
        %941 = vmatprep.subr.bf16.mxu0 0
        %942 = vmatpush1.bf16.msra.mxu0 0
        %943 = vmatprep.subr.bf16.mxu0 0
        %944 = vmatpush1.bf16.msra.mxu0 0
        %945 = vmatprep.subr.bf16.mxu0 0
        %946 = vmatpush1.bf16.msra.mxu0 0
        %947 = vmatprep.subr.bf16.mxu0 0
        %948 = vmatpush1.bf16.msra.mxu0 0
        %949 = vmatprep.subr.bf16.mxu0 0
        %950 = vmatpush1.bf16.msra.mxu0 0
        %951 = vmatprep.subr.bf16.mxu0 0
        %952 = vmatpush1.bf16.msra.mxu0 0
        %953 = vmatprep.subr.bf16.mxu0 0
        %954 = vmatpush1.bf16.msra.mxu0 0
        %955 = vmatprep.subr.bf16.mxu0 0
        %956 = vmatpush1.bf16.msra.mxu0 0
        %957 = vmatprep.subr.bf16.mxu0 0
        %958 = vmatpush1.bf16.msra.mxu0 0
        %959 = vmatprep.subr.bf16.mxu0 0
        %960 = vmatpush1.bf16.msra.mxu0 0
        %961 = vmatprep.subr.bf16.mxu0 0
        %962 = vmatpush1.bf16.msra.mxu0 0
        %963 = vmatprep.subr.bf16.mxu0 0
        %964 = vmatpush1.bf16.msra.mxu0 0
        %965 = vmatprep.subr.bf16.mxu0 0
        %966 = vmatpush1.bf16.msra.mxu0 0
        %967 = vmatprep.subr.bf16.mxu0 0
        %968 = vmatpush1.bf16.msra.mxu0 0
        %969 = vmatprep.subr.bf16.mxu0 0
        %970 = vmatpush1.bf16.msra.mxu0 0
        %971 = vmatprep.mubr.bf16.mxu0 0
        %972 = vmatmul.mubr.bf16.gmra.mrb[0].mxu0 %v659
        %v973 = vpop.f32.mrb[0].mxu0
        %v974 = vadd.f32 %v474, %v973
        %v975 = vpop.f32.mrb[0].mxu0
        %v976 = vadd.f32 %v478, %v975
        %v977 = vpop.f32.mrb[0].mxu0
        %v978 = vadd.f32 %v474, %v977
        %v979 = vpop.f32.mrb[0].mxu0
        %v980 = vadd.f32 %v478, %v979
        %981 = vmatprep.mubr.bf16.mxu0 0
        %982 = vmatmul.mubr.bf16.gmra.mrb[0].mxu0 %v662
        %v983 = vpop.f32.mrb[0].mxu0
        %v984 = vadd.f32 %v474, %v983
        %v985 = vpop.f32.mrb[0].mxu0
        %v986 = vadd.f32 %v478, %v985
        %v987 = vpop.f32.mrb[0].mxu0
        %v988 = vadd.f32 %v474, %v987
        %v989 = vpop.f32.mrb[0].mxu0
        %v990 = vadd.f32 %v478, %v989
        %991 = vmatprep.mubr.bf16.mxu0 0
        %992 = vmatmul.mubr.bf16.gmra.mrb[0].mxu0 %v665
        %v993 = vpop.f32.mrb[0].mxu0
        %v994 = vadd.f32 %v474, %v993
        %v995 = vpop.f32.mrb[0].mxu0
        %v996 = vadd.f32 %v478, %v995
        %v997 = vpop.f32.mrb[0].mxu0
        %v998 = vadd.f32 %v474, %v997
        %v999 = vpop.f32.mrb[0].mxu0
        %v1000 = vadd.f32 %v478, %v999
        %1001 = vmatprep.mubr.bf16.mxu0 0
        %1002 = vmatmul.mubr.bf16.gmra.mrb[0].mxu0 %v668
        %v1003 = vpop.f32.mrb[0].mxu0
        %v1004 = vadd.f32 %v474, %v1003
        %v1005 = vpop.f32.mrb[0].mxu0
        %v1006 = vadd.f32 %v478, %v1005
        %v1007 = vpop.f32.mrb[0].mxu0
        %v1008 = vadd.f32 %v474, %v1007
        %v1009 = vpop.f32.mrb[0].mxu0
        %v1010 = vadd.f32 %v478, %v1009
        %1011 = vmatprep.mubr.bf16.mxu0 0
        %1012 = vmatmul.mubr.bf16.gmra.mrb[0].mxu0 %v671
        %v1013 = vpop.f32.mrb[0].mxu0
        %v1014 = vadd.f32 %v474, %v1013
        %v1015 = vpop.f32.mrb[0].mxu0
        %v1016 = vadd.f32 %v478, %v1015
        %v1017 = vpop.f32.mrb[0].mxu0
        %v1018 = vadd.f32 %v474, %v1017
        %v1019 = vpop.f32.mrb[0].mxu0
        %v1020 = vadd.f32 %v478, %v1019
        %1021 = vmatprep.mubr.bf16.mxu0 0
        %1022 = vmatmul.mubr.bf16.gmra.mrb[0].mxu0 %v674
        %v1023 = vpop.f32.mrb[0].mxu0
        %v1024 = vadd.f32 %v474, %v1023
        %v1025 = vpop.f32.mrb[0].mxu0
        %v1026 = vadd.f32 %v478, %v1025
        %v1027 = vpop.f32.mrb[0].mxu0
        %v1028 = vadd.f32 %v474, %v1027
        %v1029 = vpop.f32.mrb[0].mxu0
        %v1030 = vadd.f32 %v478, %v1029
        %1031 = vmatprep.mubr.bf16.mxu0 0
        %1032 = vmatmul.mubr.bf16.gmra.mrb[0].mxu0 %v677
        %v1033 = vpop.f32.mrb[0].mxu0
        %v1034 = vadd.f32 %v474, %v1033
        %v1035 = vpop.f32.mrb[0].mxu0
        %v1036 = vadd.f32 %v478, %v1035
        %v1037 = vpop.f32.mrb[0].mxu0
        %v1038 = vadd.f32 %v474, %v1037
        %v1039 = vpop.f32.mrb[0].mxu0
        %v1040 = vadd.f32 %v478, %v1039
        %1041 = vmatprep.mubr.bf16.mxu0 0
        %1042 = vmatmul.mubr.bf16.gmra.mrb[0].mxu0 %v680
        %v1043 = vpop.f32.mrb[0].mxu0
        %v1044 = vadd.f32 %v474, %v1043
        %v1045 = vpop.f32.mrb[0].mxu0
        %v1046 = vadd.f32 %v478, %v1045
        %v1047 = vpop.f32.mrb[0].mxu0
        %v1048 = vadd.f32 %v474, %v1047
        %v1049 = vpop.f32.mrb[0].mxu0
        %v1050 = vadd.f32 %v478, %v1049
        %1051 = vmatprep.mubr.bf16.mxu0 0
        %1052 = vmatmul.mubr.bf16.gmra.mrb[0].mxu0 %v683
        %v1053 = vpop.f32.mrb[0].mxu0
        %v1054 = vadd.f32 %v474, %v1053
        %v1055 = vpop.f32.mrb[0].mxu0
        %v1056 = vadd.f32 %v478, %v1055
        %v1057 = vpop.f32.mrb[0].mxu0
        %v1058 = vadd.f32 %v474, %v1057
        %v1059 = vpop.f32.mrb[0].mxu0
        %v1060 = vadd.f32 %v478, %v1059
        %1061 = vmatprep.mubr.bf16.mxu0 0
        %1062 = vmatmul.mubr.bf16.gmra.mrb[0].mxu0 %v686
        %v1063 = vpop.f32.mrb[0].mxu0
        %v1064 = vadd.f32 %v474, %v1063
        %v1065 = vpop.f32.mrb[0].mxu0
        %v1066 = vadd.f32 %v478, %v1065
        %v1067 = vpop.f32.mrb[0].mxu0
        %v1068 = vadd.f32 %v474, %v1067
        %v1069 = vpop.f32.mrb[0].mxu0
        %v1070 = vadd.f32 %v478, %v1069
        %1071 = vmatprep.mubr.bf16.mxu0 0
        %1072 = vmatmul.mubr.bf16.gmra.mrb[0].mxu0 %v689
        %v1073 = vpop.f32.mrb[0].mxu0
        %v1074 = vadd.f32 %v474, %v1073
        %v1075 = vpop.f32.mrb[0].mxu0
        %v1076 = vadd.f32 %v478, %v1075
        %v1077 = vpop.f32.mrb[0].mxu0
        %v1078 = vadd.f32 %v474, %v1077
        %v1079 = vpop.f32.mrb[0].mxu0
        %v1080 = vadd.f32 %v478, %v1079
        %1081 = vmatprep.mubr.bf16.mxu0 0
        %1082 = vmatmul.mubr.bf16.gmra.mrb[0].mxu0 %v692
        %v1083 = vpop.f32.mrb[0].mxu0
        %v1084 = vadd.f32 %v474, %v1083
        %v1085 = vpop.f32.mrb[0].mxu0
        %v1086 = vadd.f32 %v478, %v1085
        %v1087 = vpop.f32.mrb[0].mxu0
        %v1088 = vadd.f32 %v474, %v1087
        %v1089 = vpop.f32.mrb[0].mxu0
        %v1090 = vadd.f32 %v478, %v1089
        %1091 = vmatprep.mubr.bf16.mxu0 0
        %1092 = vmatmul.mubr.bf16.gmra.mrb[0].mxu0 %v695
        %v1093 = vpop.f32.mrb[0].mxu0
        %v1094 = vadd.f32 %v474, %v1093
        %v1095 = vpop.f32.mrb[0].mxu0
        %v1096 = vadd.f32 %v478, %v1095
        %v1097 = vpop.f32.mrb[0].mxu0
        %v1098 = vadd.f32 %v474, %v1097
        %v1099 = vpop.f32.mrb[0].mxu0
        %v1100 = vadd.f32 %v478, %v1099
        %1101 = vmatprep.mubr.bf16.mxu0 0
        %1102 = vmatmul.mubr.bf16.gmra.mrb[0].mxu0 %v698
        %v1103 = vpop.f32.mrb[0].mxu0
        %v1104 = vadd.f32 %v474, %v1103
        %v1105 = vpop.f32.mrb[0].mxu0
        %v1106 = vadd.f32 %v478, %v1105
        %v1107 = vpop.f32.mrb[0].mxu0
        %v1108 = vadd.f32 %v474, %v1107
        %v1109 = vpop.f32.mrb[0].mxu0
        %v1110 = vadd.f32 %v478, %v1109
        %1111 = vmatprep.mubr.bf16.mxu0 0
        %1112 = vmatmul.mubr.bf16.gmra.mrb[0].mxu0 %v701
        %v1113 = vpop.f32.mrb[0].mxu0
        %v1114 = vadd.f32 %v474, %v1113
        %v1115 = vpop.f32.mrb[0].mxu0
        %v1116 = vadd.f32 %v478, %v1115
        %v1117 = vpop.f32.mrb[0].mxu0
        %v1118 = vadd.f32 %v474, %v1117
        %v1119 = vpop.f32.mrb[0].mxu0
        %v1120 = vadd.f32 %v478, %v1119
        %1121 = vmatprep.mubr.bf16.mxu0 0
        %1122 = vmatmul.mubr.bf16.gmra.mrb[0].mxu0 %v704
        %v1123 = vpop.f32.mrb[0].mxu0
        %v1124 = vadd.f32 %v474, %v1123
        %v1125 = vpop.f32.mrb[0].mxu0
        %v1126 = vadd.f32 %v478, %v1125
        %v1127 = vpop.f32.mrb[0].mxu0
        %v1128 = vadd.f32 %v474, %v1127
        %v1129 = vpop.f32.mrb[0].mxu0
        %v1130 = vadd.f32 %v478, %v1129
        %1131 = vdwg.mxu0
        %1132 = vmatprep.subr.bf16.mxu0 %v726
        %1133 = vmatpush1.bf16.msra.mxu0 %v723
        %1134 = vmatprep.subr.bf16.mxu0 0
        %1135 = vmatpush1.bf16.msra.mxu0 0
        %1136 = vmatprep.subr.bf16.mxu0 0
        %1137 = vmatpush1.bf16.msra.mxu0 0
        %1138 = vmatprep.subr.bf16.mxu0 0
        %1139 = vmatpush1.bf16.msra.mxu0 0
        %1140 = vmatprep.subr.bf16.mxu0 0
        %1141 = vmatpush1.bf16.msra.mxu0 0
        %1142 = vmatprep.subr.bf16.mxu0 0
        %1143 = vmatpush1.bf16.msra.mxu0 0
        %1144 = vmatprep.subr.bf16.mxu0 0
        %1145 = vmatpush1.bf16.msra.mxu0 0
        %1146 = vmatprep.subr.bf16.mxu0 0
        %1147 = vmatpush1.bf16.msra.mxu0 0
        %1148 = vmatprep.subr.bf16.mxu0 0
        %1149 = vmatpush1.bf16.msra.mxu0 0
        %1150 = vmatprep.subr.bf16.mxu0 0
        %1151 = vmatpush1.bf16.msra.mxu0 0
        %1152 = vmatprep.subr.bf16.mxu0 0
        %1153 = vmatpush1.bf16.msra.mxu0 0
        %1154 = vmatprep.subr.bf16.mxu0 0
        %1155 = vmatpush1.bf16.msra.mxu0 0
        %1156 = vmatprep.subr.bf16.mxu0 0
        %1157 = vmatpush1.bf16.msra.mxu0 0
        %1158 = vmatprep.subr.bf16.mxu0 0
        %1159 = vmatpush1.bf16.msra.mxu0 0
        %1160 = vmatprep.subr.bf16.mxu0 0
        %1161 = vmatpush1.bf16.msra.mxu0 0
        %1162 = vmatprep.subr.bf16.mxu0 0
        %1163 = vmatpush1.bf16.msra.mxu0 0
        %1164 = vmatprep.mubr.bf16.mxu0 0
        %1165 = vmatmul.mubr.bf16.gmra.mrb[0].mxu0 %v659
        %v1166 = vpop.f32.mrb[0].mxu0
        %v1167 = vadd.f32 %v482, %v1166
        %v1168 = vpop.f32.mrb[0].mxu0
        %v1169 = vadd.f32 %v486, %v1168
        %v1170 = vpop.f32.mrb[0].mxu0
        %v1171 = vadd.f32 %v482, %v1170
        %v1172 = vpop.f32.mrb[0].mxu0
        %v1173 = vadd.f32 %v486, %v1172
        %1174 = vmatprep.mubr.bf16.mxu0 0
        %1175 = vmatmul.mubr.bf16.gmra.mrb[0].mxu0 %v662
        %v1176 = vpop.f32.mrb[0].mxu0
        %v1177 = vadd.f32 %v482, %v1176
        %v1178 = vpop.f32.mrb[0].mxu0
        %v1179 = vadd.f32 %v486, %v1178
        %v1180 = vpop.f32.mrb[0].mxu0
        %v1181 = vadd.f32 %v482, %v1180
        %v1182 = vpop.f32.mrb[0].mxu0
        %v1183 = vadd.f32 %v486, %v1182
        %1184 = vmatprep.mubr.bf16.mxu0 0
        %1185 = vmatmul.mubr.bf16.gmra.mrb[0].mxu0 %v665
        %v1186 = vpop.f32.mrb[0].mxu0
        %v1187 = vadd.f32 %v482, %v1186
        %v1188 = vpop.f32.mrb[0].mxu0
        %v1189 = vadd.f32 %v486, %v1188
        %v1190 = vpop.f32.mrb[0].mxu0
        %v1191 = vadd.f32 %v482, %v1190
        %v1192 = vpop.f32.mrb[0].mxu0
        %v1193 = vadd.f32 %v486, %v1192
        %1194 = vmatprep.mubr.bf16.mxu0 0
        %1195 = vmatmul.mubr.bf16.gmra.mrb[0].mxu0 %v668
        %v1196 = vpop.f32.mrb[0].mxu0
        %v1197 = vadd.f32 %v482, %v1196
        %v1198 = vpop.f32.mrb[0].mxu0
        %v1199 = vadd.f32 %v486, %v1198
        %v1200 = vpop.f32.mrb[0].mxu0
        %v1201 = vadd.f32 %v482, %v1200
        %v1202 = vpop.f32.mrb[0].mxu0
        %v1203 = vadd.f32 %v486, %v1202
        %1204 = vmatprep.mubr.bf16.mxu0 0
        %1205 = vmatmul.mubr.bf16.gmra.mrb[0].mxu0 %v671
        %v1206 = vpop.f32.mrb[0].mxu0
        %v1207 = vadd.f32 %v482, %v1206
        %v1208 = vpop.f32.mrb[0].mxu0
        %v1209 = vadd.f32 %v486, %v1208
        %v1210 = vpop.f32.mrb[0].mxu0
        %v1211 = vadd.f32 %v482, %v1210
        %v1212 = vpop.f32.mrb[0].mxu0
        %v1213 = vadd.f32 %v486, %v1212
        %1214 = vmatprep.mubr.bf16.mxu0 0
        %1215 = vmatmul.mubr.bf16.gmra.mrb[0].mxu0 %v674
        %v1216 = vpop.f32.mrb[0].mxu0
        %v1217 = vadd.f32 %v482, %v1216
        %v1218 = vpop.f32.mrb[0].mxu0
        %v1219 = vadd.f32 %v486, %v1218
        %v1220 = vpop.f32.mrb[0].mxu0
        %v1221 = vadd.f32 %v482, %v1220
        %v1222 = vpop.f32.mrb[0].mxu0
        %v1223 = vadd.f32 %v486, %v1222
        %1224 = vmatprep.mubr.bf16.mxu0 0
        %1225 = vmatmul.mubr.bf16.gmra.mrb[0].mxu0 %v677
        %v1226 = vpop.f32.mrb[0].mxu0
        %v1227 = vadd.f32 %v482, %v1226
        %v1228 = vpop.f32.mrb[0].mxu0
        %v1229 = vadd.f32 %v486, %v1228
        %v1230 = vpop.f32.mrb[0].mxu0
        %v1231 = vadd.f32 %v482, %v1230
        %v1232 = vpop.f32.mrb[0].mxu0
        %v1233 = vadd.f32 %v486, %v1232
        %1234 = vmatprep.mubr.bf16.mxu0 0
        %1235 = vmatmul.mubr.bf16.gmra.mrb[0].mxu0 %v680
        %v1236 = vpop.f32.mrb[0].mxu0
        %v1237 = vadd.f32 %v482, %v1236
        %v1238 = vpop.f32.mrb[0].mxu0
        %v1239 = vadd.f32 %v486, %v1238
        %v1240 = vpop.f32.mrb[0].mxu0
        %v1241 = vadd.f32 %v482, %v1240
        %v1242 = vpop.f32.mrb[0].mxu0
        %v1243 = vadd.f32 %v486, %v1242
        %1244 = vmatprep.mubr.bf16.mxu0 0
        %1245 = vmatmul.mubr.bf16.gmra.mrb[0].mxu0 %v683
        %v1246 = vpop.f32.mrb[0].mxu0
        %v1247 = vadd.f32 %v482, %v1246
        %v1248 = vpop.f32.mrb[0].mxu0
        %v1249 = vadd.f32 %v486, %v1248
        %v1250 = vpop.f32.mrb[0].mxu0
        %v1251 = vadd.f32 %v482, %v1250
        %v1252 = vpop.f32.mrb[0].mxu0
        %v1253 = vadd.f32 %v486, %v1252
        %1254 = vmatprep.mubr.bf16.mxu0 0
        %1255 = vmatmul.mubr.bf16.gmra.mrb[0].mxu0 %v686
        %v1256 = vpop.f32.mrb[0].mxu0
        %v1257 = vadd.f32 %v482, %v1256
        %v1258 = vpop.f32.mrb[0].mxu0
        %v1259 = vadd.f32 %v486, %v1258
        %v1260 = vpop.f32.mrb[0].mxu0
        %v1261 = vadd.f32 %v482, %v1260
        %v1262 = vpop.f32.mrb[0].mxu0
        %v1263 = vadd.f32 %v486, %v1262
        %1264 = vmatprep.mubr.bf16.mxu0 0
        %1265 = vmatmul.mubr.bf16.gmra.mrb[0].mxu0 %v689
        %v1266 = vpop.f32.mrb[0].mxu0
        %v1267 = vadd.f32 %v482, %v1266
        %v1268 = vpop.f32.mrb[0].mxu0
        %v1269 = vadd.f32 %v486, %v1268
        %v1270 = vpop.f32.mrb[0].mxu0
        %v1271 = vadd.f32 %v482, %v1270
        %v1272 = vpop.f32.mrb[0].mxu0
        %v1273 = vadd.f32 %v486, %v1272
        %1274 = vmatprep.mubr.bf16.mxu0 0
        %1275 = vmatmul.mubr.bf16.gmra.mrb[0].mxu0 %v692
        %v1276 = vpop.f32.mrb[0].mxu0
        %v1277 = vadd.f32 %v482, %v1276
        %v1278 = vpop.f32.mrb[0].mxu0
        %v1279 = vadd.f32 %v486, %v1278
        %v1280 = vpop.f32.mrb[0].mxu0
        %v1281 = vadd.f32 %v482, %v1280
        %v1282 = vpop.f32.mrb[0].mxu0
        %v1283 = vadd.f32 %v486, %v1282
        %1284 = vmatprep.mubr.bf16.mxu0 0
        %1285 = vmatmul.mubr.bf16.gmra.mrb[0].mxu0 %v695
        %v1286 = vpop.f32.mrb[0].mxu0
        %v1287 = vadd.f32 %v482, %v1286
        %v1288 = vpop.f32.mrb[0].mxu0
        %v1289 = vadd.f32 %v486, %v1288
        %v1290 = vpop.f32.mrb[0].mxu0
        %v1291 = vadd.f32 %v482, %v1290
        %v1292 = vpop.f32.mrb[0].mxu0
        %v1293 = vadd.f32 %v486, %v1292
        %1294 = vmatprep.mubr.bf16.mxu0 0
        %1295 = vmatmul.mubr.bf16.gmra.mrb[0].mxu0 %v698
        %v1296 = vpop.f32.mrb[0].mxu0
        %v1297 = vadd.f32 %v482, %v1296
        %v1298 = vpop.f32.mrb[0].mxu0
        %v1299 = vadd.f32 %v486, %v1298
        %v1300 = vpop.f32.mrb[0].mxu0
        %v1301 = vadd.f32 %v482, %v1300
        %v1302 = vpop.f32.mrb[0].mxu0
        %v1303 = vadd.f32 %v486, %v1302
        %1304 = vmatprep.mubr.bf16.mxu0 0
        %1305 = vmatmul.mubr.bf16.gmra.mrb[0].mxu0 %v701
        %v1306 = vpop.f32.mrb[0].mxu0
        %v1307 = vadd.f32 %v482, %v1306
        %v1308 = vpop.f32.mrb[0].mxu0
        %v1309 = vadd.f32 %v486, %v1308
        %v1310 = vpop.f32.mrb[0].mxu0
        %v1311 = vadd.f32 %v482, %v1310
        %v1312 = vpop.f32.mrb[0].mxu0
        %v1313 = vadd.f32 %v486, %v1312
        %1314 = vmatprep.mubr.bf16.mxu0 0
        %1315 = vmatmul.mubr.bf16.gmra.mrb[0].mxu0 %v704
        %v1316 = vpop.f32.mrb[0].mxu0
        %v1317 = vadd.f32 %v482, %v1316
        %v1318 = vpop.f32.mrb[0].mxu0
        %v1319 = vadd.f32 %v486, %v1318
        %v1320 = vpop.f32.mrb[0].mxu0
        %v1321 = vadd.f32 %v482, %v1320
        %v1322 = vpop.f32.mrb[0].mxu0
        %v1323 = vadd.f32 %v486, %v1322
        %1324 = vdwg.mxu0
        %1325 = vmatprep.subr.bf16.mxu0 %v732
        %1326 = vmatpush1.bf16.msra.mxu0 %v729
        %1327 = vmatprep.subr.bf16.mxu0 0
        %1328 = vmatpush1.bf16.msra.mxu0 0
        %1329 = vmatprep.subr.bf16.mxu0 0
        %1330 = vmatpush1.bf16.msra.mxu0 0
        %1331 = vmatprep.subr.bf16.mxu0 0
        %1332 = vmatpush1.bf16.msra.mxu0 0
        %1333 = vmatprep.subr.bf16.mxu0 0
        %1334 = vmatpush1.bf16.msra.mxu0 0
        %1335 = vmatprep.subr.bf16.mxu0 0
        %1336 = vmatpush1.bf16.msra.mxu0 0
        %1337 = vmatprep.subr.bf16.mxu0 0
        %1338 = vmatpush1.bf16.msra.mxu0 0
        %1339 = vmatprep.subr.bf16.mxu0 0
        %1340 = vmatpush1.bf16.msra.mxu0 0
        %1341 = vmatprep.subr.bf16.mxu0 0
        %1342 = vmatpush1.bf16.msra.mxu0 0
        %1343 = vmatprep.subr.bf16.mxu0 0
        %1344 = vmatpush1.bf16.msra.mxu0 0
        %1345 = vmatprep.subr.bf16.mxu0 0
        %1346 = vmatpush1.bf16.msra.mxu0 0
        %1347 = vmatprep.subr.bf16.mxu0 0
        %1348 = vmatpush1.bf16.msra.mxu0 0
        %1349 = vmatprep.subr.bf16.mxu0 0
        %1350 = vmatpush1.bf16.msra.mxu0 0
        %1351 = vmatprep.subr.bf16.mxu0 0
        %1352 = vmatpush1.bf16.msra.mxu0 0
        %1353 = vmatprep.subr.bf16.mxu0 0
        %1354 = vmatpush1.bf16.msra.mxu0 0
        %1355 = vmatprep.subr.bf16.mxu0 0
        %1356 = vmatpush1.bf16.msra.mxu0 0
        %1357 = vmatprep.mubr.bf16.mxu0 0
        %1358 = vmatmul.mubr.bf16.gmra.mrb[0].mxu0 %v659
        %v1359 = vpop.f32.mrb[0].mxu0
        %v1360 = vadd.f32 %v490, %v1359
        %v1361 = vpop.f32.mrb[0].mxu0
        %v1362 = vadd.f32 %v494, %v1361
        %v1363 = vpop.f32.mrb[0].mxu0
        %v1364 = vadd.f32 %v490, %v1363
        %v1365 = vpop.f32.mrb[0].mxu0
        %v1366 = vadd.f32 %v494, %v1365
        %1367 = vmatprep.mubr.bf16.mxu0 0
        %1368 = vmatmul.mubr.bf16.gmra.mrb[0].mxu0 %v662
        %v1369 = vpop.f32.mrb[0].mxu0
        %v1370 = vadd.f32 %v490, %v1369
        %v1371 = vpop.f32.mrb[0].mxu0
        %v1372 = vadd.f32 %v494, %v1371
        %v1373 = vpop.f32.mrb[0].mxu0
        %v1374 = vadd.f32 %v490, %v1373
        %v1375 = vpop.f32.mrb[0].mxu0
        %v1376 = vadd.f32 %v494, %v1375
        %1377 = vmatprep.mubr.bf16.mxu0 0
        %1378 = vmatmul.mubr.bf16.gmra.mrb[0].mxu0 %v665
        %v1379 = vpop.f32.mrb[0].mxu0
        %v1380 = vadd.f32 %v490, %v1379
        %v1381 = vpop.f32.mrb[0].mxu0
        %v1382 = vadd.f32 %v494, %v1381
        %v1383 = vpop.f32.mrb[0].mxu0
        %v1384 = vadd.f32 %v490, %v1383
        %v1385 = vpop.f32.mrb[0].mxu0
        %v1386 = vadd.f32 %v494, %v1385
        %1387 = vmatprep.mubr.bf16.mxu0 0
        %1388 = vmatmul.mubr.bf16.gmra.mrb[0].mxu0 %v668
        %v1389 = vpop.f32.mrb[0].mxu0
        %v1390 = vadd.f32 %v490, %v1389
        %v1391 = vpop.f32.mrb[0].mxu0
        %v1392 = vadd.f32 %v494, %v1391
        %v1393 = vpop.f32.mrb[0].mxu0
        %v1394 = vadd.f32 %v490, %v1393
        %v1395 = vpop.f32.mrb[0].mxu0
        %v1396 = vadd.f32 %v494, %v1395
        %1397 = vmatprep.mubr.bf16.mxu0 0
        %1398 = vmatmul.mubr.bf16.gmra.mrb[0].mxu0 %v671
        %v1399 = vpop.f32.mrb[0].mxu0
        %v1400 = vadd.f32 %v490, %v1399
        %v1401 = vpop.f32.mrb[0].mxu0
        %v1402 = vadd.f32 %v494, %v1401
        %v1403 = vpop.f32.mrb[0].mxu0
        %v1404 = vadd.f32 %v490, %v1403
        %v1405 = vpop.f32.mrb[0].mxu0
        %v1406 = vadd.f32 %v494, %v1405
        %1407 = vmatprep.mubr.bf16.mxu0 0
        %1408 = vmatmul.mubr.bf16.gmra.mrb[0].mxu0 %v674
        %v1409 = vpop.f32.mrb[0].mxu0
        %v1410 = vadd.f32 %v490, %v1409
        %v1411 = vpop.f32.mrb[0].mxu0
        %v1412 = vadd.f32 %v494, %v1411
        %v1413 = vpop.f32.mrb[0].mxu0
        %v1414 = vadd.f32 %v490, %v1413
        %v1415 = vpop.f32.mrb[0].mxu0
        %v1416 = vadd.f32 %v494, %v1415
        %1417 = vmatprep.mubr.bf16.mxu0 0
        %1418 = vmatmul.mubr.bf16.gmra.mrb[0].mxu0 %v677
        %v1419 = vpop.f32.mrb[0].mxu0
        %v1420 = vadd.f32 %v490, %v1419
        %v1421 = vpop.f32.mrb[0].mxu0
        %v1422 = vadd.f32 %v494, %v1421
        %v1423 = vpop.f32.mrb[0].mxu0
        %v1424 = vadd.f32 %v490, %v1423
        %v1425 = vpop.f32.mrb[0].mxu0
        %v1426 = vadd.f32 %v494, %v1425
        %1427 = vmatprep.mubr.bf16.mxu0 0
        %1428 = vmatmul.mubr.bf16.gmra.mrb[0].mxu0 %v680
        %v1429 = vpop.f32.mrb[0].mxu0
        %v1430 = vadd.f32 %v490, %v1429
        %v1431 = vpop.f32.mrb[0].mxu0
        %v1432 = vadd.f32 %v494, %v1431
        %v1433 = vpop.f32.mrb[0].mxu0
        %v1434 = vadd.f32 %v490, %v1433
        %v1435 = vpop.f32.mrb[0].mxu0
        %v1436 = vadd.f32 %v494, %v1435
        %1437 = vmatprep.mubr.bf16.mxu0 0
        %1438 = vmatmul.mubr.bf16.gmra.mrb[0].mxu0 %v683
        %v1439 = vpop.f32.mrb[0].mxu0
        %v1440 = vadd.f32 %v490, %v1439
        %v1441 = vpop.f32.mrb[0].mxu0
        %v1442 = vadd.f32 %v494, %v1441
        %v1443 = vpop.f32.mrb[0].mxu0
        %v1444 = vadd.f32 %v490, %v1443
        %v1445 = vpop.f32.mrb[0].mxu0
        %v1446 = vadd.f32 %v494, %v1445
        %1447 = vmatprep.mubr.bf16.mxu0 0
        %1448 = vmatmul.mubr.bf16.gmra.mrb[0].mxu0 %v686
        %v1449 = vpop.f32.mrb[0].mxu0
        %v1450 = vadd.f32 %v490, %v1449
        %v1451 = vpop.f32.mrb[0].mxu0
        %v1452 = vadd.f32 %v494, %v1451
        %v1453 = vpop.f32.mrb[0].mxu0
        %v1454 = vadd.f32 %v490, %v1453
        %v1455 = vpop.f32.mrb[0].mxu0
        %v1456 = vadd.f32 %v494, %v1455
        %1457 = vmatprep.mubr.bf16.mxu0 0
        %1458 = vmatmul.mubr.bf16.gmra.mrb[0].mxu0 %v689
        %v1459 = vpop.f32.mrb[0].mxu0
        %v1460 = vadd.f32 %v490, %v1459
        %v1461 = vpop.f32.mrb[0].mxu0
        %v1462 = vadd.f32 %v494, %v1461
        %v1463 = vpop.f32.mrb[0].mxu0
        %v1464 = vadd.f32 %v490, %v1463
        %v1465 = vpop.f32.mrb[0].mxu0
        %v1466 = vadd.f32 %v494, %v1465
        %1467 = vmatprep.mubr.bf16.mxu0 0
        %1468 = vmatmul.mubr.bf16.gmra.mrb[0].mxu0 %v692
        %v1469 = vpop.f32.mrb[0].mxu0
        %v1470 = vadd.f32 %v490, %v1469
        %v1471 = vpop.f32.mrb[0].mxu0
        %v1472 = vadd.f32 %v494, %v1471
        %v1473 = vpop.f32.mrb[0].mxu0
        %v1474 = vadd.f32 %v490, %v1473
        %v1475 = vpop.f32.mrb[0].mxu0
        %v1476 = vadd.f32 %v494, %v1475
        %1477 = vmatprep.mubr.bf16.mxu0 0
        %1478 = vmatmul.mubr.bf16.gmra.mrb[0].mxu0 %v695
        %v1479 = vpop.f32.mrb[0].mxu0
        %v1480 = vadd.f32 %v490, %v1479
        %v1481 = vpop.f32.mrb[0].mxu0
        %v1482 = vadd.f32 %v494, %v1481
        %v1483 = vpop.f32.mrb[0].mxu0
        %v1484 = vadd.f32 %v490, %v1483
        %v1485 = vpop.f32.mrb[0].mxu0
        %v1486 = vadd.f32 %v494, %v1485
        %1487 = vmatprep.mubr.bf16.mxu0 0
        %1488 = vmatmul.mubr.bf16.gmra.mrb[0].mxu0 %v698
        %v1489 = vpop.f32.mrb[0].mxu0
        %v1490 = vadd.f32 %v490, %v1489
        %v1491 = vpop.f32.mrb[0].mxu0
        %v1492 = vadd.f32 %v494, %v1491
        %v1493 = vpop.f32.mrb[0].mxu0
        %v1494 = vadd.f32 %v490, %v1493
        %v1495 = vpop.f32.mrb[0].mxu0
        %v1496 = vadd.f32 %v494, %v1495
        %1497 = vmatprep.mubr.bf16.mxu0 0
        %1498 = vmatmul.mubr.bf16.gmra.mrb[0].mxu0 %v701
        %v1499 = vpop.f32.mrb[0].mxu0
        %v1500 = vadd.f32 %v490, %v1499
        %v1501 = vpop.f32.mrb[0].mxu0
        %v1502 = vadd.f32 %v494, %v1501
        %v1503 = vpop.f32.mrb[0].mxu0
        %v1504 = vadd.f32 %v490, %v1503
        %v1505 = vpop.f32.mrb[0].mxu0
        %v1506 = vadd.f32 %v494, %v1505
        %1507 = vmatprep.mubr.bf16.mxu0 0
        %1508 = vmatmul.mubr.bf16.gmra.mrb[0].mxu0 %v704
        %v1509 = vpop.f32.mrb[0].mxu0
        %v1510 = vadd.f32 %v490, %v1509
        %v1511 = vpop.f32.mrb[0].mxu0
        %v1512 = vadd.f32 %v494, %v1511
        %v1513 = vpop.f32.mrb[0].mxu0
        %v1514 = vadd.f32 %v490, %v1513
        %v1515 = vpop.f32.mrb[0].mxu0
        %v1516 = vadd.f32 %v494, %v1515
        %1517 = vdwg.mxu0
        %1518 = vmatprep.subr.bf16.mxu0 %v738
        %1519 = vmatpush1.bf16.msra.mxu0 %v735
        %1520 = vmatprep.subr.bf16.mxu0 0
        %1521 = vmatpush1.bf16.msra.mxu0 0
        %1522 = vmatprep.subr.bf16.mxu0 0
        %1523 = vmatpush1.bf16.msra.mxu0 0
        %1524 = vmatprep.subr.bf16.mxu0 0
        %1525 = vmatpush1.bf16.msra.mxu0 0
        %1526 = vmatprep.subr.bf16.mxu0 0
        %1527 = vmatpush1.bf16.msra.mxu0 0
        %1528 = vmatprep.subr.bf16.mxu0 0
        %1529 = vmatpush1.bf16.msra.mxu0 0
        %1530 = vmatprep.subr.bf16.mxu0 0
        %1531 = vmatpush1.bf16.msra.mxu0 0
        %1532 = vmatprep.subr.bf16.mxu0 0
        %1533 = vmatpush1.bf16.msra.mxu0 0
        %1534 = vmatprep.subr.bf16.mxu0 0
        %1535 = vmatpush1.bf16.msra.mxu0 0
        %1536 = vmatprep.subr.bf16.mxu0 0
        %1537 = vmatpush1.bf16.msra.mxu0 0
        %1538 = vmatprep.subr.bf16.mxu0 0
        %1539 = vmatpush1.bf16.msra.mxu0 0
        %1540 = vmatprep.subr.bf16.mxu0 0
        %1541 = vmatpush1.bf16.msra.mxu0 0
        %1542 = vmatprep.subr.bf16.mxu0 0
        %1543 = vmatpush1.bf16.msra.mxu0 0
        %1544 = vmatprep.subr.bf16.mxu0 0
        %1545 = vmatpush1.bf16.msra.mxu0 0
        %1546 = vmatprep.subr.bf16.mxu0 0
        %1547 = vmatpush1.bf16.msra.mxu0 0
        %1548 = vmatprep.subr.bf16.mxu0 0
        %1549 = vmatpush1.bf16.msra.mxu0 0
        %1550 = vmatprep.mubr.bf16.mxu0 0
        %1551 = vmatmul.mubr.bf16.gmra.mrb[0].mxu0 %v659
        %v1552 = vpop.f32.mrb[0].mxu0
        %v1553 = vadd.f32 %v498, %v1552
        %v1554 = vpop.f32.mrb[0].mxu0
        %v1555 = vadd.f32 %v502, %v1554
        %v1556 = vpop.f32.mrb[0].mxu0
        %v1557 = vadd.f32 %v498, %v1556
        %v1558 = vpop.f32.mrb[0].mxu0
        %v1559 = vadd.f32 %v502, %v1558
        %1560 = vmatprep.mubr.bf16.mxu0 0
        %1561 = vmatmul.mubr.bf16.gmra.mrb[0].mxu0 %v662
        %v1562 = vpop.f32.mrb[0].mxu0
        %v1563 = vadd.f32 %v498, %v1562
        %v1564 = vpop.f32.mrb[0].mxu0
        %v1565 = vadd.f32 %v502, %v1564
        %v1566 = vpop.f32.mrb[0].mxu0
        %v1567 = vadd.f32 %v498, %v1566
        %v1568 = vpop.f32.mrb[0].mxu0
        %v1569 = vadd.f32 %v502, %v1568
        %1570 = vmatprep.mubr.bf16.mxu0 0
        %1571 = vmatmul.mubr.bf16.gmra.mrb[0].mxu0 %v665
        %v1572 = vpop.f32.mrb[0].mxu0
        %v1573 = vadd.f32 %v498, %v1572
        %v1574 = vpop.f32.mrb[0].mxu0
        %v1575 = vadd.f32 %v502, %v1574
        %v1576 = vpop.f32.mrb[0].mxu0
        %v1577 = vadd.f32 %v498, %v1576
        %v1578 = vpop.f32.mrb[0].mxu0
        %v1579 = vadd.f32 %v502, %v1578
        %1580 = vmatprep.mubr.bf16.mxu0 0
        %1581 = vmatmul.mubr.bf16.gmra.mrb[0].mxu0 %v668
        %v1582 = vpop.f32.mrb[0].mxu0
        %v1583 = vadd.f32 %v498, %v1582
        %v1584 = vpop.f32.mrb[0].mxu0
        %v1585 = vadd.f32 %v502, %v1584
        %v1586 = vpop.f32.mrb[0].mxu0
        %v1587 = vadd.f32 %v498, %v1586
        %v1588 = vpop.f32.mrb[0].mxu0
        %v1589 = vadd.f32 %v502, %v1588
        %1590 = vmatprep.mubr.bf16.mxu0 0
        %1591 = vmatmul.mubr.bf16.gmra.mrb[0].mxu0 %v671
        %v1592 = vpop.f32.mrb[0].mxu0
        %v1593 = vadd.f32 %v498, %v1592
        %v1594 = vpop.f32.mrb[0].mxu0
        %v1595 = vadd.f32 %v502, %v1594
        %v1596 = vpop.f32.mrb[0].mxu0
        %v1597 = vadd.f32 %v498, %v1596
        %v1598 = vpop.f32.mrb[0].mxu0
        %v1599 = vadd.f32 %v502, %v1598
        %1600 = vmatprep.mubr.bf16.mxu0 0
        %1601 = vmatmul.mubr.bf16.gmra.mrb[0].mxu0 %v674
        %v1602 = vpop.f32.mrb[0].mxu0
        %v1603 = vadd.f32 %v498, %v1602
        %v1604 = vpop.f32.mrb[0].mxu0
        %v1605 = vadd.f32 %v502, %v1604
        %v1606 = vpop.f32.mrb[0].mxu0
        %v1607 = vadd.f32 %v498, %v1606
        %v1608 = vpop.f32.mrb[0].mxu0
        %v1609 = vadd.f32 %v502, %v1608
        %1610 = vmatprep.mubr.bf16.mxu0 0
        %1611 = vmatmul.mubr.bf16.gmra.mrb[0].mxu0 %v677
        %v1612 = vpop.f32.mrb[0].mxu0
        %v1613 = vadd.f32 %v498, %v1612
        %v1614 = vpop.f32.mrb[0].mxu0
        %v1615 = vadd.f32 %v502, %v1614
        %v1616 = vpop.f32.mrb[0].mxu0
        %v1617 = vadd.f32 %v498, %v1616
        %v1618 = vpop.f32.mrb[0].mxu0
        %v1619 = vadd.f32 %v502, %v1618
        %1620 = vmatprep.mubr.bf16.mxu0 0
        %1621 = vmatmul.mubr.bf16.gmra.mrb[0].mxu0 %v680
        %v1622 = vpop.f32.mrb[0].mxu0
        %v1623 = vadd.f32 %v498, %v1622
        %v1624 = vpop.f32.mrb[0].mxu0
        %v1625 = vadd.f32 %v502, %v1624
        %v1626 = vpop.f32.mrb[0].mxu0
        %v1627 = vadd.f32 %v498, %v1626
        %v1628 = vpop.f32.mrb[0].mxu0
        %v1629 = vadd.f32 %v502, %v1628
        %1630 = vmatprep.mubr.bf16.mxu0 0
        %1631 = vmatmul.mubr.bf16.gmra.mrb[0].mxu0 %v683
        %v1632 = vpop.f32.mrb[0].mxu0
        %v1633 = vadd.f32 %v498, %v1632
        %v1634 = vpop.f32.mrb[0].mxu0
        %v1635 = vadd.f32 %v502, %v1634
        %v1636 = vpop.f32.mrb[0].mxu0
        %v1637 = vadd.f32 %v498, %v1636
        %v1638 = vpop.f32.mrb[0].mxu0
        %v1639 = vadd.f32 %v502, %v1638
        %1640 = vmatprep.mubr.bf16.mxu0 0
        %1641 = vmatmul.mubr.bf16.gmra.mrb[0].mxu0 %v686
        %v1642 = vpop.f32.mrb[0].mxu0
        %v1643 = vadd.f32 %v498, %v1642
        %v1644 = vpop.f32.mrb[0].mxu0
        %v1645 = vadd.f32 %v502, %v1644
        %v1646 = vpop.f32.mrb[0].mxu0
        %v1647 = vadd.f32 %v498, %v1646
        %v1648 = vpop.f32.mrb[0].mxu0
        %v1649 = vadd.f32 %v502, %v1648
        %1650 = vmatprep.mubr.bf16.mxu0 0
        %1651 = vmatmul.mubr.bf16.gmra.mrb[0].mxu0 %v689
        %v1652 = vpop.f32.mrb[0].mxu0
        %v1653 = vadd.f32 %v498, %v1652
        %v1654 = vpop.f32.mrb[0].mxu0
        %v1655 = vadd.f32 %v502, %v1654
        %v1656 = vpop.f32.mrb[0].mxu0
        %v1657 = vadd.f32 %v498, %v1656
        %v1658 = vpop.f32.mrb[0].mxu0
        %v1659 = vadd.f32 %v502, %v1658
        %1660 = vmatprep.mubr.bf16.mxu0 0
        %1661 = vmatmul.mubr.bf16.gmra.mrb[0].mxu0 %v692
        %v1662 = vpop.f32.mrb[0].mxu0
        %v1663 = vadd.f32 %v498, %v1662
        %v1664 = vpop.f32.mrb[0].mxu0
        %v1665 = vadd.f32 %v502, %v1664
        %v1666 = vpop.f32.mrb[0].mxu0
        %v1667 = vadd.f32 %v498, %v1666
        %v1668 = vpop.f32.mrb[0].mxu0
        %v1669 = vadd.f32 %v502, %v1668
        %1670 = vmatprep.mubr.bf16.mxu0 0
        %1671 = vmatmul.mubr.bf16.gmra.mrb[0].mxu0 %v695
        %v1672 = vpop.f32.mrb[0].mxu0
        %v1673 = vadd.f32 %v498, %v1672
        %v1674 = vpop.f32.mrb[0].mxu0
        %v1675 = vadd.f32 %v502, %v1674
        %v1676 = vpop.f32.mrb[0].mxu0
        %v1677 = vadd.f32 %v498, %v1676
        %v1678 = vpop.f32.mrb[0].mxu0
        %v1679 = vadd.f32 %v502, %v1678
        %1680 = vmatprep.mubr.bf16.mxu0 0
        %1681 = vmatmul.mubr.bf16.gmra.mrb[0].mxu0 %v698
        %v1682 = vpop.f32.mrb[0].mxu0
        %v1683 = vadd.f32 %v498, %v1682
        %v1684 = vpop.f32.mrb[0].mxu0
        %v1685 = vadd.f32 %v502, %v1684
        %v1686 = vpop.f32.mrb[0].mxu0
        %v1687 = vadd.f32 %v498, %v1686
        %v1688 = vpop.f32.mrb[0].mxu0
        %v1689 = vadd.f32 %v502, %v1688
        %1690 = vmatprep.mubr.bf16.mxu0 0
        %1691 = vmatmul.mubr.bf16.gmra.mrb[0].mxu0 %v701
        %v1692 = vpop.f32.mrb[0].mxu0
        %v1693 = vadd.f32 %v498, %v1692
        %v1694 = vpop.f32.mrb[0].mxu0
        %v1695 = vadd.f32 %v502, %v1694
        %v1696 = vpop.f32.mrb[0].mxu0
        %v1697 = vadd.f32 %v498, %v1696
        %v1698 = vpop.f32.mrb[0].mxu0
        %v1699 = vadd.f32 %v502, %v1698
        %1700 = vmatprep.mubr.bf16.mxu0 0
        %1701 = vmatmul.mubr.bf16.gmra.mrb[0].mxu0 %v704
        %v1702 = vpop.f32.mrb[0].mxu0
        %v1703 = vadd.f32 %v498, %v1702
        %v1704 = vpop.f32.mrb[0].mxu0
        %v1705 = vadd.f32 %v502, %v1704
        %v1706 = vpop.f32.mrb[0].mxu0
        %v1707 = vadd.f32 %v498, %v1706
        %v1708 = vpop.f32.mrb[0].mxu0
        %v1709 = vadd.f32 %v502, %v1708
        %1710 = vdwg.mxu0
        %1711 = vmatprep.subr.bf16.mxu0 %v744
        %1712 = vmatpush1.bf16.msra.mxu0 %v741
        %1713 = vmatprep.subr.bf16.mxu0 0
        %1714 = vmatpush1.bf16.msra.mxu0 0
        %1715 = vmatprep.subr.bf16.mxu0 0
        %1716 = vmatpush1.bf16.msra.mxu0 0
        %1717 = vmatprep.subr.bf16.mxu0 0
        %1718 = vmatpush1.bf16.msra.mxu0 0
        %1719 = vmatprep.subr.bf16.mxu0 0
        %1720 = vmatpush1.bf16.msra.mxu0 0
        %1721 = vmatprep.subr.bf16.mxu0 0
        %1722 = vmatpush1.bf16.msra.mxu0 0
        %1723 = vmatprep.subr.bf16.mxu0 0
        %1724 = vmatpush1.bf16.msra.mxu0 0
        %1725 = vmatprep.subr.bf16.mxu0 0
        %1726 = vmatpush1.bf16.msra.mxu0 0
        %1727 = vmatprep.subr.bf16.mxu0 0
        %1728 = vmatpush1.bf16.msra.mxu0 0
        %1729 = vmatprep.subr.bf16.mxu0 0
        %1730 = vmatpush1.bf16.msra.mxu0 0
        %1731 = vmatprep.subr.bf16.mxu0 0
        %1732 = vmatpush1.bf16.msra.mxu0 0
        %1733 = vmatprep.subr.bf16.mxu0 0
        %1734 = vmatpush1.bf16.msra.mxu0 0
        %1735 = vmatprep.subr.bf16.mxu0 0
        %1736 = vmatpush1.bf16.msra.mxu0 0
        %1737 = vmatprep.subr.bf16.mxu0 0
        %1738 = vmatpush1.bf16.msra.mxu0 0
        %1739 = vmatprep.subr.bf16.mxu0 0
        %1740 = vmatpush1.bf16.msra.mxu0 0
        %1741 = vmatprep.subr.bf16.mxu0 0
        %1742 = vmatpush1.bf16.msra.mxu0 0
        %1743 = vmatprep.mubr.bf16.mxu0 0
        %1744 = vmatmul.mubr.bf16.gmra.mrb[0].mxu0 %v659
        %v1745 = vpop.f32.mrb[0].mxu0
        %v1746 = vadd.f32 %v506, %v1745
        %v1747 = vpop.f32.mrb[0].mxu0
        %v1748 = vadd.f32 %v510, %v1747
        %v1749 = vpop.f32.mrb[0].mxu0
        %v1750 = vadd.f32 %v506, %v1749
        %v1751 = vpop.f32.mrb[0].mxu0
        %v1752 = vadd.f32 %v510, %v1751
        %1753 = vmatprep.mubr.bf16.mxu0 0
        %1754 = vmatmul.mubr.bf16.gmra.mrb[0].mxu0 %v662
        %v1755 = vpop.f32.mrb[0].mxu0
        %v1756 = vadd.f32 %v506, %v1755
        %v1757 = vpop.f32.mrb[0].mxu0
        %v1758 = vadd.f32 %v510, %v1757
        %v1759 = vpop.f32.mrb[0].mxu0
        %v1760 = vadd.f32 %v506, %v1759
        %v1761 = vpop.f32.mrb[0].mxu0
        %v1762 = vadd.f32 %v510, %v1761
        %1763 = vmatprep.mubr.bf16.mxu0 0
        %1764 = vmatmul.mubr.bf16.gmra.mrb[0].mxu0 %v665
        %v1765 = vpop.f32.mrb[0].mxu0
        %v1766 = vadd.f32 %v506, %v1765
        %v1767 = vpop.f32.mrb[0].mxu0
        %v1768 = vadd.f32 %v510, %v1767
        %v1769 = vpop.f32.mrb[0].mxu0
        %v1770 = vadd.f32 %v506, %v1769
        %v1771 = vpop.f32.mrb[0].mxu0
        %v1772 = vadd.f32 %v510, %v1771
        %1773 = vmatprep.mubr.bf16.mxu0 0
        %1774 = vmatmul.mubr.bf16.gmra.mrb[0].mxu0 %v668
        %v1775 = vpop.f32.mrb[0].mxu0
        %v1776 = vadd.f32 %v506, %v1775
        %v1777 = vpop.f32.mrb[0].mxu0
        %v1778 = vadd.f32 %v510, %v1777
        %v1779 = vpop.f32.mrb[0].mxu0
        %v1780 = vadd.f32 %v506, %v1779
        %v1781 = vpop.f32.mrb[0].mxu0
        %v1782 = vadd.f32 %v510, %v1781
        %1783 = vmatprep.mubr.bf16.mxu0 0
        %1784 = vmatmul.mubr.bf16.gmra.mrb[0].mxu0 %v671
        %v1785 = vpop.f32.mrb[0].mxu0
        %v1786 = vadd.f32 %v506, %v1785
        %v1787 = vpop.f32.mrb[0].mxu0
        %v1788 = vadd.f32 %v510, %v1787
        %v1789 = vpop.f32.mrb[0].mxu0
        %v1790 = vadd.f32 %v506, %v1789
        %v1791 = vpop.f32.mrb[0].mxu0
        %v1792 = vadd.f32 %v510, %v1791
        %1793 = vmatprep.mubr.bf16.mxu0 0
        %1794 = vmatmul.mubr.bf16.gmra.mrb[0].mxu0 %v674
        %v1795 = vpop.f32.mrb[0].mxu0
        %v1796 = vadd.f32 %v506, %v1795
        %v1797 = vpop.f32.mrb[0].mxu0
        %v1798 = vadd.f32 %v510, %v1797
        %v1799 = vpop.f32.mrb[0].mxu0
        %v1800 = vadd.f32 %v506, %v1799
        %v1801 = vpop.f32.mrb[0].mxu0
        %v1802 = vadd.f32 %v510, %v1801
        %1803 = vmatprep.mubr.bf16.mxu0 0
        %1804 = vmatmul.mubr.bf16.gmra.mrb[0].mxu0 %v677
        %v1805 = vpop.f32.mrb[0].mxu0
        %v1806 = vadd.f32 %v506, %v1805
        %v1807 = vpop.f32.mrb[0].mxu0
        %v1808 = vadd.f32 %v510, %v1807
        %v1809 = vpop.f32.mrb[0].mxu0
        %v1810 = vadd.f32 %v506, %v1809
        %v1811 = vpop.f32.mrb[0].mxu0
        %v1812 = vadd.f32 %v510, %v1811
        %1813 = vmatprep.mubr.bf16.mxu0 0
        %1814 = vmatmul.mubr.bf16.gmra.mrb[0].mxu0 %v680
        %v1815 = vpop.f32.mrb[0].mxu0
        %v1816 = vadd.f32 %v506, %v1815
        %v1817 = vpop.f32.mrb[0].mxu0
        %v1818 = vadd.f32 %v510, %v1817
        %v1819 = vpop.f32.mrb[0].mxu0
        %v1820 = vadd.f32 %v506, %v1819
        %v1821 = vpop.f32.mrb[0].mxu0
        %v1822 = vadd.f32 %v510, %v1821
        %1823 = vmatprep.mubr.bf16.mxu0 0
        %1824 = vmatmul.mubr.bf16.gmra.mrb[0].mxu0 %v683
        %v1825 = vpop.f32.mrb[0].mxu0
        %v1826 = vadd.f32 %v506, %v1825
        %v1827 = vpop.f32.mrb[0].mxu0
        %v1828 = vadd.f32 %v510, %v1827
        %v1829 = vpop.f32.mrb[0].mxu0
        %v1830 = vadd.f32 %v506, %v1829
        %v1831 = vpop.f32.mrb[0].mxu0
        %v1832 = vadd.f32 %v510, %v1831
        %1833 = vmatprep.mubr.bf16.mxu0 0
        %1834 = vmatmul.mubr.bf16.gmra.mrb[0].mxu0 %v686
        %v1835 = vpop.f32.mrb[0].mxu0
        %v1836 = vadd.f32 %v506, %v1835
        %v1837 = vpop.f32.mrb[0].mxu0
        %v1838 = vadd.f32 %v510, %v1837
        %v1839 = vpop.f32.mrb[0].mxu0
        %v1840 = vadd.f32 %v506, %v1839
        %v1841 = vpop.f32.mrb[0].mxu0
        %v1842 = vadd.f32 %v510, %v1841
        %1843 = vmatprep.mubr.bf16.mxu0 0
        %1844 = vmatmul.mubr.bf16.gmra.mrb[0].mxu0 %v689
        %v1845 = vpop.f32.mrb[0].mxu0
        %v1846 = vadd.f32 %v506, %v1845
        %v1847 = vpop.f32.mrb[0].mxu0
        %v1848 = vadd.f32 %v510, %v1847
        %v1849 = vpop.f32.mrb[0].mxu0
        %v1850 = vadd.f32 %v506, %v1849
        %v1851 = vpop.f32.mrb[0].mxu0
        %v1852 = vadd.f32 %v510, %v1851
        %1853 = vmatprep.mubr.bf16.mxu0 0
        %1854 = vmatmul.mubr.bf16.gmra.mrb[0].mxu0 %v692
        %v1855 = vpop.f32.mrb[0].mxu0
        %v1856 = vadd.f32 %v506, %v1855
        %v1857 = vpop.f32.mrb[0].mxu0
        %v1858 = vadd.f32 %v510, %v1857
        %v1859 = vpop.f32.mrb[0].mxu0
        %v1860 = vadd.f32 %v506, %v1859
        %v1861 = vpop.f32.mrb[0].mxu0
        %v1862 = vadd.f32 %v510, %v1861
        %1863 = vmatprep.mubr.bf16.mxu0 0
        %1864 = vmatmul.mubr.bf16.gmra.mrb[0].mxu0 %v695
        %v1865 = vpop.f32.mrb[0].mxu0
        %v1866 = vadd.f32 %v506, %v1865
        %v1867 = vpop.f32.mrb[0].mxu0
        %v1868 = vadd.f32 %v510, %v1867
        %v1869 = vpop.f32.mrb[0].mxu0
        %v1870 = vadd.f32 %v506, %v1869
        %v1871 = vpop.f32.mrb[0].mxu0
        %v1872 = vadd.f32 %v510, %v1871
        %1873 = vmatprep.mubr.bf16.mxu0 0
        %1874 = vmatmul.mubr.bf16.gmra.mrb[0].mxu0 %v698
        %v1875 = vpop.f32.mrb[0].mxu0
        %v1876 = vadd.f32 %v506, %v1875
        %v1877 = vpop.f32.mrb[0].mxu0
        %v1878 = vadd.f32 %v510, %v1877
        %v1879 = vpop.f32.mrb[0].mxu0
        %v1880 = vadd.f32 %v506, %v1879
        %v1881 = vpop.f32.mrb[0].mxu0
        %v1882 = vadd.f32 %v510, %v1881
        %1883 = vmatprep.mubr.bf16.mxu0 0
        %1884 = vmatmul.mubr.bf16.gmra.mrb[0].mxu0 %v701
        %v1885 = vpop.f32.mrb[0].mxu0
        %v1886 = vadd.f32 %v506, %v1885
        %v1887 = vpop.f32.mrb[0].mxu0
        %v1888 = vadd.f32 %v510, %v1887
        %v1889 = vpop.f32.mrb[0].mxu0
        %v1890 = vadd.f32 %v506, %v1889
        %v1891 = vpop.f32.mrb[0].mxu0
        %v1892 = vadd.f32 %v510, %v1891
        %1893 = vmatprep.mubr.bf16.mxu0 0
        %1894 = vmatmul.mubr.bf16.gmra.mrb[0].mxu0 %v704
        %v1895 = vpop.f32.mrb[0].mxu0
        %v1896 = vadd.f32 %v506, %v1895
        %v1897 = vpop.f32.mrb[0].mxu0
        %v1898 = vadd.f32 %v510, %v1897
        %v1899 = vpop.f32.mrb[0].mxu0
        %v1900 = vadd.f32 %v506, %v1899
        %v1901 = vpop.f32.mrb[0].mxu0
        %v1902 = vadd.f32 %v510, %v1901
        %1903 = vdwg.mxu0
        %v1904 = vxor.u32 %v781, 2147483648
        %v1905 = vxor.u32 %v783, 2147483648
        %v1906 = vxor.u32 %v974, 2147483648
        %v1907 = vxor.u32 %v976, 2147483648
        %v1908 = vxor.u32 %v1167, 2147483648
        %v1909 = vxor.u32 %v1169, 2147483648
        %v1910 = vxor.u32 %v1360, 2147483648
        %v1911 = vxor.u32 %v1362, 2147483648
        %v1912 = vxor.u32 %v1553, 2147483648
        %v1913 = vxor.u32 %v1555, 2147483648
        %v1914 = vxor.u32 %v1746, 2147483648
        %v1915 = vxor.u32 %v1748, 2147483648
        %v1916 = vxor.u32 %v785, 2147483648
        %v1917 = vxor.u32 %v787, 2147483648
        %v1918 = vxor.u32 %v978, 2147483648
        %v1919 = vxor.u32 %v980, 2147483648
        %v1920 = vxor.u32 %v1171, 2147483648
        %v1921 = vxor.u32 %v1173, 2147483648
        %v1922 = vxor.u32 %v1364, 2147483648
        %v1923 = vxor.u32 %v1366, 2147483648
        %v1924 = vxor.u32 %v1557, 2147483648
        %v1925 = vxor.u32 %v1559, 2147483648
        %v1926 = vxor.u32 %v1750, 2147483648
        %v1927 = vxor.u32 %v1752, 2147483648
        %v1928 = vxor.u32 %v791, 2147483648
        %v1929 = vxor.u32 %v793, 2147483648
        %v1930 = vxor.u32 %v984, 2147483648
        %v1931 = vxor.u32 %v986, 2147483648
        %v1932 = vxor.u32 %v1177, 2147483648
        %v1933 = vxor.u32 %v1179, 2147483648
        %v1934 = vxor.u32 %v1370, 2147483648
        %v1935 = vxor.u32 %v1372, 2147483648
        %v1936 = vxor.u32 %v1563, 2147483648
        %v1937 = vxor.u32 %v1565, 2147483648
        %v1938 = vxor.u32 %v1756, 2147483648
        %v1939 = vxor.u32 %v1758, 2147483648
        %v1940 = vxor.u32 %v795, 2147483648
        %v1941 = vxor.u32 %v797, 2147483648
        %v1942 = vxor.u32 %v988, 2147483648
        %v1943 = vxor.u32 %v990, 2147483648
        %v1944 = vxor.u32 %v1181, 2147483648
        %v1945 = vxor.u32 %v1183, 2147483648
        %v1946 = vxor.u32 %v1374, 2147483648
        %v1947 = vxor.u32 %v1376, 2147483648
        %v1948 = vxor.u32 %v1567, 2147483648
        %v1949 = vxor.u32 %v1569, 2147483648
        %v1950 = vxor.u32 %v1760, 2147483648
        %v1951 = vxor.u32 %v1762, 2147483648
        %v1952 = vxor.u32 %v801, 2147483648
        %v1953 = vxor.u32 %v803, 2147483648
        %v1954 = vxor.u32 %v994, 2147483648
        %v1955 = vxor.u32 %v996, 2147483648
        %v1956 = vxor.u32 %v1187, 2147483648
        %v1957 = vxor.u32 %v1189, 2147483648
        %v1958 = vxor.u32 %v1380, 2147483648
        %v1959 = vxor.u32 %v1382, 2147483648
        %v1960 = vxor.u32 %v1573, 2147483648
        %v1961 = vxor.u32 %v1575, 2147483648
        %v1962 = vxor.u32 %v1766, 2147483648
        %v1963 = vxor.u32 %v1768, 2147483648
        %v1964 = vxor.u32 %v805, 2147483648
        %v1965 = vxor.u32 %v807, 2147483648
        %v1966 = vxor.u32 %v998, 2147483648
        %v1967 = vxor.u32 %v1000, 2147483648
        %v1968 = vxor.u32 %v1191, 2147483648
        %v1969 = vxor.u32 %v1193, 2147483648
        %v1970 = vxor.u32 %v1384, 2147483648
        %v1971 = vxor.u32 %v1386, 2147483648
        %v1972 = vxor.u32 %v1577, 2147483648
        %v1973 = vxor.u32 %v1579, 2147483648
        %v1974 = vxor.u32 %v1770, 2147483648
        %v1975 = vxor.u32 %v1772, 2147483648
        %v1976 = vxor.u32 %v811, 2147483648
        %v1977 = vxor.u32 %v813, 2147483648
        %v1978 = vxor.u32 %v1004, 2147483648
        %v1979 = vxor.u32 %v1006, 2147483648
        %v1980 = vxor.u32 %v1197, 2147483648
        %v1981 = vxor.u32 %v1199, 2147483648
        %v1982 = vxor.u32 %v1390, 2147483648
        %v1983 = vxor.u32 %v1392, 2147483648
        %v1984 = vxor.u32 %v1583, 2147483648
        %v1985 = vxor.u32 %v1585, 2147483648
        %v1986 = vxor.u32 %v1776, 2147483648
        %v1987 = vxor.u32 %v1778, 2147483648
        %v1988 = vxor.u32 %v815, 2147483648
        %v1989 = vxor.u32 %v817, 2147483648
        %v1990 = vxor.u32 %v1008, 2147483648
        %v1991 = vxor.u32 %v1010, 2147483648
        %v1992 = vxor.u32 %v1201, 2147483648
        %v1993 = vxor.u32 %v1203, 2147483648
        %v1994 = vxor.u32 %v1394, 2147483648
        %v1995 = vxor.u32 %v1396, 2147483648
        %v1996 = vxor.u32 %v1587, 2147483648
        %v1997 = vxor.u32 %v1589, 2147483648
        %v1998 = vxor.u32 %v1780, 2147483648
        %v1999 = vxor.u32 %v1782, 2147483648
        %v2000 = vxor.u32 %v821, 2147483648
        %v2001 = vxor.u32 %v823, 2147483648
        %v2002 = vxor.u32 %v1014, 2147483648
        %v2003 = vxor.u32 %v1016, 2147483648
        %v2004 = vxor.u32 %v1207, 2147483648
        %v2005 = vxor.u32 %v1209, 2147483648
        %v2006 = vxor.u32 %v1400, 2147483648
        %v2007 = vxor.u32 %v1402, 2147483648
        %v2008 = vxor.u32 %v1593, 2147483648
        %v2009 = vxor.u32 %v1595, 2147483648
        %v2010 = vxor.u32 %v1786, 2147483648
        %v2011 = vxor.u32 %v1788, 2147483648
        %v2012 = vxor.u32 %v825, 2147483648
        %v2013 = vxor.u32 %v827, 2147483648
        %v2014 = vxor.u32 %v1018, 2147483648
        %v2015 = vxor.u32 %v1020, 2147483648
        %v2016 = vxor.u32 %v1211, 2147483648
        %v2017 = vxor.u32 %v1213, 2147483648
        %v2018 = vxor.u32 %v1404, 2147483648
        %v2019 = vxor.u32 %v1406, 2147483648
        %v2020 = vxor.u32 %v1597, 2147483648
        %v2021 = vxor.u32 %v1599, 2147483648
        %v2022 = vxor.u32 %v1790, 2147483648
        %v2023 = vxor.u32 %v1792, 2147483648
        %v2024 = vxor.u32 %v831, 2147483648
        %v2025 = vxor.u32 %v833, 2147483648
        %v2026 = vxor.u32 %v1024, 2147483648
        %v2027 = vxor.u32 %v1026, 2147483648
        %v2028 = vxor.u32 %v1217, 2147483648
        %v2029 = vxor.u32 %v1219, 2147483648
        %v2030 = vxor.u32 %v1410, 2147483648
        %v2031 = vxor.u32 %v1412, 2147483648
        %v2032 = vxor.u32 %v1603, 2147483648
        %v2033 = vxor.u32 %v1605, 2147483648
        %v2034 = vxor.u32 %v1796, 2147483648
        %v2035 = vxor.u32 %v1798, 2147483648
        %v2036 = vxor.u32 %v835, 2147483648
        %v2037 = vxor.u32 %v837, 2147483648
        %v2038 = vxor.u32 %v1028, 2147483648
        %v2039 = vxor.u32 %v1030, 2147483648
        %v2040 = vxor.u32 %v1221, 2147483648
        %v2041 = vxor.u32 %v1223, 2147483648
        %v2042 = vxor.u32 %v1414, 2147483648
        %v2043 = vxor.u32 %v1416, 2147483648
        %v2044 = vxor.u32 %v1607, 2147483648
        %v2045 = vxor.u32 %v1609, 2147483648
        %v2046 = vxor.u32 %v1800, 2147483648
        %v2047 = vxor.u32 %v1802, 2147483648
        %v2048 = vxor.u32 %v841, 2147483648
        %v2049 = vxor.u32 %v843, 2147483648
        %v2050 = vxor.u32 %v1034, 2147483648
        %v2051 = vxor.u32 %v1036, 2147483648
        %v2052 = vxor.u32 %v1227, 2147483648
        %v2053 = vxor.u32 %v1229, 2147483648
        %v2054 = vxor.u32 %v1420, 2147483648
        %v2055 = vxor.u32 %v1422, 2147483648
        %v2056 = vxor.u32 %v1613, 2147483648
        %v2057 = vxor.u32 %v1615, 2147483648
        %v2058 = vxor.u32 %v1806, 2147483648
        %v2059 = vxor.u32 %v1808, 2147483648
        %v2060 = vxor.u32 %v845, 2147483648
        %v2061 = vxor.u32 %v847, 2147483648
        %v2062 = vxor.u32 %v1038, 2147483648
        %v2063 = vxor.u32 %v1040, 2147483648
        %v2064 = vxor.u32 %v1231, 2147483648
        %v2065 = vxor.u32 %v1233, 2147483648
        %v2066 = vxor.u32 %v1424, 2147483648
        %v2067 = vxor.u32 %v1426, 2147483648
        %v2068 = vxor.u32 %v1617, 2147483648
        %v2069 = vxor.u32 %v1619, 2147483648
        %v2070 = vxor.u32 %v1810, 2147483648
        %v2071 = vxor.u32 %v1812, 2147483648
        %v2072 = vxor.u32 %v851, 2147483648
        %v2073 = vxor.u32 %v853, 2147483648
        %v2074 = vxor.u32 %v1044, 2147483648
        %v2075 = vxor.u32 %v1046, 2147483648
        %v2076 = vxor.u32 %v1237, 2147483648
        %v2077 = vxor.u32 %v1239, 2147483648
        %v2078 = vxor.u32 %v1430, 2147483648
        %v2079 = vxor.u32 %v1432, 2147483648
        %v2080 = vxor.u32 %v1623, 2147483648
        %v2081 = vxor.u32 %v1625, 2147483648
        %v2082 = vxor.u32 %v1816, 2147483648
        %v2083 = vxor.u32 %v1818, 2147483648
        %v2084 = vxor.u32 %v855, 2147483648
        %v2085 = vxor.u32 %v857, 2147483648
        %v2086 = vxor.u32 %v1048, 2147483648
        %v2087 = vxor.u32 %v1050, 2147483648
        %v2088 = vxor.u32 %v1241, 2147483648
        %v2089 = vxor.u32 %v1243, 2147483648
        %v2090 = vxor.u32 %v1434, 2147483648
        %v2091 = vxor.u32 %v1436, 2147483648
        %v2092 = vxor.u32 %v1627, 2147483648
        %v2093 = vxor.u32 %v1629, 2147483648
        %v2094 = vxor.u32 %v1820, 2147483648
        %v2095 = vxor.u32 %v1822, 2147483648
        %v2096 = vxor.u32 %v861, 2147483648
        %v2097 = vxor.u32 %v863, 2147483648
        %v2098 = vxor.u32 %v1054, 2147483648
        %v2099 = vxor.u32 %v1056, 2147483648
        %v2100 = vxor.u32 %v1247, 2147483648
        %v2101 = vxor.u32 %v1249, 2147483648
        %v2102 = vxor.u32 %v1440, 2147483648
        %v2103 = vxor.u32 %v1442, 2147483648
        %v2104 = vxor.u32 %v1633, 2147483648
        %v2105 = vxor.u32 %v1635, 2147483648
        %v2106 = vxor.u32 %v1826, 2147483648
        %v2107 = vxor.u32 %v1828, 2147483648
        %v2108 = vxor.u32 %v865, 2147483648
        %v2109 = vxor.u32 %v867, 2147483648
        %v2110 = vxor.u32 %v1058, 2147483648
        %v2111 = vxor.u32 %v1060, 2147483648
        %v2112 = vxor.u32 %v1251, 2147483648
        %v2113 = vxor.u32 %v1253, 2147483648
        %v2114 = vxor.u32 %v1444, 2147483648
        %v2115 = vxor.u32 %v1446, 2147483648
        %v2116 = vxor.u32 %v1637, 2147483648
        %v2117 = vxor.u32 %v1639, 2147483648
        %v2118 = vxor.u32 %v1830, 2147483648
        %v2119 = vxor.u32 %v1832, 2147483648
        %v2120 = vxor.u32 %v871, 2147483648
        %v2121 = vxor.u32 %v873, 2147483648
        %v2122 = vxor.u32 %v1064, 2147483648
        %v2123 = vxor.u32 %v1066, 2147483648
        %v2124 = vxor.u32 %v1257, 2147483648
        %v2125 = vxor.u32 %v1259, 2147483648
        %v2126 = vxor.u32 %v1450, 2147483648
        %v2127 = vxor.u32 %v1452, 2147483648
        %v2128 = vxor.u32 %v1643, 2147483648
        %v2129 = vxor.u32 %v1645, 2147483648
        %v2130 = vxor.u32 %v1836, 2147483648
        %v2131 = vxor.u32 %v1838, 2147483648
        %v2132 = vxor.u32 %v875, 2147483648
        %v2133 = vxor.u32 %v877, 2147483648
        %v2134 = vxor.u32 %v1068, 2147483648
        %v2135 = vxor.u32 %v1070, 2147483648
        %v2136 = vxor.u32 %v1261, 2147483648
        %v2137 = vxor.u32 %v1263, 2147483648
        %v2138 = vxor.u32 %v1454, 2147483648
        %v2139 = vxor.u32 %v1456, 2147483648
        %v2140 = vxor.u32 %v1647, 2147483648
        %v2141 = vxor.u32 %v1649, 2147483648
        %v2142 = vxor.u32 %v1840, 2147483648
        %v2143 = vxor.u32 %v1842, 2147483648
        %v2144 = vxor.u32 %v881, 2147483648
        %v2145 = vxor.u32 %v883, 2147483648
        %v2146 = vxor.u32 %v1074, 2147483648
        %v2147 = vxor.u32 %v1076, 2147483648
        %v2148 = vxor.u32 %v1267, 2147483648
        %v2149 = vxor.u32 %v1269, 2147483648
        %v2150 = vxor.u32 %v1460, 2147483648
        %v2151 = vxor.u32 %v1462, 2147483648
        %v2152 = vxor.u32 %v1653, 2147483648
        %v2153 = vxor.u32 %v1655, 2147483648
        %v2154 = vxor.u32 %v1846, 2147483648
        %v2155 = vxor.u32 %v1848, 2147483648
        %v2156 = vxor.u32 %v885, 2147483648
        %v2157 = vxor.u32 %v887, 2147483648
        %v2158 = vxor.u32 %v1078, 2147483648
        %v2159 = vxor.u32 %v1080, 2147483648
        %v2160 = vxor.u32 %v1271, 2147483648
        %v2161 = vxor.u32 %v1273, 2147483648
        %v2162 = vxor.u32 %v1464, 2147483648
        %v2163 = vxor.u32 %v1466, 2147483648
        %v2164 = vxor.u32 %v1657, 2147483648
        %v2165 = vxor.u32 %v1659, 2147483648
        %v2166 = vxor.u32 %v1850, 2147483648
        %v2167 = vxor.u32 %v1852, 2147483648
        %v2168 = vxor.u32 %v891, 2147483648
        %v2169 = vxor.u32 %v893, 2147483648
        %v2170 = vxor.u32 %v1084, 2147483648
        %v2171 = vxor.u32 %v1086, 2147483648
        %v2172 = vxor.u32 %v1277, 2147483648
        %v2173 = vxor.u32 %v1279, 2147483648
        %v2174 = vxor.u32 %v1470, 2147483648
        %v2175 = vxor.u32 %v1472, 2147483648
        %v2176 = vxor.u32 %v1663, 2147483648
        %v2177 = vxor.u32 %v1665, 2147483648
        %v2178 = vxor.u32 %v1856, 2147483648
        %v2179 = vxor.u32 %v1858, 2147483648
        %v2180 = vxor.u32 %v895, 2147483648
        %v2181 = vxor.u32 %v897, 2147483648
        %v2182 = vxor.u32 %v1088, 2147483648
        %v2183 = vxor.u32 %v1090, 2147483648
        %v2184 = vxor.u32 %v1281, 2147483648
        %v2185 = vxor.u32 %v1283, 2147483648
        %v2186 = vxor.u32 %v1474, 2147483648
        %v2187 = vxor.u32 %v1476, 2147483648
        %v2188 = vxor.u32 %v1667, 2147483648
        %v2189 = vxor.u32 %v1669, 2147483648
        %v2190 = vxor.u32 %v1860, 2147483648
        %v2191 = vxor.u32 %v1862, 2147483648
        %v2192 = vxor.u32 %v901, 2147483648
        %v2193 = vxor.u32 %v903, 2147483648
        %v2194 = vxor.u32 %v1094, 2147483648
        %v2195 = vxor.u32 %v1096, 2147483648
        %v2196 = vxor.u32 %v1287, 2147483648
        %v2197 = vxor.u32 %v1289, 2147483648
        %v2198 = vxor.u32 %v1480, 2147483648
        %v2199 = vxor.u32 %v1482, 2147483648
        %v2200 = vxor.u32 %v1673, 2147483648
        %v2201 = vxor.u32 %v1675, 2147483648
        %v2202 = vxor.u32 %v1866, 2147483648
        %v2203 = vxor.u32 %v1868, 2147483648
        %v2204 = vxor.u32 %v905, 2147483648
        %v2205 = vxor.u32 %v907, 2147483648
        %v2206 = vxor.u32 %v1098, 2147483648
        %v2207 = vxor.u32 %v1100, 2147483648
        %v2208 = vxor.u32 %v1291, 2147483648
        %v2209 = vxor.u32 %v1293, 2147483648
        %v2210 = vxor.u32 %v1484, 2147483648
        %v2211 = vxor.u32 %v1486, 2147483648
        %v2212 = vxor.u32 %v1677, 2147483648
        %v2213 = vxor.u32 %v1679, 2147483648
        %v2214 = vxor.u32 %v1870, 2147483648
        %v2215 = vxor.u32 %v1872, 2147483648
        %v2216 = vxor.u32 %v911, 2147483648
        %v2217 = vxor.u32 %v913, 2147483648
        %v2218 = vxor.u32 %v1104, 2147483648
        %v2219 = vxor.u32 %v1106, 2147483648
        %v2220 = vxor.u32 %v1297, 2147483648
        %v2221 = vxor.u32 %v1299, 2147483648
        %v2222 = vxor.u32 %v1490, 2147483648
        %v2223 = vxor.u32 %v1492, 2147483648
        %v2224 = vxor.u32 %v1683, 2147483648
        %v2225 = vxor.u32 %v1685, 2147483648
        %v2226 = vxor.u32 %v1876, 2147483648
        %v2227 = vxor.u32 %v1878, 2147483648
        %v2228 = vxor.u32 %v915, 2147483648
        %v2229 = vxor.u32 %v917, 2147483648
        %v2230 = vxor.u32 %v1108, 2147483648
        %v2231 = vxor.u32 %v1110, 2147483648
        %v2232 = vxor.u32 %v1301, 2147483648
        %v2233 = vxor.u32 %v1303, 2147483648
        %v2234 = vxor.u32 %v1494, 2147483648
        %v2235 = vxor.u32 %v1496, 2147483648
        %v2236 = vxor.u32 %v1687, 2147483648
        %v2237 = vxor.u32 %v1689, 2147483648
        %v2238 = vxor.u32 %v1880, 2147483648
        %v2239 = vxor.u32 %v1882, 2147483648
        %v2240 = vxor.u32 %v921, 2147483648
        %v2241 = vxor.u32 %v923, 2147483648
        %v2242 = vxor.u32 %v1114, 2147483648
        %v2243 = vxor.u32 %v1116, 2147483648
        %v2244 = vxor.u32 %v1307, 2147483648
        %v2245 = vxor.u32 %v1309, 2147483648
        %v2246 = vxor.u32 %v1500, 2147483648
        %v2247 = vxor.u32 %v1502, 2147483648
        %v2248 = vxor.u32 %v1693, 2147483648
        %v2249 = vxor.u32 %v1695, 2147483648
        %v2250 = vxor.u32 %v1886, 2147483648
        %v2251 = vxor.u32 %v1888, 2147483648
        %v2252 = vxor.u32 %v925, 2147483648
        %v2253 = vxor.u32 %v927, 2147483648
        %v2254 = vxor.u32 %v1118, 2147483648
        %v2255 = vxor.u32 %v1120, 2147483648
        %v2256 = vxor.u32 %v1311, 2147483648
        %v2257 = vxor.u32 %v1313, 2147483648
        %v2258 = vxor.u32 %v1504, 2147483648
        %v2259 = vxor.u32 %v1506, 2147483648
        %v2260 = vxor.u32 %v1697, 2147483648
        %v2261 = vxor.u32 %v1699, 2147483648
        %v2262 = vxor.u32 %v1890, 2147483648
        %v2263 = vxor.u32 %v1892, 2147483648
        %v2264 = vxor.u32 %v931, 2147483648
        %v2265 = vxor.u32 %v933, 2147483648
        %v2266 = vxor.u32 %v1124, 2147483648
        %v2267 = vxor.u32 %v1126, 2147483648
        %v2268 = vxor.u32 %v1317, 2147483648
        %v2269 = vxor.u32 %v1319, 2147483648
        %v2270 = vxor.u32 %v1510, 2147483648
        %v2271 = vxor.u32 %v1512, 2147483648
        %v2272 = vxor.u32 %v1703, 2147483648
        %v2273 = vxor.u32 %v1705, 2147483648
        %v2274 = vxor.u32 %v1896, 2147483648
        %v2275 = vxor.u32 %v1898, 2147483648
        %v2276 = vxor.u32 %v935, 2147483648
        %v2277 = vxor.u32 %v937, 2147483648
        %v2278 = vxor.u32 %v1128, 2147483648
        %v2279 = vxor.u32 %v1130, 2147483648
        %v2280 = vxor.u32 %v1321, 2147483648
        %v2281 = vxor.u32 %v1323, 2147483648
        %v2282 = vxor.u32 %v1514, 2147483648
        %v2283 = vxor.u32 %v1516, 2147483648
        %v2284 = vxor.u32 %v1707, 2147483648
        %v2285 = vxor.u32 %v1709, 2147483648
        %v2286 = vxor.u32 %v1900, 2147483648
        %v2287 = vxor.u32 %v1902, 2147483648
        %v2288 = vmul.f32 %v1904, 1.442695
        %v2289 = vpow.pop %v2288
        %v2290 = vmul.f32 %v1905, 1.442695
        %v2291 = vpow.pop %v2290
        %v2292 = vmul.f32 %v1906, 1.442695
        %v2293 = vpow.pop %v2292
        %v2294 = vmul.f32 %v1907, 1.442695
        %v2295 = vpow.pop %v2294
        %v2296 = vmul.f32 %v1908, 1.442695
        %v2297 = vpow.pop %v2296
        %v2298 = vmul.f32 %v1909, 1.442695
        %v2299 = vpow.pop %v2298
        %v2300 = vmul.f32 %v1910, 1.442695
        %v2301 = vpow.pop %v2300
        %v2302 = vmul.f32 %v1911, 1.442695
        %v2303 = vpow.pop %v2302
        %v2304 = vmul.f32 %v1912, 1.442695
        %v2305 = vpow.pop %v2304
        %v2306 = vmul.f32 %v1913, 1.442695
        %v2307 = vpow.pop %v2306
        %v2308 = vmul.f32 %v1914, 1.442695
        %v2309 = vpow.pop %v2308
        %v2310 = vmul.f32 %v1915, 1.442695
        %v2311 = vpow.pop %v2310
        %v2312 = vmul.f32 %v1916, 1.442695
        %v2313 = vpow.pop %v2312
        %v2314 = vmul.f32 %v1917, 1.442695
        %v2315 = vpow.pop %v2314
        %v2316 = vmul.f32 %v1918, 1.442695
        %v2317 = vpow.pop %v2316
        %v2318 = vmul.f32 %v1919, 1.442695
        %v2319 = vpow.pop %v2318
        %v2320 = vmul.f32 %v1920, 1.442695
        %v2321 = vpow.pop %v2320
        %v2322 = vmul.f32 %v1921, 1.442695
        %v2323 = vpow.pop %v2322
        %v2324 = vmul.f32 %v1922, 1.442695
        %v2325 = vpow.pop %v2324
        %v2326 = vmul.f32 %v1923, 1.442695
        %v2327 = vpow.pop %v2326
        %v2328 = vmul.f32 %v1924, 1.442695
        %v2329 = vpow.pop %v2328
        %v2330 = vmul.f32 %v1925, 1.442695
        %v2331 = vpow.pop %v2330
        %v2332 = vmul.f32 %v1926, 1.442695
        %v2333 = vpow.pop %v2332
        %v2334 = vmul.f32 %v1927, 1.442695
        %v2335 = vpow.pop %v2334
        %v2336 = vmul.f32 %v1928, 1.442695
        %v2337 = vpow.pop %v2336
        %v2338 = vmul.f32 %v1929, 1.442695
        %v2339 = vpow.pop %v2338
        %v2340 = vmul.f32 %v1930, 1.442695
        %v2341 = vpow.pop %v2340
        %v2342 = vmul.f32 %v1931, 1.442695
        %v2343 = vpow.pop %v2342
        %v2344 = vmul.f32 %v1932, 1.442695
        %v2345 = vpow.pop %v2344
        %v2346 = vmul.f32 %v1933, 1.442695
        %v2347 = vpow.pop %v2346
        %v2348 = vmul.f32 %v1934, 1.442695
        %v2349 = vpow.pop %v2348
        %v2350 = vmul.f32 %v1935, 1.442695
        %v2351 = vpow.pop %v2350
        %v2352 = vmul.f32 %v1936, 1.442695
        %v2353 = vpow.pop %v2352
        %v2354 = vmul.f32 %v1937, 1.442695
        %v2355 = vpow.pop %v2354
        %v2356 = vmul.f32 %v1938, 1.442695
        %v2357 = vpow.pop %v2356
        %v2358 = vmul.f32 %v1939, 1.442695
        %v2359 = vpow.pop %v2358
        %v2360 = vmul.f32 %v1940, 1.442695
        %v2361 = vpow.pop %v2360
        %v2362 = vmul.f32 %v1941, 1.442695
        %v2363 = vpow.pop %v2362
        %v2364 = vmul.f32 %v1942, 1.442695
        %v2365 = vpow.pop %v2364
        %v2366 = vmul.f32 %v1943, 1.442695
        %v2367 = vpow.pop %v2366
        %v2368 = vmul.f32 %v1944, 1.442695
        %v2369 = vpow.pop %v2368
        %v2370 = vmul.f32 %v1945, 1.442695
        %v2371 = vpow.pop %v2370
        %v2372 = vmul.f32 %v1946, 1.442695
        %v2373 = vpow.pop %v2372
        %v2374 = vmul.f32 %v1947, 1.442695
        %v2375 = vpow.pop %v2374
        %v2376 = vmul.f32 %v1948, 1.442695
        %v2377 = vpow.pop %v2376
        %v2378 = vmul.f32 %v1949, 1.442695
        %v2379 = vpow.pop %v2378
        %v2380 = vmul.f32 %v1950, 1.442695
        %v2381 = vpow.pop %v2380
        %v2382 = vmul.f32 %v1951, 1.442695
        %v2383 = vpow.pop %v2382
        %v2384 = vmul.f32 %v1952, 1.442695
        %v2385 = vpow.pop %v2384
        %v2386 = vmul.f32 %v1953, 1.442695
        %v2387 = vpow.pop %v2386
        %v2388 = vmul.f32 %v1954, 1.442695
        %v2389 = vpow.pop %v2388
        %v2390 = vmul.f32 %v1955, 1.442695
        %v2391 = vpow.pop %v2390
        %v2392 = vmul.f32 %v1956, 1.442695
        %v2393 = vpow.pop %v2392
        %v2394 = vmul.f32 %v1957, 1.442695
        %v2395 = vpow.pop %v2394
        %v2396 = vmul.f32 %v1958, 1.442695
        %v2397 = vpow.pop %v2396
        %v2398 = vmul.f32 %v1959, 1.442695
        %v2399 = vpow.pop %v2398
        %v2400 = vmul.f32 %v1960, 1.442695
        %v2401 = vpow.pop %v2400
        %v2402 = vmul.f32 %v1961, 1.442695
        %v2403 = vpow.pop %v2402
        %v2404 = vmul.f32 %v1962, 1.442695
        %v2405 = vpow.pop %v2404
        %v2406 = vmul.f32 %v1963, 1.442695
        %v2407 = vpow.pop %v2406
        %v2408 = vmul.f32 %v1964, 1.442695
        %v2409 = vpow.pop %v2408
        %v2410 = vmul.f32 %v1965, 1.442695
        %v2411 = vpow.pop %v2410
        %v2412 = vmul.f32 %v1966, 1.442695
        %v2413 = vpow.pop %v2412
        %v2414 = vmul.f32 %v1967, 1.442695
        %v2415 = vpow.pop %v2414
        %v2416 = vmul.f32 %v1968, 1.442695
        %v2417 = vpow.pop %v2416
        %v2418 = vmul.f32 %v1969, 1.442695
        %v2419 = vpow.pop %v2418
        %v2420 = vmul.f32 %v1970, 1.442695
        %v2421 = vpow.pop %v2420
        %v2422 = vmul.f32 %v1971, 1.442695
        %v2423 = vpow.pop %v2422
        %v2424 = vmul.f32 %v1972, 1.442695
        %v2425 = vpow.pop %v2424
        %v2426 = vmul.f32 %v1973, 1.442695
        %v2427 = vpow.pop %v2426
        %v2428 = vmul.f32 %v1974, 1.442695
        %v2429 = vpow.pop %v2428
        %v2430 = vmul.f32 %v1975, 1.442695
        %v2431 = vpow.pop %v2430
        %v2432 = vmul.f32 %v1976, 1.442695
        %v2433 = vpow.pop %v2432
        %v2434 = vmul.f32 %v1977, 1.442695
        %v2435 = vpow.pop %v2434
        %v2436 = vmul.f32 %v1978, 1.442695
        %v2437 = vpow.pop %v2436
        %v2438 = vmul.f32 %v1979, 1.442695
        %v2439 = vpow.pop %v2438
        %v2440 = vmul.f32 %v1980, 1.442695
        %v2441 = vpow.pop %v2440
        %v2442 = vmul.f32 %v1981, 1.442695
        %v2443 = vpow.pop %v2442
        %v2444 = vmul.f32 %v1982, 1.442695
        %v2445 = vpow.pop %v2444
        %v2446 = vmul.f32 %v1983, 1.442695
        %v2447 = vpow.pop %v2446
        %v2448 = vmul.f32 %v1984, 1.442695
        %v2449 = vpow.pop %v2448
        %v2450 = vmul.f32 %v1985, 1.442695
        %v2451 = vpow.pop %v2450
        %v2452 = vmul.f32 %v1986, 1.442695
        %v2453 = vpow.pop %v2452
        %v2454 = vmul.f32 %v1987, 1.442695
        %v2455 = vpow.pop %v2454
        %v2456 = vmul.f32 %v1988, 1.442695
        %v2457 = vpow.pop %v2456
        %v2458 = vmul.f32 %v1989, 1.442695
        %v2459 = vpow.pop %v2458
        %v2460 = vmul.f32 %v1990, 1.442695
        %v2461 = vpow.pop %v2460
        %v2462 = vmul.f32 %v1991, 1.442695
        %v2463 = vpow.pop %v2462
        %v2464 = vmul.f32 %v1992, 1.442695
        %v2465 = vpow.pop %v2464
        %v2466 = vmul.f32 %v1993, 1.442695
        %v2467 = vpow.pop %v2466
        %v2468 = vmul.f32 %v1994, 1.442695
        %v2469 = vpow.pop %v2468
        %v2470 = vmul.f32 %v1995, 1.442695
        %v2471 = vpow.pop %v2470
        %v2472 = vmul.f32 %v1996, 1.442695
        %v2473 = vpow.pop %v2472
        %v2474 = vmul.f32 %v1997, 1.442695
        %v2475 = vpow.pop %v2474
        %v2476 = vmul.f32 %v1998, 1.442695
        %v2477 = vpow.pop %v2476
        %v2478 = vmul.f32 %v1999, 1.442695
        %v2479 = vpow.pop %v2478
        %v2480 = vmul.f32 %v2000, 1.442695
        %v2481 = vpow.pop %v2480
        %v2482 = vmul.f32 %v2001, 1.442695
        %v2483 = vpow.pop %v2482
        %v2484 = vmul.f32 %v2002, 1.442695
        %v2485 = vpow.pop %v2484
        %v2486 = vmul.f32 %v2003, 1.442695
        %v2487 = vpow.pop %v2486
        %v2488 = vmul.f32 %v2004, 1.442695
        %v2489 = vpow.pop %v2488
        %v2490 = vmul.f32 %v2005, 1.442695
        %v2491 = vpow.pop %v2490
        %v2492 = vmul.f32 %v2006, 1.442695
        %v2493 = vpow.pop %v2492
        %v2494 = vmul.f32 %v2007, 1.442695
        %v2495 = vpow.pop %v2494
        %v2496 = vmul.f32 %v2008, 1.442695
        %v2497 = vpow.pop %v2496
        %v2498 = vmul.f32 %v2009, 1.442695
        %v2499 = vpow.pop %v2498
        %v2500 = vmul.f32 %v2010, 1.442695
        %v2501 = vpow.pop %v2500
        %v2502 = vmul.f32 %v2011, 1.442695
        %v2503 = vpow.pop %v2502
        %v2504 = vmul.f32 %v2012, 1.442695
        %v2505 = vpow.pop %v2504
        %v2506 = vmul.f32 %v2013, 1.442695
        %v2507 = vpow.pop %v2506
        %v2508 = vmul.f32 %v2014, 1.442695
        %v2509 = vpow.pop %v2508
        %v2510 = vmul.f32 %v2015, 1.442695
        %v2511 = vpow.pop %v2510
        %v2512 = vmul.f32 %v2016, 1.442695
        %v2513 = vpow.pop %v2512
        %v2514 = vmul.f32 %v2017, 1.442695
        %v2515 = vpow.pop %v2514
        %v2516 = vmul.f32 %v2018, 1.442695
        %v2517 = vpow.pop %v2516
        %v2518 = vmul.f32 %v2019, 1.442695
        %v2519 = vpow.pop %v2518
        %v2520 = vmul.f32 %v2020, 1.442695
        %v2521 = vpow.pop %v2520
        %v2522 = vmul.f32 %v2021, 1.442695
        %v2523 = vpow.pop %v2522
        %v2524 = vmul.f32 %v2022, 1.442695
        %v2525 = vpow.pop %v2524
        %v2526 = vmul.f32 %v2023, 1.442695
        %v2527 = vpow.pop %v2526
        %v2528 = vmul.f32 %v2024, 1.442695
        %v2529 = vpow.pop %v2528
        %v2530 = vmul.f32 %v2025, 1.442695
        %v2531 = vpow.pop %v2530
        %v2532 = vmul.f32 %v2026, 1.442695
        %v2533 = vpow.pop %v2532
        %v2534 = vmul.f32 %v2027, 1.442695
        %v2535 = vpow.pop %v2534
        %v2536 = vmul.f32 %v2028, 1.442695
        %v2537 = vpow.pop %v2536
        %v2538 = vmul.f32 %v2029, 1.442695
        %v2539 = vpow.pop %v2538
        %v2540 = vmul.f32 %v2030, 1.442695
        %v2541 = vpow.pop %v2540
        %v2542 = vmul.f32 %v2031, 1.442695
        %v2543 = vpow.pop %v2542
        %v2544 = vmul.f32 %v2032, 1.442695
        %v2545 = vpow.pop %v2544
        %v2546 = vmul.f32 %v2033, 1.442695
        %v2547 = vpow.pop %v2546
        %v2548 = vmul.f32 %v2034, 1.442695
        %v2549 = vpow.pop %v2548
        %v2550 = vmul.f32 %v2035, 1.442695
        %v2551 = vpow.pop %v2550
        %v2552 = vmul.f32 %v2036, 1.442695
        %v2553 = vpow.pop %v2552
        %v2554 = vmul.f32 %v2037, 1.442695
        %v2555 = vpow.pop %v2554
        %v2556 = vmul.f32 %v2038, 1.442695
        %v2557 = vpow.pop %v2556
        %v2558 = vmul.f32 %v2039, 1.442695
        %v2559 = vpow.pop %v2558
        %v2560 = vmul.f32 %v2040, 1.442695
        %v2561 = vpow.pop %v2560
        %v2562 = vmul.f32 %v2041, 1.442695
        %v2563 = vpow.pop %v2562
        %v2564 = vmul.f32 %v2042, 1.442695
        %v2565 = vpow.pop %v2564
        %v2566 = vmul.f32 %v2043, 1.442695
        %v2567 = vpow.pop %v2566
        %v2568 = vmul.f32 %v2044, 1.442695
        %v2569 = vpow.pop %v2568
        %v2570 = vmul.f32 %v2045, 1.442695
        %v2571 = vpow.pop %v2570
        %v2572 = vmul.f32 %v2046, 1.442695
        %v2573 = vpow.pop %v2572
        %v2574 = vmul.f32 %v2047, 1.442695
        %v2575 = vpow.pop %v2574
        %v2576 = vmul.f32 %v2048, 1.442695
        %v2577 = vpow.pop %v2576
        %v2578 = vmul.f32 %v2049, 1.442695
        %v2579 = vpow.pop %v2578
        %v2580 = vmul.f32 %v2050, 1.442695
        %v2581 = vpow.pop %v2580
        %v2582 = vmul.f32 %v2051, 1.442695
        %v2583 = vpow.pop %v2582
        %v2584 = vmul.f32 %v2052, 1.442695
        %v2585 = vpow.pop %v2584
        %v2586 = vmul.f32 %v2053, 1.442695
        %v2587 = vpow.pop %v2586
        %v2588 = vmul.f32 %v2054, 1.442695
        %v2589 = vpow.pop %v2588
        %v2590 = vmul.f32 %v2055, 1.442695
        %v2591 = vpow.pop %v2590
        %v2592 = vmul.f32 %v2056, 1.442695
        %v2593 = vpow.pop %v2592
        %v2594 = vmul.f32 %v2057, 1.442695
        %v2595 = vpow.pop %v2594
        %v2596 = vmul.f32 %v2058, 1.442695
        %v2597 = vpow.pop %v2596
        %v2598 = vmul.f32 %v2059, 1.442695
        %v2599 = vpow.pop %v2598
        %v2600 = vmul.f32 %v2060, 1.442695
        %v2601 = vpow.pop %v2600
        %v2602 = vmul.f32 %v2061, 1.442695
        %v2603 = vpow.pop %v2602
        %v2604 = vmul.f32 %v2062, 1.442695
        %v2605 = vpow.pop %v2604
        %v2606 = vmul.f32 %v2063, 1.442695
        %v2607 = vpow.pop %v2606
        %v2608 = vmul.f32 %v2064, 1.442695
        %v2609 = vpow.pop %v2608
        %v2610 = vmul.f32 %v2065, 1.442695
        %v2611 = vpow.pop %v2610
        %v2612 = vmul.f32 %v2066, 1.442695
        %v2613 = vpow.pop %v2612
        %v2614 = vmul.f32 %v2067, 1.442695
        %v2615 = vpow.pop %v2614
        %v2616 = vmul.f32 %v2068, 1.442695
        %v2617 = vpow.pop %v2616
        %v2618 = vmul.f32 %v2069, 1.442695
        %v2619 = vpow.pop %v2618
        %v2620 = vmul.f32 %v2070, 1.442695
        %v2621 = vpow.pop %v2620
        %v2622 = vmul.f32 %v2071, 1.442695
        %v2623 = vpow.pop %v2622
        %v2624 = vmul.f32 %v2072, 1.442695
        %v2625 = vpow.pop %v2624
        %v2626 = vmul.f32 %v2073, 1.442695
        %v2627 = vpow.pop %v2626
        %v2628 = vmul.f32 %v2074, 1.442695
        %v2629 = vpow.pop %v2628
        %v2630 = vmul.f32 %v2075, 1.442695
        %v2631 = vpow.pop %v2630
        %v2632 = vmul.f32 %v2076, 1.442695
        %v2633 = vpow.pop %v2632
        %v2634 = vmul.f32 %v2077, 1.442695
        %v2635 = vpow.pop %v2634
        %v2636 = vmul.f32 %v2078, 1.442695
        %v2637 = vpow.pop %v2636
        %v2638 = vmul.f32 %v2079, 1.442695
        %v2639 = vpow.pop %v2638
        %v2640 = vmul.f32 %v2080, 1.442695
        %v2641 = vpow.pop %v2640
        %v2642 = vmul.f32 %v2081, 1.442695
        %v2643 = vpow.pop %v2642
        %v2644 = vmul.f32 %v2082, 1.442695
        %v2645 = vpow.pop %v2644
        %v2646 = vmul.f32 %v2083, 1.442695
        %v2647 = vpow.pop %v2646
        %v2648 = vmul.f32 %v2084, 1.442695
        %v2649 = vpow.pop %v2648
        %v2650 = vmul.f32 %v2085, 1.442695
        %v2651 = vpow.pop %v2650
        %v2652 = vmul.f32 %v2086, 1.442695
        %v2653 = vpow.pop %v2652
        %v2654 = vmul.f32 %v2087, 1.442695
        %v2655 = vpow.pop %v2654
        %v2656 = vmul.f32 %v2088, 1.442695
        %v2657 = vpow.pop %v2656
        %v2658 = vmul.f32 %v2089, 1.442695
        %v2659 = vpow.pop %v2658
        %v2660 = vmul.f32 %v2090, 1.442695
        %v2661 = vpow.pop %v2660
        %v2662 = vmul.f32 %v2091, 1.442695
        %v2663 = vpow.pop %v2662
        %v2664 = vmul.f32 %v2092, 1.442695
        %v2665 = vpow.pop %v2664
        %v2666 = vmul.f32 %v2093, 1.442695
        %v2667 = vpow.pop %v2666
        %v2668 = vmul.f32 %v2094, 1.442695
        %v2669 = vpow.pop %v2668
        %v2670 = vmul.f32 %v2095, 1.442695
        %v2671 = vpow.pop %v2670
        %v2672 = vmul.f32 %v2096, 1.442695
        %v2673 = vpow.pop %v2672
        %v2674 = vmul.f32 %v2097, 1.442695
        %v2675 = vpow.pop %v2674
        %v2676 = vmul.f32 %v2098, 1.442695
        %v2677 = vpow.pop %v2676
        %v2678 = vmul.f32 %v2099, 1.442695
        %v2679 = vpow.pop %v2678
        %v2680 = vmul.f32 %v2100, 1.442695
        %v2681 = vpow.pop %v2680
        %v2682 = vmul.f32 %v2101, 1.442695
        %v2683 = vpow.pop %v2682
        %v2684 = vmul.f32 %v2102, 1.442695
        %v2685 = vpow.pop %v2684
        %v2686 = vmul.f32 %v2103, 1.442695
        %v2687 = vpow.pop %v2686
        %v2688 = vmul.f32 %v2104, 1.442695
        %v2689 = vpow.pop %v2688
        %v2690 = vmul.f32 %v2105, 1.442695
        %v2691 = vpow.pop %v2690
        %v2692 = vmul.f32 %v2106, 1.442695
        %v2693 = vpow.pop %v2692
        %v2694 = vmul.f32 %v2107, 1.442695
        %v2695 = vpow.pop %v2694
        %v2696 = vmul.f32 %v2108, 1.442695
        %v2697 = vpow.pop %v2696
        %v2698 = vmul.f32 %v2109, 1.442695
        %v2699 = vpow.pop %v2698
        %v2700 = vmul.f32 %v2110, 1.442695
        %v2701 = vpow.pop %v2700
        %v2702 = vmul.f32 %v2111, 1.442695
        %v2703 = vpow.pop %v2702
        %v2704 = vmul.f32 %v2112, 1.442695
        %v2705 = vpow.pop %v2704
        %v2706 = vmul.f32 %v2113, 1.442695
        %v2707 = vpow.pop %v2706
        %v2708 = vmul.f32 %v2114, 1.442695
        %v2709 = vpow.pop %v2708
        %v2710 = vmul.f32 %v2115, 1.442695
        %v2711 = vpow.pop %v2710
        %v2712 = vmul.f32 %v2116, 1.442695
        %v2713 = vpow.pop %v2712
        %v2714 = vmul.f32 %v2117, 1.442695
        %v2715 = vpow.pop %v2714
        %v2716 = vmul.f32 %v2118, 1.442695
        %v2717 = vpow.pop %v2716
        %v2718 = vmul.f32 %v2119, 1.442695
        %v2719 = vpow.pop %v2718
        %v2720 = vmul.f32 %v2120, 1.442695
        %v2721 = vpow.pop %v2720
        %v2722 = vmul.f32 %v2121, 1.442695
        %v2723 = vpow.pop %v2722
        %v2724 = vmul.f32 %v2122, 1.442695
        %v2725 = vpow.pop %v2724
        %v2726 = vmul.f32 %v2123, 1.442695
        %v2727 = vpow.pop %v2726
        %v2728 = vmul.f32 %v2124, 1.442695
        %v2729 = vpow.pop %v2728
        %v2730 = vmul.f32 %v2125, 1.442695
        %v2731 = vpow.pop %v2730
        %v2732 = vmul.f32 %v2126, 1.442695
        %v2733 = vpow.pop %v2732
        %v2734 = vmul.f32 %v2127, 1.442695
        %v2735 = vpow.pop %v2734
        %v2736 = vmul.f32 %v2128, 1.442695
        %v2737 = vpow.pop %v2736
        %v2738 = vmul.f32 %v2129, 1.442695
        %v2739 = vpow.pop %v2738
        %v2740 = vmul.f32 %v2130, 1.442695
        %v2741 = vpow.pop %v2740
        %v2742 = vmul.f32 %v2131, 1.442695
        %v2743 = vpow.pop %v2742
        %v2744 = vmul.f32 %v2132, 1.442695
        %v2745 = vpow.pop %v2744
        %v2746 = vmul.f32 %v2133, 1.442695
        %v2747 = vpow.pop %v2746
        %v2748 = vmul.f32 %v2134, 1.442695
        %v2749 = vpow.pop %v2748
        %v2750 = vmul.f32 %v2135, 1.442695
        %v2751 = vpow.pop %v2750
        %v2752 = vmul.f32 %v2136, 1.442695
        %v2753 = vpow.pop %v2752
        %v2754 = vmul.f32 %v2137, 1.442695
        %v2755 = vpow.pop %v2754
        %v2756 = vmul.f32 %v2138, 1.442695
        %v2757 = vpow.pop %v2756
        %v2758 = vmul.f32 %v2139, 1.442695
        %v2759 = vpow.pop %v2758
        %v2760 = vmul.f32 %v2140, 1.442695
        %v2761 = vpow.pop %v2760
        %v2762 = vmul.f32 %v2141, 1.442695
        %v2763 = vpow.pop %v2762
        %v2764 = vmul.f32 %v2142, 1.442695
        %v2765 = vpow.pop %v2764
        %v2766 = vmul.f32 %v2143, 1.442695
        %v2767 = vpow.pop %v2766
        %v2768 = vmul.f32 %v2144, 1.442695
        %v2769 = vpow.pop %v2768
        %v2770 = vmul.f32 %v2145, 1.442695
        %v2771 = vpow.pop %v2770
        %v2772 = vmul.f32 %v2146, 1.442695
        %v2773 = vpow.pop %v2772
        %v2774 = vmul.f32 %v2147, 1.442695
        %v2775 = vpow.pop %v2774
        %v2776 = vmul.f32 %v2148, 1.442695
        %v2777 = vpow.pop %v2776
        %v2778 = vmul.f32 %v2149, 1.442695
        %v2779 = vpow.pop %v2778
        %v2780 = vmul.f32 %v2150, 1.442695
        %v2781 = vpow.pop %v2780
        %v2782 = vmul.f32 %v2151, 1.442695
        %v2783 = vpow.pop %v2782
        %v2784 = vmul.f32 %v2152, 1.442695
        %v2785 = vpow.pop %v2784
        %v2786 = vmul.f32 %v2153, 1.442695
        %v2787 = vpow.pop %v2786
        %v2788 = vmul.f32 %v2154, 1.442695
        %v2789 = vpow.pop %v2788
        %v2790 = vmul.f32 %v2155, 1.442695
        %v2791 = vpow.pop %v2790
        %v2792 = vmul.f32 %v2156, 1.442695
        %v2793 = vpow.pop %v2792
        %v2794 = vmul.f32 %v2157, 1.442695
        %v2795 = vpow.pop %v2794
        %v2796 = vmul.f32 %v2158, 1.442695
        %v2797 = vpow.pop %v2796
        %v2798 = vmul.f32 %v2159, 1.442695
        %v2799 = vpow.pop %v2798
        %v2800 = vmul.f32 %v2160, 1.442695
        %v2801 = vpow.pop %v2800
        %v2802 = vmul.f32 %v2161, 1.442695
        %v2803 = vpow.pop %v2802
        %v2804 = vmul.f32 %v2162, 1.442695
        %v2805 = vpow.pop %v2804
        %v2806 = vmul.f32 %v2163, 1.442695
        %v2807 = vpow.pop %v2806
        %v2808 = vmul.f32 %v2164, 1.442695
        %v2809 = vpow.pop %v2808
        %v2810 = vmul.f32 %v2165, 1.442695
        %v2811 = vpow.pop %v2810
        %v2812 = vmul.f32 %v2166, 1.442695
        %v2813 = vpow.pop %v2812
        %v2814 = vmul.f32 %v2167, 1.442695
        %v2815 = vpow.pop %v2814
        %v2816 = vmul.f32 %v2168, 1.442695
        %v2817 = vpow.pop %v2816
        %v2818 = vmul.f32 %v2169, 1.442695
        %v2819 = vpow.pop %v2818
        %v2820 = vmul.f32 %v2170, 1.442695
        %v2821 = vpow.pop %v2820
        %v2822 = vmul.f32 %v2171, 1.442695
        %v2823 = vpow.pop %v2822
        %v2824 = vmul.f32 %v2172, 1.442695
        %v2825 = vpow.pop %v2824
        %v2826 = vmul.f32 %v2173, 1.442695
        %v2827 = vpow.pop %v2826
        %v2828 = vmul.f32 %v2174, 1.442695
        %v2829 = vpow.pop %v2828
        %v2830 = vmul.f32 %v2175, 1.442695
        %v2831 = vpow.pop %v2830
        %v2832 = vmul.f32 %v2176, 1.442695
        %v2833 = vpow.pop %v2832
        %v2834 = vmul.f32 %v2177, 1.442695
        %v2835 = vpow.pop %v2834
        %v2836 = vmul.f32 %v2178, 1.442695
        %v2837 = vpow.pop %v2836
        %v2838 = vmul.f32 %v2179, 1.442695
        %v2839 = vpow.pop %v2838
        %v2840 = vmul.f32 %v2180, 1.442695
        %v2841 = vpow.pop %v2840
        %v2842 = vmul.f32 %v2181, 1.442695
        %v2843 = vpow.pop %v2842
        %v2844 = vmul.f32 %v2182, 1.442695
        %v2845 = vpow.pop %v2844
        %v2846 = vmul.f32 %v2183, 1.442695
        %v2847 = vpow.pop %v2846
        %v2848 = vmul.f32 %v2184, 1.442695
        %v2849 = vpow.pop %v2848
        %v2850 = vmul.f32 %v2185, 1.442695
        %v2851 = vpow.pop %v2850
        %v2852 = vmul.f32 %v2186, 1.442695
        %v2853 = vpow.pop %v2852
        %v2854 = vmul.f32 %v2187, 1.442695
        %v2855 = vpow.pop %v2854
        %v2856 = vmul.f32 %v2188, 1.442695
        %v2857 = vpow.pop %v2856
        %v2858 = vmul.f32 %v2189, 1.442695
        %v2859 = vpow.pop %v2858
        %v2860 = vmul.f32 %v2190, 1.442695
        %v2861 = vpow.pop %v2860
        %v2862 = vmul.f32 %v2191, 1.442695
        %v2863 = vpow.pop %v2862
        %v2864 = vmul.f32 %v2192, 1.442695
        %v2865 = vpow.pop %v2864
        %v2866 = vmul.f32 %v2193, 1.442695
        %v2867 = vpow.pop %v2866
        %v2868 = vmul.f32 %v2194, 1.442695
        %v2869 = vpow.pop %v2868
        %v2870 = vmul.f32 %v2195, 1.442695
        %v2871 = vpow.pop %v2870
        %v2872 = vmul.f32 %v2196, 1.442695
        %v2873 = vpow.pop %v2872
        %v2874 = vmul.f32 %v2197, 1.442695
        %v2875 = vpow.pop %v2874
        %v2876 = vmul.f32 %v2198, 1.442695
        %v2877 = vpow.pop %v2876
        %v2878 = vmul.f32 %v2199, 1.442695
        %v2879 = vpow.pop %v2878
        %v2880 = vmul.f32 %v2200, 1.442695
        %v2881 = vpow.pop %v2880
        %v2882 = vmul.f32 %v2201, 1.442695
        %v2883 = vpow.pop %v2882
        %v2884 = vmul.f32 %v2202, 1.442695
        %v2885 = vpow.pop %v2884
        %v2886 = vmul.f32 %v2203, 1.442695
        %v2887 = vpow.pop %v2886
        %v2888 = vmul.f32 %v2204, 1.442695
        %v2889 = vpow.pop %v2888
        %v2890 = vmul.f32 %v2205, 1.442695
        %v2891 = vpow.pop %v2890
        %v2892 = vmul.f32 %v2206, 1.442695
        %v2893 = vpow.pop %v2892
        %v2894 = vmul.f32 %v2207, 1.442695
        %v2895 = vpow.pop %v2894
        %v2896 = vmul.f32 %v2208, 1.442695
        %v2897 = vpow.pop %v2896
        %v2898 = vmul.f32 %v2209, 1.442695
        %v2899 = vpow.pop %v2898
        %v2900 = vmul.f32 %v2210, 1.442695
        %v2901 = vpow.pop %v2900
        %v2902 = vmul.f32 %v2211, 1.442695
        %v2903 = vpow.pop %v2902
        %v2904 = vmul.f32 %v2212, 1.442695
        %v2905 = vpow.pop %v2904
        %v2906 = vmul.f32 %v2213, 1.442695
        %v2907 = vpow.pop %v2906
        %v2908 = vmul.f32 %v2214, 1.442695
        %v2909 = vpow.pop %v2908
        %v2910 = vmul.f32 %v2215, 1.442695
        %v2911 = vpow.pop %v2910
        %v2912 = vmul.f32 %v2216, 1.442695
        %v2913 = vpow.pop %v2912
        %v2914 = vmul.f32 %v2217, 1.442695
        %v2915 = vpow.pop %v2914
        %v2916 = vmul.f32 %v2218, 1.442695
        %v2917 = vpow.pop %v2916
        %v2918 = vmul.f32 %v2219, 1.442695
        %v2919 = vpow.pop %v2918
        %v2920 = vmul.f32 %v2220, 1.442695
        %v2921 = vpow.pop %v2920
        %v2922 = vmul.f32 %v2221, 1.442695
        %v2923 = vpow.pop %v2922
        %v2924 = vmul.f32 %v2222, 1.442695
        %v2925 = vpow.pop %v2924
        %v2926 = vmul.f32 %v2223, 1.442695
        %v2927 = vpow.pop %v2926
        %v2928 = vmul.f32 %v2224, 1.442695
        %v2929 = vpow.pop %v2928
        %v2930 = vmul.f32 %v2225, 1.442695
        %v2931 = vpow.pop %v2930
        %v2932 = vmul.f32 %v2226, 1.442695
        %v2933 = vpow.pop %v2932
        %v2934 = vmul.f32 %v2227, 1.442695
        %v2935 = vpow.pop %v2934
        %v2936 = vmul.f32 %v2228, 1.442695
        %v2937 = vpow.pop %v2936
        %v2938 = vmul.f32 %v2229, 1.442695
        %v2939 = vpow.pop %v2938
        %v2940 = vmul.f32 %v2230, 1.442695
        %v2941 = vpow.pop %v2940
        %v2942 = vmul.f32 %v2231, 1.442695
        %v2943 = vpow.pop %v2942
        %v2944 = vmul.f32 %v2232, 1.442695
        %v2945 = vpow.pop %v2944
        %v2946 = vmul.f32 %v2233, 1.442695
        %v2947 = vpow.pop %v2946
        %v2948 = vmul.f32 %v2234, 1.442695
        %v2949 = vpow.pop %v2948
        %v2950 = vmul.f32 %v2235, 1.442695
        %v2951 = vpow.pop %v2950
        %v2952 = vmul.f32 %v2236, 1.442695
        %v2953 = vpow.pop %v2952
        %v2954 = vmul.f32 %v2237, 1.442695
        %v2955 = vpow.pop %v2954
        %v2956 = vmul.f32 %v2238, 1.442695
        %v2957 = vpow.pop %v2956
        %v2958 = vmul.f32 %v2239, 1.442695
        %v2959 = vpow.pop %v2958
        %v2960 = vmul.f32 %v2240, 1.442695
        %v2961 = vpow.pop %v2960
        %v2962 = vmul.f32 %v2241, 1.442695
        %v2963 = vpow.pop %v2962
        %v2964 = vmul.f32 %v2242, 1.442695
        %v2965 = vpow.pop %v2964
        %v2966 = vmul.f32 %v2243, 1.442695
        %v2967 = vpow.pop %v2966
        %v2968 = vmul.f32 %v2244, 1.442695
        %v2969 = vpow.pop %v2968
        %v2970 = vmul.f32 %v2245, 1.442695
        %v2971 = vpow.pop %v2970
        %v2972 = vmul.f32 %v2246, 1.442695
        %v2973 = vpow.pop %v2972
        %v2974 = vmul.f32 %v2247, 1.442695
        %v2975 = vpow.pop %v2974
        %v2976 = vmul.f32 %v2248, 1.442695
        %v2977 = vpow.pop %v2976
        %v2978 = vmul.f32 %v2249, 1.442695
        %v2979 = vpow.pop %v2978
        %v2980 = vmul.f32 %v2250, 1.442695
        %v2981 = vpow.pop %v2980
        %v2982 = vmul.f32 %v2251, 1.442695
        %v2983 = vpow.pop %v2982
        %v2984 = vmul.f32 %v2252, 1.442695
        %v2985 = vpow.pop %v2984
        %v2986 = vmul.f32 %v2253, 1.442695
        %v2987 = vpow.pop %v2986
        %v2988 = vmul.f32 %v2254, 1.442695
        %v2989 = vpow.pop %v2988
        %v2990 = vmul.f32 %v2255, 1.442695
        %v2991 = vpow.pop %v2990
        %v2992 = vmul.f32 %v2256, 1.442695
        %v2993 = vpow.pop %v2992
        %v2994 = vmul.f32 %v2257, 1.442695
        %v2995 = vpow.pop %v2994
        %v2996 = vmul.f32 %v2258, 1.442695
        %v2997 = vpow.pop %v2996
        %v2998 = vmul.f32 %v2259, 1.442695
        %v2999 = vpow.pop %v2998
        %v3000 = vmul.f32 %v2260, 1.442695
        %v3001 = vpow.pop %v3000
        %v3002 = vmul.f32 %v2261, 1.442695
        %v3003 = vpow.pop %v3002
        %v3004 = vmul.f32 %v2262, 1.442695
        %v3005 = vpow.pop %v3004
        %v3006 = vmul.f32 %v2263, 1.442695
        %v3007 = vpow.pop %v3006
        %v3008 = vmul.f32 %v2264, 1.442695
        %v3009 = vpow.pop %v3008
        %v3010 = vmul.f32 %v2265, 1.442695
        %v3011 = vpow.pop %v3010
        %v3012 = vmul.f32 %v2266, 1.442695
        %v3013 = vpow.pop %v3012
        %v3014 = vmul.f32 %v2267, 1.442695
        %v3015 = vpow.pop %v3014
        %v3016 = vmul.f32 %v2268, 1.442695
        %v3017 = vpow.pop %v3016
        %v3018 = vmul.f32 %v2269, 1.442695
        %v3019 = vpow.pop %v3018
        %v3020 = vmul.f32 %v2270, 1.442695
        %v3021 = vpow.pop %v3020
        %v3022 = vmul.f32 %v2271, 1.442695
        %v3023 = vpow.pop %v3022
        %v3024 = vmul.f32 %v2272, 1.442695
        %v3025 = vpow.pop %v3024
        %v3026 = vmul.f32 %v2273, 1.442695
        %v3027 = vpow.pop %v3026
        %v3028 = vmul.f32 %v2274, 1.442695
        %v3029 = vpow.pop %v3028
        %v3030 = vmul.f32 %v2275, 1.442695
        %v3031 = vpow.pop %v3030
        %v3032 = vmul.f32 %v2276, 1.442695
        %v3033 = vpow.pop %v3032
        %v3034 = vmul.f32 %v2277, 1.442695
        %v3035 = vpow.pop %v3034
        %v3036 = vmul.f32 %v2278, 1.442695
        %v3037 = vpow.pop %v3036
        %v3038 = vmul.f32 %v2279, 1.442695
        %v3039 = vpow.pop %v3038
        %v3040 = vmul.f32 %v2280, 1.442695
        %v3041 = vpow.pop %v3040
        %v3042 = vmul.f32 %v2281, 1.442695
        %v3043 = vpow.pop %v3042
        %v3044 = vmul.f32 %v2282, 1.442695
        %v3045 = vpow.pop %v3044
        %v3046 = vmul.f32 %v2283, 1.442695
        %v3047 = vpow.pop %v3046
        %v3048 = vmul.f32 %v2284, 1.442695
        %v3049 = vpow.pop %v3048
        %v3050 = vmul.f32 %v2285, 1.442695
        %v3051 = vpow.pop %v3050
        %v3052 = vmul.f32 %v2286, 1.442695
        %v3053 = vpow.pop %v3052
        %v3054 = vmul.f32 %v2287, 1.442695
        %v3055 = vpow.pop %v3054
        %v3056 = vadd.f32 %v2289, 1.0
        %v3057 = vadd.f32 %v2291, 1.0
        %v3058 = vadd.f32 %v2293, 1.0
        %v3059 = vadd.f32 %v2295, 1.0
        %v3060 = vadd.f32 %v2297, 1.0
        %v3061 = vadd.f32 %v2299, 1.0
        %v3062 = vadd.f32 %v2301, 1.0
        %v3063 = vadd.f32 %v2303, 1.0
        %v3064 = vadd.f32 %v2305, 1.0
        %v3065 = vadd.f32 %v2307, 1.0
        %v3066 = vadd.f32 %v2309, 1.0
        %v3067 = vadd.f32 %v2311, 1.0
        %v3068 = vadd.f32 %v2313, 1.0
        %v3069 = vadd.f32 %v2315, 1.0
        %v3070 = vadd.f32 %v2317, 1.0
        %v3071 = vadd.f32 %v2319, 1.0
        %v3072 = vadd.f32 %v2321, 1.0
        %v3073 = vadd.f32 %v2323, 1.0
        %v3074 = vadd.f32 %v2325, 1.0
        %v3075 = vadd.f32 %v2327, 1.0
        %v3076 = vadd.f32 %v2329, 1.0
        %v3077 = vadd.f32 %v2331, 1.0
        %v3078 = vadd.f32 %v2333, 1.0
        %v3079 = vadd.f32 %v2335, 1.0
        %v3080 = vadd.f32 %v2337, 1.0
        %v3081 = vadd.f32 %v2339, 1.0
        %v3082 = vadd.f32 %v2341, 1.0
        %v3083 = vadd.f32 %v2343, 1.0
        %v3084 = vadd.f32 %v2345, 1.0
        %v3085 = vadd.f32 %v2347, 1.0
        %v3086 = vadd.f32 %v2349, 1.0
        %v3087 = vadd.f32 %v2351, 1.0
        %v3088 = vadd.f32 %v2353, 1.0
        %v3089 = vadd.f32 %v2355, 1.0
        %v3090 = vadd.f32 %v2357, 1.0
        %v3091 = vadd.f32 %v2359, 1.0
        %v3092 = vadd.f32 %v2361, 1.0
        %v3093 = vadd.f32 %v2363, 1.0
        %v3094 = vadd.f32 %v2365, 1.0
        %v3095 = vadd.f32 %v2367, 1.0
        %v3096 = vadd.f32 %v2369, 1.0
        %v3097 = vadd.f32 %v2371, 1.0
        %v3098 = vadd.f32 %v2373, 1.0
        %v3099 = vadd.f32 %v2375, 1.0
        %v3100 = vadd.f32 %v2377, 1.0
        %v3101 = vadd.f32 %v2379, 1.0
        %v3102 = vadd.f32 %v2381, 1.0
        %v3103 = vadd.f32 %v2383, 1.0
        %v3104 = vadd.f32 %v2385, 1.0
        %v3105 = vadd.f32 %v2387, 1.0
        %v3106 = vadd.f32 %v2389, 1.0
        %v3107 = vadd.f32 %v2391, 1.0
        %v3108 = vadd.f32 %v2393, 1.0
        %v3109 = vadd.f32 %v2395, 1.0
        %v3110 = vadd.f32 %v2397, 1.0
        %v3111 = vadd.f32 %v2399, 1.0
        %v3112 = vadd.f32 %v2401, 1.0
        %v3113 = vadd.f32 %v2403, 1.0
        %v3114 = vadd.f32 %v2405, 1.0
        %v3115 = vadd.f32 %v2407, 1.0
        %v3116 = vadd.f32 %v2409, 1.0
        %v3117 = vadd.f32 %v2411, 1.0
        %v3118 = vadd.f32 %v2413, 1.0
        %v3119 = vadd.f32 %v2415, 1.0
        %v3120 = vadd.f32 %v2417, 1.0
        %v3121 = vadd.f32 %v2419, 1.0
        %v3122 = vadd.f32 %v2421, 1.0
        %v3123 = vadd.f32 %v2423, 1.0
        %v3124 = vadd.f32 %v2425, 1.0
        %v3125 = vadd.f32 %v2427, 1.0
        %v3126 = vadd.f32 %v2429, 1.0
        %v3127 = vadd.f32 %v2431, 1.0
        %v3128 = vadd.f32 %v2433, 1.0
        %v3129 = vadd.f32 %v2435, 1.0
        %v3130 = vadd.f32 %v2437, 1.0
        %v3131 = vadd.f32 %v2439, 1.0
        %v3132 = vadd.f32 %v2441, 1.0
        %v3133 = vadd.f32 %v2443, 1.0
        %v3134 = vadd.f32 %v2445, 1.0
        %v3135 = vadd.f32 %v2447, 1.0
        %v3136 = vadd.f32 %v2449, 1.0
        %v3137 = vadd.f32 %v2451, 1.0
        %v3138 = vadd.f32 %v2453, 1.0
        %v3139 = vadd.f32 %v2455, 1.0
        %v3140 = vadd.f32 %v2457, 1.0
        %v3141 = vadd.f32 %v2459, 1.0
        %v3142 = vadd.f32 %v2461, 1.0
        %v3143 = vadd.f32 %v2463, 1.0
        %v3144 = vadd.f32 %v2465, 1.0
        %v3145 = vadd.f32 %v2467, 1.0
        %v3146 = vadd.f32 %v2469, 1.0
        %v3147 = vadd.f32 %v2471, 1.0
        %v3148 = vadd.f32 %v2473, 1.0
        %v3149 = vadd.f32 %v2475, 1.0
        %v3150 = vadd.f32 %v2477, 1.0
        %v3151 = vadd.f32 %v2479, 1.0
        %v3152 = vadd.f32 %v2481, 1.0
        %v3153 = vadd.f32 %v2483, 1.0
        %v3154 = vadd.f32 %v2485, 1.0
        %v3155 = vadd.f32 %v2487, 1.0
        %v3156 = vadd.f32 %v2489, 1.0
        %v3157 = vadd.f32 %v2491, 1.0
        %v3158 = vadd.f32 %v2493, 1.0
        %v3159 = vadd.f32 %v2495, 1.0
        %v3160 = vadd.f32 %v2497, 1.0
        %v3161 = vadd.f32 %v2499, 1.0
        %v3162 = vadd.f32 %v2501, 1.0
        %v3163 = vadd.f32 %v2503, 1.0
        %v3164 = vadd.f32 %v2505, 1.0
        %v3165 = vadd.f32 %v2507, 1.0
        %v3166 = vadd.f32 %v2509, 1.0
        %v3167 = vadd.f32 %v2511, 1.0
        %v3168 = vadd.f32 %v2513, 1.0
        %v3169 = vadd.f32 %v2515, 1.0
        %v3170 = vadd.f32 %v2517, 1.0
        %v3171 = vadd.f32 %v2519, 1.0
        %v3172 = vadd.f32 %v2521, 1.0
        %v3173 = vadd.f32 %v2523, 1.0
        %v3174 = vadd.f32 %v2525, 1.0
        %v3175 = vadd.f32 %v2527, 1.0
        %v3176 = vadd.f32 %v2529, 1.0
        %v3177 = vadd.f32 %v2531, 1.0
        %v3178 = vadd.f32 %v2533, 1.0
        %v3179 = vadd.f32 %v2535, 1.0
        %v3180 = vadd.f32 %v2537, 1.0
        %v3181 = vadd.f32 %v2539, 1.0
        %v3182 = vadd.f32 %v2541, 1.0
        %v3183 = vadd.f32 %v2543, 1.0
        %v3184 = vadd.f32 %v2545, 1.0
        %v3185 = vadd.f32 %v2547, 1.0
        %v3186 = vadd.f32 %v2549, 1.0
        %v3187 = vadd.f32 %v2551, 1.0
        %v3188 = vadd.f32 %v2553, 1.0
        %v3189 = vadd.f32 %v2555, 1.0
        %v3190 = vadd.f32 %v2557, 1.0
        %v3191 = vadd.f32 %v2559, 1.0
        %v3192 = vadd.f32 %v2561, 1.0
        %v3193 = vadd.f32 %v2563, 1.0
        %v3194 = vadd.f32 %v2565, 1.0
        %v3195 = vadd.f32 %v2567, 1.0
        %v3196 = vadd.f32 %v2569, 1.0
        %v3197 = vadd.f32 %v2571, 1.0
        %v3198 = vadd.f32 %v2573, 1.0
        %v3199 = vadd.f32 %v2575, 1.0
        %v3200 = vadd.f32 %v2577, 1.0
        %v3201 = vadd.f32 %v2579, 1.0
        %v3202 = vadd.f32 %v2581, 1.0
        %v3203 = vadd.f32 %v2583, 1.0
        %v3204 = vadd.f32 %v2585, 1.0
        %v3205 = vadd.f32 %v2587, 1.0
        %v3206 = vadd.f32 %v2589, 1.0
        %v3207 = vadd.f32 %v2591, 1.0
        %v3208 = vadd.f32 %v2593, 1.0
        %v3209 = vadd.f32 %v2595, 1.0
        %v3210 = vadd.f32 %v2597, 1.0
        %v3211 = vadd.f32 %v2599, 1.0
        %v3212 = vadd.f32 %v2601, 1.0
        %v3213 = vadd.f32 %v2603, 1.0
        %v3214 = vadd.f32 %v2605, 1.0
        %v3215 = vadd.f32 %v2607, 1.0
        %v3216 = vadd.f32 %v2609, 1.0
        %v3217 = vadd.f32 %v2611, 1.0
        %v3218 = vadd.f32 %v2613, 1.0
        %v3219 = vadd.f32 %v2615, 1.0
        %v3220 = vadd.f32 %v2617, 1.0
        %v3221 = vadd.f32 %v2619, 1.0
        %v3222 = vadd.f32 %v2621, 1.0
        %v3223 = vadd.f32 %v2623, 1.0
        %v3224 = vadd.f32 %v2625, 1.0
        %v3225 = vadd.f32 %v2627, 1.0
        %v3226 = vadd.f32 %v2629, 1.0
        %v3227 = vadd.f32 %v2631, 1.0
        %v3228 = vadd.f32 %v2633, 1.0
        %v3229 = vadd.f32 %v2635, 1.0
        %v3230 = vadd.f32 %v2637, 1.0
        %v3231 = vadd.f32 %v2639, 1.0
        %v3232 = vadd.f32 %v2641, 1.0
        %v3233 = vadd.f32 %v2643, 1.0
        %v3234 = vadd.f32 %v2645, 1.0
        %v3235 = vadd.f32 %v2647, 1.0
        %v3236 = vadd.f32 %v2649, 1.0
        %v3237 = vadd.f32 %v2651, 1.0
        %v3238 = vadd.f32 %v2653, 1.0
        %v3239 = vadd.f32 %v2655, 1.0
        %v3240 = vadd.f32 %v2657, 1.0
        %v3241 = vadd.f32 %v2659, 1.0
        %v3242 = vadd.f32 %v2661, 1.0
        %v3243 = vadd.f32 %v2663, 1.0
        %v3244 = vadd.f32 %v2665, 1.0
        %v3245 = vadd.f32 %v2667, 1.0
        %v3246 = vadd.f32 %v2669, 1.0
        %v3247 = vadd.f32 %v2671, 1.0
        %v3248 = vadd.f32 %v2673, 1.0
        %v3249 = vadd.f32 %v2675, 1.0
        %v3250 = vadd.f32 %v2677, 1.0
        %v3251 = vadd.f32 %v2679, 1.0
        %v3252 = vadd.f32 %v2681, 1.0
        %v3253 = vadd.f32 %v2683, 1.0
        %v3254 = vadd.f32 %v2685, 1.0
        %v3255 = vadd.f32 %v2687, 1.0
        %v3256 = vadd.f32 %v2689, 1.0
        %v3257 = vadd.f32 %v2691, 1.0
        %v3258 = vadd.f32 %v2693, 1.0
        %v3259 = vadd.f32 %v2695, 1.0
        %v3260 = vadd.f32 %v2697, 1.0
        %v3261 = vadd.f32 %v2699, 1.0
        %v3262 = vadd.f32 %v2701, 1.0
        %v3263 = vadd.f32 %v2703, 1.0
        %v3264 = vadd.f32 %v2705, 1.0
        %v3265 = vadd.f32 %v2707, 1.0
        %v3266 = vadd.f32 %v2709, 1.0
        %v3267 = vadd.f32 %v2711, 1.0
        %v3268 = vadd.f32 %v2713, 1.0
        %v3269 = vadd.f32 %v2715, 1.0
        %v3270 = vadd.f32 %v2717, 1.0
        %v3271 = vadd.f32 %v2719, 1.0
        %v3272 = vadd.f32 %v2721, 1.0
        %v3273 = vadd.f32 %v2723, 1.0
        %v3274 = vadd.f32 %v2725, 1.0
        %v3275 = vadd.f32 %v2727, 1.0
        %v3276 = vadd.f32 %v2729, 1.0
        %v3277 = vadd.f32 %v2731, 1.0
        %v3278 = vadd.f32 %v2733, 1.0
        %v3279 = vadd.f32 %v2735, 1.0
        %v3280 = vadd.f32 %v2737, 1.0
        %v3281 = vadd.f32 %v2739, 1.0
        %v3282 = vadd.f32 %v2741, 1.0
        %v3283 = vadd.f32 %v2743, 1.0
        %v3284 = vadd.f32 %v2745, 1.0
        %v3285 = vadd.f32 %v2747, 1.0
        %v3286 = vadd.f32 %v2749, 1.0
        %v3287 = vadd.f32 %v2751, 1.0
        %v3288 = vadd.f32 %v2753, 1.0
        %v3289 = vadd.f32 %v2755, 1.0
        %v3290 = vadd.f32 %v2757, 1.0
        %v3291 = vadd.f32 %v2759, 1.0
        %v3292 = vadd.f32 %v2761, 1.0
        %v3293 = vadd.f32 %v2763, 1.0
        %v3294 = vadd.f32 %v2765, 1.0
        %v3295 = vadd.f32 %v2767, 1.0
        %v3296 = vadd.f32 %v2769, 1.0
        %v3297 = vadd.f32 %v2771, 1.0
        %v3298 = vadd.f32 %v2773, 1.0
        %v3299 = vadd.f32 %v2775, 1.0
        %v3300 = vadd.f32 %v2777, 1.0
        %v3301 = vadd.f32 %v2779, 1.0
        %v3302 = vadd.f32 %v2781, 1.0
        %v3303 = vadd.f32 %v2783, 1.0
        %v3304 = vadd.f32 %v2785, 1.0
        %v3305 = vadd.f32 %v2787, 1.0
        %v3306 = vadd.f32 %v2789, 1.0
        %v3307 = vadd.f32 %v2791, 1.0
        %v3308 = vadd.f32 %v2793, 1.0
        %v3309 = vadd.f32 %v2795, 1.0
        %v3310 = vadd.f32 %v2797, 1.0
        %v3311 = vadd.f32 %v2799, 1.0
        %v3312 = vadd.f32 %v2801, 1.0
        %v3313 = vadd.f32 %v2803, 1.0
        %v3314 = vadd.f32 %v2805, 1.0
        %v3315 = vadd.f32 %v2807, 1.0
        %v3316 = vadd.f32 %v2809, 1.0
        %v3317 = vadd.f32 %v2811, 1.0
        %v3318 = vadd.f32 %v2813, 1.0
        %v3319 = vadd.f32 %v2815, 1.0
        %v3320 = vadd.f32 %v2817, 1.0
        %v3321 = vadd.f32 %v2819, 1.0
        %v3322 = vadd.f32 %v2821, 1.0
        %v3323 = vadd.f32 %v2823, 1.0
        %v3324 = vadd.f32 %v2825, 1.0
        %v3325 = vadd.f32 %v2827, 1.0
        %v3326 = vadd.f32 %v2829, 1.0
        %v3327 = vadd.f32 %v2831, 1.0
        %v3328 = vadd.f32 %v2833, 1.0
        %v3329 = vadd.f32 %v2835, 1.0
        %v3330 = vadd.f32 %v2837, 1.0
        %v3331 = vadd.f32 %v2839, 1.0
        %v3332 = vadd.f32 %v2841, 1.0
        %v3333 = vadd.f32 %v2843, 1.0
        %v3334 = vadd.f32 %v2845, 1.0
        %v3335 = vadd.f32 %v2847, 1.0
        %v3336 = vadd.f32 %v2849, 1.0
        %v3337 = vadd.f32 %v2851, 1.0
        %v3338 = vadd.f32 %v2853, 1.0
        %v3339 = vadd.f32 %v2855, 1.0
        %v3340 = vadd.f32 %v2857, 1.0
        %v3341 = vadd.f32 %v2859, 1.0
        %v3342 = vadd.f32 %v2861, 1.0
        %v3343 = vadd.f32 %v2863, 1.0
        %v3344 = vadd.f32 %v2865, 1.0
        %v3345 = vadd.f32 %v2867, 1.0
        %v3346 = vadd.f32 %v2869, 1.0
        %v3347 = vadd.f32 %v2871, 1.0
        %v3348 = vadd.f32 %v2873, 1.0
        %v3349 = vadd.f32 %v2875, 1.0
        %v3350 = vadd.f32 %v2877, 1.0
        %v3351 = vadd.f32 %v2879, 1.0
        %v3352 = vadd.f32 %v2881, 1.0
        %v3353 = vadd.f32 %v2883, 1.0
        %v3354 = vadd.f32 %v2885, 1.0
        %v3355 = vadd.f32 %v2887, 1.0
        %v3356 = vadd.f32 %v2889, 1.0
        %v3357 = vadd.f32 %v2891, 1.0
        %v3358 = vadd.f32 %v2893, 1.0
        %v3359 = vadd.f32 %v2895, 1.0
        %v3360 = vadd.f32 %v2897, 1.0
        %v3361 = vadd.f32 %v2899, 1.0
        %v3362 = vadd.f32 %v2901, 1.0
        %v3363 = vadd.f32 %v2903, 1.0
        %v3364 = vadd.f32 %v2905, 1.0
        %v3365 = vadd.f32 %v2907, 1.0
        %v3366 = vadd.f32 %v2909, 1.0
        %v3367 = vadd.f32 %v2911, 1.0
        %v3368 = vadd.f32 %v2913, 1.0
        %v3369 = vadd.f32 %v2915, 1.0
        %v3370 = vadd.f32 %v2917, 1.0
        %v3371 = vadd.f32 %v2919, 1.0
        %v3372 = vadd.f32 %v2921, 1.0
        %v3373 = vadd.f32 %v2923, 1.0
        %v3374 = vadd.f32 %v2925, 1.0
        %v3375 = vadd.f32 %v2927, 1.0
        %v3376 = vadd.f32 %v2929, 1.0
        %v3377 = vadd.f32 %v2931, 1.0
        %v3378 = vadd.f32 %v2933, 1.0
        %v3379 = vadd.f32 %v2935, 1.0
        %v3380 = vadd.f32 %v2937, 1.0
        %v3381 = vadd.f32 %v2939, 1.0
        %v3382 = vadd.f32 %v2941, 1.0
        %v3383 = vadd.f32 %v2943, 1.0
        %v3384 = vadd.f32 %v2945, 1.0
        %v3385 = vadd.f32 %v2947, 1.0
        %v3386 = vadd.f32 %v2949, 1.0
        %v3387 = vadd.f32 %v2951, 1.0
        %v3388 = vadd.f32 %v2953, 1.0
        %v3389 = vadd.f32 %v2955, 1.0
        %v3390 = vadd.f32 %v2957, 1.0
        %v3391 = vadd.f32 %v2959, 1.0
        %v3392 = vadd.f32 %v2961, 1.0
        %v3393 = vadd.f32 %v2963, 1.0
        %v3394 = vadd.f32 %v2965, 1.0
        %v3395 = vadd.f32 %v2967, 1.0
        %v3396 = vadd.f32 %v2969, 1.0
        %v3397 = vadd.f32 %v2971, 1.0
        %v3398 = vadd.f32 %v2973, 1.0
        %v3399 = vadd.f32 %v2975, 1.0
        %v3400 = vadd.f32 %v2977, 1.0
        %v3401 = vadd.f32 %v2979, 1.0
        %v3402 = vadd.f32 %v2981, 1.0
        %v3403 = vadd.f32 %v2983, 1.0
        %v3404 = vadd.f32 %v2985, 1.0
        %v3405 = vadd.f32 %v2987, 1.0
        %v3406 = vadd.f32 %v2989, 1.0
        %v3407 = vadd.f32 %v2991, 1.0
        %v3408 = vadd.f32 %v2993, 1.0
        %v3409 = vadd.f32 %v2995, 1.0
        %v3410 = vadd.f32 %v2997, 1.0
        %v3411 = vadd.f32 %v2999, 1.0
        %v3412 = vadd.f32 %v3001, 1.0
        %v3413 = vadd.f32 %v3003, 1.0
        %v3414 = vadd.f32 %v3005, 1.0
        %v3415 = vadd.f32 %v3007, 1.0
        %v3416 = vadd.f32 %v3009, 1.0
        %v3417 = vadd.f32 %v3011, 1.0
        %v3418 = vadd.f32 %v3013, 1.0
        %v3419 = vadd.f32 %v3015, 1.0
        %v3420 = vadd.f32 %v3017, 1.0
        %v3421 = vadd.f32 %v3019, 1.0
        %v3422 = vadd.f32 %v3021, 1.0
        %v3423 = vadd.f32 %v3023, 1.0
        %v3424 = vadd.f32 %v3025, 1.0
        %v3425 = vadd.f32 %v3027, 1.0
        %v3426 = vadd.f32 %v3029, 1.0
        %v3427 = vadd.f32 %v3031, 1.0
        %v3428 = vadd.f32 %v3033, 1.0
        %v3429 = vadd.f32 %v3035, 1.0
        %v3430 = vadd.f32 %v3037, 1.0
        %v3431 = vadd.f32 %v3039, 1.0
        %v3432 = vadd.f32 %v3041, 1.0
        %v3433 = vadd.f32 %v3043, 1.0
        %v3434 = vadd.f32 %v3045, 1.0
        %v3435 = vadd.f32 %v3047, 1.0
        %v3436 = vadd.f32 %v3049, 1.0
        %v3437 = vadd.f32 %v3051, 1.0
        %v3438 = vadd.f32 %v3053, 1.0
        %v3439 = vadd.f32 %v3055, 1.0
        %v3440 = vrcp.pop %v3056
        %v3441 = vmul.f32 1.0, %v3440
        %v3442 = vrcp.pop %v3057
        %v3443 = vmul.f32 1.0, %v3442
        %v3444 = vrcp.pop %v3058
        %v3445 = vmul.f32 1.0, %v3444
        %v3446 = vrcp.pop %v3059
        %v3447 = vmul.f32 1.0, %v3446
        %v3448 = vrcp.pop %v3060
        %v3449 = vmul.f32 1.0, %v3448
        %v3450 = vrcp.pop %v3061
        %v3451 = vmul.f32 1.0, %v3450
        %v3452 = vrcp.pop %v3062
        %v3453 = vmul.f32 1.0, %v3452
        %v3454 = vrcp.pop %v3063
        %v3455 = vmul.f32 1.0, %v3454
        %v3456 = vrcp.pop %v3064
        %v3457 = vmul.f32 1.0, %v3456
        %v3458 = vrcp.pop %v3065
        %v3459 = vmul.f32 1.0, %v3458
        %v3460 = vrcp.pop %v3066
        %v3461 = vmul.f32 1.0, %v3460
        %v3462 = vrcp.pop %v3067
        %v3463 = vmul.f32 1.0, %v3462
        %v3464 = vrcp.pop %v3068
        %v3465 = vmul.f32 1.0, %v3464
        %v3466 = vrcp.pop %v3069
        %v3467 = vmul.f32 1.0, %v3466
        %v3468 = vrcp.pop %v3070
        %v3469 = vmul.f32 1.0, %v3468
        %v3470 = vrcp.pop %v3071
        %v3471 = vmul.f32 1.0, %v3470
        %v3472 = vrcp.pop %v3072
        %v3473 = vmul.f32 1.0, %v3472
        %v3474 = vrcp.pop %v3073
        %v3475 = vmul.f32 1.0, %v3474
        %v3476 = vrcp.pop %v3074
        %v3477 = vmul.f32 1.0, %v3476
        %v3478 = vrcp.pop %v3075
        %v3479 = vmul.f32 1.0, %v3478
        %v3480 = vrcp.pop %v3076
        %v3481 = vmul.f32 1.0, %v3480
        %v3482 = vrcp.pop %v3077
        %v3483 = vmul.f32 1.0, %v3482
        %v3484 = vrcp.pop %v3078
        %v3485 = vmul.f32 1.0, %v3484
        %v3486 = vrcp.pop %v3079
        %v3487 = vmul.f32 1.0, %v3486
        %v3488 = vrcp.pop %v3080
        %v3489 = vmul.f32 1.0, %v3488
        %v3490 = vrcp.pop %v3081
        %v3491 = vmul.f32 1.0, %v3490
        %v3492 = vrcp.pop %v3082
        %v3493 = vmul.f32 1.0, %v3492
        %v3494 = vrcp.pop %v3083
        %v3495 = vmul.f32 1.0, %v3494
        %v3496 = vrcp.pop %v3084
        %v3497 = vmul.f32 1.0, %v3496
        %v3498 = vrcp.pop %v3085
        %v3499 = vmul.f32 1.0, %v3498
        %v3500 = vrcp.pop %v3086
        %v3501 = vmul.f32 1.0, %v3500
        %v3502 = vrcp.pop %v3087
        %v3503 = vmul.f32 1.0, %v3502
        %v3504 = vrcp.pop %v3088
        %v3505 = vmul.f32 1.0, %v3504
        %v3506 = vrcp.pop %v3089
        %v3507 = vmul.f32 1.0, %v3506
        %v3508 = vrcp.pop %v3090
        %v3509 = vmul.f32 1.0, %v3508
        %v3510 = vrcp.pop %v3091
        %v3511 = vmul.f32 1.0, %v3510
        %v3512 = vrcp.pop %v3092
        %v3513 = vmul.f32 1.0, %v3512
        %v3514 = vrcp.pop %v3093
        %v3515 = vmul.f32 1.0, %v3514
        %v3516 = vrcp.pop %v3094
        %v3517 = vmul.f32 1.0, %v3516
        %v3518 = vrcp.pop %v3095
        %v3519 = vmul.f32 1.0, %v3518
        %v3520 = vrcp.pop %v3096
        %v3521 = vmul.f32 1.0, %v3520
        %v3522 = vrcp.pop %v3097
        %v3523 = vmul.f32 1.0, %v3522
        %v3524 = vrcp.pop %v3098
        %v3525 = vmul.f32 1.0, %v3524
        %v3526 = vrcp.pop %v3099
        %v3527 = vmul.f32 1.0, %v3526
        %v3528 = vrcp.pop %v3100
        %v3529 = vmul.f32 1.0, %v3528
        %v3530 = vrcp.pop %v3101
        %v3531 = vmul.f32 1.0, %v3530
        %v3532 = vrcp.pop %v3102
        %v3533 = vmul.f32 1.0, %v3532
        %v3534 = vrcp.pop %v3103
        %v3535 = vmul.f32 1.0, %v3534
        %v3536 = vrcp.pop %v3104
        %v3537 = vmul.f32 1.0, %v3536
        %v3538 = vrcp.pop %v3105
        %v3539 = vmul.f32 1.0, %v3538
        %v3540 = vrcp.pop %v3106
        %v3541 = vmul.f32 1.0, %v3540
        %v3542 = vrcp.pop %v3107
        %v3543 = vmul.f32 1.0, %v3542
        %v3544 = vrcp.pop %v3108
        %v3545 = vmul.f32 1.0, %v3544
        %v3546 = vrcp.pop %v3109
        %v3547 = vmul.f32 1.0, %v3546
        %v3548 = vrcp.pop %v3110
        %v3549 = vmul.f32 1.0, %v3548
        %v3550 = vrcp.pop %v3111
        %v3551 = vmul.f32 1.0, %v3550
        %v3552 = vrcp.pop %v3112
        %v3553 = vmul.f32 1.0, %v3552
        %v3554 = vrcp.pop %v3113
        %v3555 = vmul.f32 1.0, %v3554
        %v3556 = vrcp.pop %v3114
        %v3557 = vmul.f32 1.0, %v3556
        %v3558 = vrcp.pop %v3115
        %v3559 = vmul.f32 1.0, %v3558
        %v3560 = vrcp.pop %v3116
        %v3561 = vmul.f32 1.0, %v3560
        %v3562 = vrcp.pop %v3117
        %v3563 = vmul.f32 1.0, %v3562
        %v3564 = vrcp.pop %v3118
        %v3565 = vmul.f32 1.0, %v3564
        %v3566 = vrcp.pop %v3119
        %v3567 = vmul.f32 1.0, %v3566
        %v3568 = vrcp.pop %v3120
        %v3569 = vmul.f32 1.0, %v3568
        %v3570 = vrcp.pop %v3121
        %v3571 = vmul.f32 1.0, %v3570
        %v3572 = vrcp.pop %v3122
        %v3573 = vmul.f32 1.0, %v3572
        %v3574 = vrcp.pop %v3123
        %v3575 = vmul.f32 1.0, %v3574
        %v3576 = vrcp.pop %v3124
        %v3577 = vmul.f32 1.0, %v3576
        %v3578 = vrcp.pop %v3125
        %v3579 = vmul.f32 1.0, %v3578
        %v3580 = vrcp.pop %v3126
        %v3581 = vmul.f32 1.0, %v3580
        %v3582 = vrcp.pop %v3127
        %v3583 = vmul.f32 1.0, %v3582
        %v3584 = vrcp.pop %v3128
        %v3585 = vmul.f32 1.0, %v3584
        %v3586 = vrcp.pop %v3129
        %v3587 = vmul.f32 1.0, %v3586
        %v3588 = vrcp.pop %v3130
        %v3589 = vmul.f32 1.0, %v3588
        %v3590 = vrcp.pop %v3131
        %v3591 = vmul.f32 1.0, %v3590
        %v3592 = vrcp.pop %v3132
        %v3593 = vmul.f32 1.0, %v3592
        %v3594 = vrcp.pop %v3133
        %v3595 = vmul.f32 1.0, %v3594
        %v3596 = vrcp.pop %v3134
        %v3597 = vmul.f32 1.0, %v3596
        %v3598 = vrcp.pop %v3135
        %v3599 = vmul.f32 1.0, %v3598
        %v3600 = vrcp.pop %v3136
        %v3601 = vmul.f32 1.0, %v3600
        %v3602 = vrcp.pop %v3137
        %v3603 = vmul.f32 1.0, %v3602
        %v3604 = vrcp.pop %v3138
        %v3605 = vmul.f32 1.0, %v3604
        %v3606 = vrcp.pop %v3139
        %v3607 = vmul.f32 1.0, %v3606
        %v3608 = vrcp.pop %v3140
        %v3609 = vmul.f32 1.0, %v3608
        %v3610 = vrcp.pop %v3141
        %v3611 = vmul.f32 1.0, %v3610
        %v3612 = vrcp.pop %v3142
        %v3613 = vmul.f32 1.0, %v3612
        %v3614 = vrcp.pop %v3143
        %v3615 = vmul.f32 1.0, %v3614
        %v3616 = vrcp.pop %v3144
        %v3617 = vmul.f32 1.0, %v3616
        %v3618 = vrcp.pop %v3145
        %v3619 = vmul.f32 1.0, %v3618
        %v3620 = vrcp.pop %v3146
        %v3621 = vmul.f32 1.0, %v3620
        %v3622 = vrcp.pop %v3147
        %v3623 = vmul.f32 1.0, %v3622
        %v3624 = vrcp.pop %v3148
        %v3625 = vmul.f32 1.0, %v3624
        %v3626 = vrcp.pop %v3149
        %v3627 = vmul.f32 1.0, %v3626
        %v3628 = vrcp.pop %v3150
        %v3629 = vmul.f32 1.0, %v3628
        %v3630 = vrcp.pop %v3151
        %v3631 = vmul.f32 1.0, %v3630
        %v3632 = vrcp.pop %v3152
        %v3633 = vmul.f32 1.0, %v3632
        %v3634 = vrcp.pop %v3153
        %v3635 = vmul.f32 1.0, %v3634
        %v3636 = vrcp.pop %v3154
        %v3637 = vmul.f32 1.0, %v3636
        %v3638 = vrcp.pop %v3155
        %v3639 = vmul.f32 1.0, %v3638
        %v3640 = vrcp.pop %v3156
        %v3641 = vmul.f32 1.0, %v3640
        %v3642 = vrcp.pop %v3157
        %v3643 = vmul.f32 1.0, %v3642
        %v3644 = vrcp.pop %v3158
        %v3645 = vmul.f32 1.0, %v3644
        %v3646 = vrcp.pop %v3159
        %v3647 = vmul.f32 1.0, %v3646
        %v3648 = vrcp.pop %v3160
        %v3649 = vmul.f32 1.0, %v3648
        %v3650 = vrcp.pop %v3161
        %v3651 = vmul.f32 1.0, %v3650
        %v3652 = vrcp.pop %v3162
        %v3653 = vmul.f32 1.0, %v3652
        %v3654 = vrcp.pop %v3163
        %v3655 = vmul.f32 1.0, %v3654
        %v3656 = vrcp.pop %v3164
        %v3657 = vmul.f32 1.0, %v3656
        %v3658 = vrcp.pop %v3165
        %v3659 = vmul.f32 1.0, %v3658
        %v3660 = vrcp.pop %v3166
        %v3661 = vmul.f32 1.0, %v3660
        %v3662 = vrcp.pop %v3167
        %v3663 = vmul.f32 1.0, %v3662
        %v3664 = vrcp.pop %v3168
        %v3665 = vmul.f32 1.0, %v3664
        %v3666 = vrcp.pop %v3169
        %v3667 = vmul.f32 1.0, %v3666
        %v3668 = vrcp.pop %v3170
        %v3669 = vmul.f32 1.0, %v3668
        %v3670 = vrcp.pop %v3171
        %v3671 = vmul.f32 1.0, %v3670
        %v3672 = vrcp.pop %v3172
        %v3673 = vmul.f32 1.0, %v3672
        %v3674 = vrcp.pop %v3173
        %v3675 = vmul.f32 1.0, %v3674
        %v3676 = vrcp.pop %v3174
        %v3677 = vmul.f32 1.0, %v3676
        %v3678 = vrcp.pop %v3175
        %v3679 = vmul.f32 1.0, %v3678
        %v3680 = vrcp.pop %v3176
        %v3681 = vmul.f32 1.0, %v3680
        %v3682 = vrcp.pop %v3177
        %v3683 = vmul.f32 1.0, %v3682
        %v3684 = vrcp.pop %v3178
        %v3685 = vmul.f32 1.0, %v3684
        %v3686 = vrcp.pop %v3179
        %v3687 = vmul.f32 1.0, %v3686
        %v3688 = vrcp.pop %v3180
        %v3689 = vmul.f32 1.0, %v3688
        %v3690 = vrcp.pop %v3181
        %v3691 = vmul.f32 1.0, %v3690
        %v3692 = vrcp.pop %v3182
        %v3693 = vmul.f32 1.0, %v3692
        %v3694 = vrcp.pop %v3183
        %v3695 = vmul.f32 1.0, %v3694
        %v3696 = vrcp.pop %v3184
        %v3697 = vmul.f32 1.0, %v3696
        %v3698 = vrcp.pop %v3185
        %v3699 = vmul.f32 1.0, %v3698
        %v3700 = vrcp.pop %v3186
        %v3701 = vmul.f32 1.0, %v3700
        %v3702 = vrcp.pop %v3187
        %v3703 = vmul.f32 1.0, %v3702
        %v3704 = vrcp.pop %v3188
        %v3705 = vmul.f32 1.0, %v3704
        %v3706 = vrcp.pop %v3189
        %v3707 = vmul.f32 1.0, %v3706
        %v3708 = vrcp.pop %v3190
        %v3709 = vmul.f32 1.0, %v3708
        %v3710 = vrcp.pop %v3191
        %v3711 = vmul.f32 1.0, %v3710
        %v3712 = vrcp.pop %v3192
        %v3713 = vmul.f32 1.0, %v3712
        %v3714 = vrcp.pop %v3193
        %v3715 = vmul.f32 1.0, %v3714
        %v3716 = vrcp.pop %v3194
        %v3717 = vmul.f32 1.0, %v3716
        %v3718 = vrcp.pop %v3195
        %v3719 = vmul.f32 1.0, %v3718
        %v3720 = vrcp.pop %v3196
        %v3721 = vmul.f32 1.0, %v3720
        %v3722 = vrcp.pop %v3197
        %v3723 = vmul.f32 1.0, %v3722
        %v3724 = vrcp.pop %v3198
        %v3725 = vmul.f32 1.0, %v3724
        %v3726 = vrcp.pop %v3199
        %v3727 = vmul.f32 1.0, %v3726
        %v3728 = vrcp.pop %v3200
        %v3729 = vmul.f32 1.0, %v3728
        %v3730 = vrcp.pop %v3201
        %v3731 = vmul.f32 1.0, %v3730
        %v3732 = vrcp.pop %v3202
        %v3733 = vmul.f32 1.0, %v3732
        %v3734 = vrcp.pop %v3203
        %v3735 = vmul.f32 1.0, %v3734
        %v3736 = vrcp.pop %v3204
        %v3737 = vmul.f32 1.0, %v3736
        %v3738 = vrcp.pop %v3205
        %v3739 = vmul.f32 1.0, %v3738
        %v3740 = vrcp.pop %v3206
        %v3741 = vmul.f32 1.0, %v3740
        %v3742 = vrcp.pop %v3207
        %v3743 = vmul.f32 1.0, %v3742
        %v3744 = vrcp.pop %v3208
        %v3745 = vmul.f32 1.0, %v3744
        %v3746 = vrcp.pop %v3209
        %v3747 = vmul.f32 1.0, %v3746
        %v3748 = vrcp.pop %v3210
        %v3749 = vmul.f32 1.0, %v3748
        %v3750 = vrcp.pop %v3211
        %v3751 = vmul.f32 1.0, %v3750
        %v3752 = vrcp.pop %v3212
        %v3753 = vmul.f32 1.0, %v3752
        %v3754 = vrcp.pop %v3213
        %v3755 = vmul.f32 1.0, %v3754
        %v3756 = vrcp.pop %v3214
        %v3757 = vmul.f32 1.0, %v3756
        %v3758 = vrcp.pop %v3215
        %v3759 = vmul.f32 1.0, %v3758
        %v3760 = vrcp.pop %v3216
        %v3761 = vmul.f32 1.0, %v3760
        %v3762 = vrcp.pop %v3217
        %v3763 = vmul.f32 1.0, %v3762
        %v3764 = vrcp.pop %v3218
        %v3765 = vmul.f32 1.0, %v3764
        %v3766 = vrcp.pop %v3219
        %v3767 = vmul.f32 1.0, %v3766
        %v3768 = vrcp.pop %v3220
        %v3769 = vmul.f32 1.0, %v3768
        %v3770 = vrcp.pop %v3221
        %v3771 = vmul.f32 1.0, %v3770
        %v3772 = vrcp.pop %v3222
        %v3773 = vmul.f32 1.0, %v3772
        %v3774 = vrcp.pop %v3223
        %v3775 = vmul.f32 1.0, %v3774
        %v3776 = vrcp.pop %v3224
        %v3777 = vmul.f32 1.0, %v3776
        %v3778 = vrcp.pop %v3225
        %v3779 = vmul.f32 1.0, %v3778
        %v3780 = vrcp.pop %v3226
        %v3781 = vmul.f32 1.0, %v3780
        %v3782 = vrcp.pop %v3227
        %v3783 = vmul.f32 1.0, %v3782
        %v3784 = vrcp.pop %v3228
        %v3785 = vmul.f32 1.0, %v3784
        %v3786 = vrcp.pop %v3229
        %v3787 = vmul.f32 1.0, %v3786
        %v3788 = vrcp.pop %v3230
        %v3789 = vmul.f32 1.0, %v3788
        %v3790 = vrcp.pop %v3231
        %v3791 = vmul.f32 1.0, %v3790
        %v3792 = vrcp.pop %v3232
        %v3793 = vmul.f32 1.0, %v3792
        %v3794 = vrcp.pop %v3233
        %v3795 = vmul.f32 1.0, %v3794
        %v3796 = vrcp.pop %v3234
        %v3797 = vmul.f32 1.0, %v3796
        %v3798 = vrcp.pop %v3235
        %v3799 = vmul.f32 1.0, %v3798
        %v3800 = vrcp.pop %v3236
        %v3801 = vmul.f32 1.0, %v3800
        %v3802 = vrcp.pop %v3237
        %v3803 = vmul.f32 1.0, %v3802
        %v3804 = vrcp.pop %v3238
        %v3805 = vmul.f32 1.0, %v3804
        %v3806 = vrcp.pop %v3239
        %v3807 = vmul.f32 1.0, %v3806
        %v3808 = vrcp.pop %v3240
        %v3809 = vmul.f32 1.0, %v3808
        %v3810 = vrcp.pop %v3241
        %v3811 = vmul.f32 1.0, %v3810
        %v3812 = vrcp.pop %v3242
        %v3813 = vmul.f32 1.0, %v3812
        %v3814 = vrcp.pop %v3243
        %v3815 = vmul.f32 1.0, %v3814
        %v3816 = vrcp.pop %v3244
        %v3817 = vmul.f32 1.0, %v3816
        %v3818 = vrcp.pop %v3245
        %v3819 = vmul.f32 1.0, %v3818
        %v3820 = vrcp.pop %v3246
        %v3821 = vmul.f32 1.0, %v3820
        %v3822 = vrcp.pop %v3247
        %v3823 = vmul.f32 1.0, %v3822
        %v3824 = vrcp.pop %v3248
        %v3825 = vmul.f32 1.0, %v3824
        %v3826 = vrcp.pop %v3249
        %v3827 = vmul.f32 1.0, %v3826
        %v3828 = vrcp.pop %v3250
        %v3829 = vmul.f32 1.0, %v3828
        %v3830 = vrcp.pop %v3251
        %v3831 = vmul.f32 1.0, %v3830
        %v3832 = vrcp.pop %v3252
        %v3833 = vmul.f32 1.0, %v3832
        %v3834 = vrcp.pop %v3253
        %v3835 = vmul.f32 1.0, %v3834
        %v3836 = vrcp.pop %v3254
        %v3837 = vmul.f32 1.0, %v3836
        %v3838 = vrcp.pop %v3255
        %v3839 = vmul.f32 1.0, %v3838
        %v3840 = vrcp.pop %v3256
        %v3841 = vmul.f32 1.0, %v3840
        %v3842 = vrcp.pop %v3257
        %v3843 = vmul.f32 1.0, %v3842
        %v3844 = vrcp.pop %v3258
        %v3845 = vmul.f32 1.0, %v3844
        %v3846 = vrcp.pop %v3259
        %v3847 = vmul.f32 1.0, %v3846
        %v3848 = vrcp.pop %v3260
        %v3849 = vmul.f32 1.0, %v3848
        %v3850 = vrcp.pop %v3261
        %v3851 = vmul.f32 1.0, %v3850
        %v3852 = vrcp.pop %v3262
        %v3853 = vmul.f32 1.0, %v3852
        %v3854 = vrcp.pop %v3263
        %v3855 = vmul.f32 1.0, %v3854
        %v3856 = vrcp.pop %v3264
        %v3857 = vmul.f32 1.0, %v3856
        %v3858 = vrcp.pop %v3265
        %v3859 = vmul.f32 1.0, %v3858
        %v3860 = vrcp.pop %v3266
        %v3861 = vmul.f32 1.0, %v3860
        %v3862 = vrcp.pop %v3267
        %v3863 = vmul.f32 1.0, %v3862
        %v3864 = vrcp.pop %v3268
        %v3865 = vmul.f32 1.0, %v3864
        %v3866 = vrcp.pop %v3269
        %v3867 = vmul.f32 1.0, %v3866
        %v3868 = vrcp.pop %v3270
        %v3869 = vmul.f32 1.0, %v3868
        %v3870 = vrcp.pop %v3271
        %v3871 = vmul.f32 1.0, %v3870
        %v3872 = vrcp.pop %v3272
        %v3873 = vmul.f32 1.0, %v3872
        %v3874 = vrcp.pop %v3273
        %v3875 = vmul.f32 1.0, %v3874
        %v3876 = vrcp.pop %v3274
        %v3877 = vmul.f32 1.0, %v3876
        %v3878 = vrcp.pop %v3275
        %v3879 = vmul.f32 1.0, %v3878
        %v3880 = vrcp.pop %v3276
        %v3881 = vmul.f32 1.0, %v3880
        %v3882 = vrcp.pop %v3277
        %v3883 = vmul.f32 1.0, %v3882
        %v3884 = vrcp.pop %v3278
        %v3885 = vmul.f32 1.0, %v3884
        %v3886 = vrcp.pop %v3279
        %v3887 = vmul.f32 1.0, %v3886
        %v3888 = vrcp.pop %v3280
        %v3889 = vmul.f32 1.0, %v3888
        %v3890 = vrcp.pop %v3281
        %v3891 = vmul.f32 1.0, %v3890
        %v3892 = vrcp.pop %v3282
        %v3893 = vmul.f32 1.0, %v3892
        %v3894 = vrcp.pop %v3283
        %v3895 = vmul.f32 1.0, %v3894
        %v3896 = vrcp.pop %v3284
        %v3897 = vmul.f32 1.0, %v3896
        %v3898 = vrcp.pop %v3285
        %v3899 = vmul.f32 1.0, %v3898
        %v3900 = vrcp.pop %v3286
        %v3901 = vmul.f32 1.0, %v3900
        %v3902 = vrcp.pop %v3287
        %v3903 = vmul.f32 1.0, %v3902
        %v3904 = vrcp.pop %v3288
        %v3905 = vmul.f32 1.0, %v3904
        %v3906 = vrcp.pop %v3289
        %v3907 = vmul.f32 1.0, %v3906
        %v3908 = vrcp.pop %v3290
        %v3909 = vmul.f32 1.0, %v3908
        %v3910 = vrcp.pop %v3291
        %v3911 = vmul.f32 1.0, %v3910
        %v3912 = vrcp.pop %v3292
        %v3913 = vmul.f32 1.0, %v3912
        %v3914 = vrcp.pop %v3293
        %v3915 = vmul.f32 1.0, %v3914
        %v3916 = vrcp.pop %v3294
        %v3917 = vmul.f32 1.0, %v3916
        %v3918 = vrcp.pop %v3295
        %v3919 = vmul.f32 1.0, %v3918
        %v3920 = vrcp.pop %v3296
        %v3921 = vmul.f32 1.0, %v3920
        %v3922 = vrcp.pop %v3297
        %v3923 = vmul.f32 1.0, %v3922
        %v3924 = vrcp.pop %v3298
        %v3925 = vmul.f32 1.0, %v3924
        %v3926 = vrcp.pop %v3299
        %v3927 = vmul.f32 1.0, %v3926
        %v3928 = vrcp.pop %v3300
        %v3929 = vmul.f32 1.0, %v3928
        %v3930 = vrcp.pop %v3301
        %v3931 = vmul.f32 1.0, %v3930
        %v3932 = vrcp.pop %v3302
        %v3933 = vmul.f32 1.0, %v3932
        %v3934 = vrcp.pop %v3303
        %v3935 = vmul.f32 1.0, %v3934
        %v3936 = vrcp.pop %v3304
        %v3937 = vmul.f32 1.0, %v3936
        %v3938 = vrcp.pop %v3305
        %v3939 = vmul.f32 1.0, %v3938
        %v3940 = vrcp.pop %v3306
        %v3941 = vmul.f32 1.0, %v3940
        %v3942 = vrcp.pop %v3307
        %v3943 = vmul.f32 1.0, %v3942
        %v3944 = vrcp.pop %v3308
        %v3945 = vmul.f32 1.0, %v3944
        %v3946 = vrcp.pop %v3309
        %v3947 = vmul.f32 1.0, %v3946
        %v3948 = vrcp.pop %v3310
        %v3949 = vmul.f32 1.0, %v3948
        %v3950 = vrcp.pop %v3311
        %v3951 = vmul.f32 1.0, %v3950
        %v3952 = vrcp.pop %v3312
        %v3953 = vmul.f32 1.0, %v3952
        %v3954 = vrcp.pop %v3313
        %v3955 = vmul.f32 1.0, %v3954
        %v3956 = vrcp.pop %v3314
        %v3957 = vmul.f32 1.0, %v3956
        %v3958 = vrcp.pop %v3315
        %v3959 = vmul.f32 1.0, %v3958
        %v3960 = vrcp.pop %v3316
        %v3961 = vmul.f32 1.0, %v3960
        %v3962 = vrcp.pop %v3317
        %v3963 = vmul.f32 1.0, %v3962
        %v3964 = vrcp.pop %v3318
        %v3965 = vmul.f32 1.0, %v3964
        %v3966 = vrcp.pop %v3319
        %v3967 = vmul.f32 1.0, %v3966
        %v3968 = vrcp.pop %v3320
        %v3969 = vmul.f32 1.0, %v3968
        %v3970 = vrcp.pop %v3321
        %v3971 = vmul.f32 1.0, %v3970
        %v3972 = vrcp.pop %v3322
        %v3973 = vmul.f32 1.0, %v3972
        %v3974 = vrcp.pop %v3323
        %v3975 = vmul.f32 1.0, %v3974
        %v3976 = vrcp.pop %v3324
        %v3977 = vmul.f32 1.0, %v3976
        %v3978 = vrcp.pop %v3325
        %v3979 = vmul.f32 1.0, %v3978
        %v3980 = vrcp.pop %v3326
        %v3981 = vmul.f32 1.0, %v3980
        %v3982 = vrcp.pop %v3327
        %v3983 = vmul.f32 1.0, %v3982
        %v3984 = vrcp.pop %v3328
        %v3985 = vmul.f32 1.0, %v3984
        %v3986 = vrcp.pop %v3329
        %v3987 = vmul.f32 1.0, %v3986
        %v3988 = vrcp.pop %v3330
        %v3989 = vmul.f32 1.0, %v3988
        %v3990 = vrcp.pop %v3331
        %v3991 = vmul.f32 1.0, %v3990
        %v3992 = vrcp.pop %v3332
        %v3993 = vmul.f32 1.0, %v3992
        %v3994 = vrcp.pop %v3333
        %v3995 = vmul.f32 1.0, %v3994
        %v3996 = vrcp.pop %v3334
        %v3997 = vmul.f32 1.0, %v3996
        %v3998 = vrcp.pop %v3335
        %v3999 = vmul.f32 1.0, %v3998
        %v4000 = vrcp.pop %v3336
        %v4001 = vmul.f32 1.0, %v4000
        %v4002 = vrcp.pop %v3337
        %v4003 = vmul.f32 1.0, %v4002
        %v4004 = vrcp.pop %v3338
        %v4005 = vmul.f32 1.0, %v4004
        %v4006 = vrcp.pop %v3339
        %v4007 = vmul.f32 1.0, %v4006
        %v4008 = vrcp.pop %v3340
        %v4009 = vmul.f32 1.0, %v4008
        %v4010 = vrcp.pop %v3341
        %v4011 = vmul.f32 1.0, %v4010
        %v4012 = vrcp.pop %v3342
        %v4013 = vmul.f32 1.0, %v4012
        %v4014 = vrcp.pop %v3343
        %v4015 = vmul.f32 1.0, %v4014
        %v4016 = vrcp.pop %v3344
        %v4017 = vmul.f32 1.0, %v4016
        %v4018 = vrcp.pop %v3345
        %v4019 = vmul.f32 1.0, %v4018
        %v4020 = vrcp.pop %v3346
        %v4021 = vmul.f32 1.0, %v4020
        %v4022 = vrcp.pop %v3347
        %v4023 = vmul.f32 1.0, %v4022
        %v4024 = vrcp.pop %v3348
        %v4025 = vmul.f32 1.0, %v4024
        %v4026 = vrcp.pop %v3349
        %v4027 = vmul.f32 1.0, %v4026
        %v4028 = vrcp.pop %v3350
        %v4029 = vmul.f32 1.0, %v4028
        %v4030 = vrcp.pop %v3351
        %v4031 = vmul.f32 1.0, %v4030
        %v4032 = vrcp.pop %v3352
        %v4033 = vmul.f32 1.0, %v4032
        %v4034 = vrcp.pop %v3353
        %v4035 = vmul.f32 1.0, %v4034
        %v4036 = vrcp.pop %v3354
        %v4037 = vmul.f32 1.0, %v4036
        %v4038 = vrcp.pop %v3355
        %v4039 = vmul.f32 1.0, %v4038
        %v4040 = vrcp.pop %v3356
        %v4041 = vmul.f32 1.0, %v4040
        %v4042 = vrcp.pop %v3357
        %v4043 = vmul.f32 1.0, %v4042
        %v4044 = vrcp.pop %v3358
        %v4045 = vmul.f32 1.0, %v4044
        %v4046 = vrcp.pop %v3359
        %v4047 = vmul.f32 1.0, %v4046
        %v4048 = vrcp.pop %v3360
        %v4049 = vmul.f32 1.0, %v4048
        %v4050 = vrcp.pop %v3361
        %v4051 = vmul.f32 1.0, %v4050
        %v4052 = vrcp.pop %v3362
        %v4053 = vmul.f32 1.0, %v4052
        %v4054 = vrcp.pop %v3363
        %v4055 = vmul.f32 1.0, %v4054
        %v4056 = vrcp.pop %v3364
        %v4057 = vmul.f32 1.0, %v4056
        %v4058 = vrcp.pop %v3365
        %v4059 = vmul.f32 1.0, %v4058
        %v4060 = vrcp.pop %v3366
        %v4061 = vmul.f32 1.0, %v4060
        %v4062 = vrcp.pop %v3367
        %v4063 = vmul.f32 1.0, %v4062
        %v4064 = vrcp.pop %v3368
        %v4065 = vmul.f32 1.0, %v4064
        %v4066 = vrcp.pop %v3369
        %v4067 = vmul.f32 1.0, %v4066
        %v4068 = vrcp.pop %v3370
        %v4069 = vmul.f32 1.0, %v4068
        %v4070 = vrcp.pop %v3371
        %v4071 = vmul.f32 1.0, %v4070
        %v4072 = vrcp.pop %v3372
        %v4073 = vmul.f32 1.0, %v4072
        %v4074 = vrcp.pop %v3373
        %v4075 = vmul.f32 1.0, %v4074
        %v4076 = vrcp.pop %v3374
        %v4077 = vmul.f32 1.0, %v4076
        %v4078 = vrcp.pop %v3375
        %v4079 = vmul.f32 1.0, %v4078
        %v4080 = vrcp.pop %v3376
        %v4081 = vmul.f32 1.0, %v4080
        %v4082 = vrcp.pop %v3377
        %v4083 = vmul.f32 1.0, %v4082
        %v4084 = vrcp.pop %v3378
        %v4085 = vmul.f32 1.0, %v4084
        %v4086 = vrcp.pop %v3379
        %v4087 = vmul.f32 1.0, %v4086
        %v4088 = vrcp.pop %v3380
        %v4089 = vmul.f32 1.0, %v4088
        %v4090 = vrcp.pop %v3381
        %v4091 = vmul.f32 1.0, %v4090
        %v4092 = vrcp.pop %v3382
        %v4093 = vmul.f32 1.0, %v4092
        %v4094 = vrcp.pop %v3383
        %v4095 = vmul.f32 1.0, %v4094
        %v4096 = vrcp.pop %v3384
        %v4097 = vmul.f32 1.0, %v4096
        %v4098 = vrcp.pop %v3385
        %v4099 = vmul.f32 1.0, %v4098
        %v4100 = vrcp.pop %v3386
        %v4101 = vmul.f32 1.0, %v4100
        %v4102 = vrcp.pop %v3387
        %v4103 = vmul.f32 1.0, %v4102
        %v4104 = vrcp.pop %v3388
        %v4105 = vmul.f32 1.0, %v4104
        %v4106 = vrcp.pop %v3389
        %v4107 = vmul.f32 1.0, %v4106
        %v4108 = vrcp.pop %v3390
        %v4109 = vmul.f32 1.0, %v4108
        %v4110 = vrcp.pop %v3391
        %v4111 = vmul.f32 1.0, %v4110
        %v4112 = vrcp.pop %v3392
        %v4113 = vmul.f32 1.0, %v4112
        %v4114 = vrcp.pop %v3393
        %v4115 = vmul.f32 1.0, %v4114
        %v4116 = vrcp.pop %v3394
        %v4117 = vmul.f32 1.0, %v4116
        %v4118 = vrcp.pop %v3395
        %v4119 = vmul.f32 1.0, %v4118
        %v4120 = vrcp.pop %v3396
        %v4121 = vmul.f32 1.0, %v4120
        %v4122 = vrcp.pop %v3397
        %v4123 = vmul.f32 1.0, %v4122
        %v4124 = vrcp.pop %v3398
        %v4125 = vmul.f32 1.0, %v4124
        %v4126 = vrcp.pop %v3399
        %v4127 = vmul.f32 1.0, %v4126
        %v4128 = vrcp.pop %v3400
        %v4129 = vmul.f32 1.0, %v4128
        %v4130 = vrcp.pop %v3401
        %v4131 = vmul.f32 1.0, %v4130
        %v4132 = vrcp.pop %v3402
        %v4133 = vmul.f32 1.0, %v4132
        %v4134 = vrcp.pop %v3403
        %v4135 = vmul.f32 1.0, %v4134
        %v4136 = vrcp.pop %v3404
        %v4137 = vmul.f32 1.0, %v4136
        %v4138 = vrcp.pop %v3405
        %v4139 = vmul.f32 1.0, %v4138
        %v4140 = vrcp.pop %v3406
        %v4141 = vmul.f32 1.0, %v4140
        %v4142 = vrcp.pop %v3407
        %v4143 = vmul.f32 1.0, %v4142
        %v4144 = vrcp.pop %v3408
        %v4145 = vmul.f32 1.0, %v4144
        %v4146 = vrcp.pop %v3409
        %v4147 = vmul.f32 1.0, %v4146
        %v4148 = vrcp.pop %v3410
        %v4149 = vmul.f32 1.0, %v4148
        %v4150 = vrcp.pop %v3411
        %v4151 = vmul.f32 1.0, %v4150
        %v4152 = vrcp.pop %v3412
        %v4153 = vmul.f32 1.0, %v4152
        %v4154 = vrcp.pop %v3413
        %v4155 = vmul.f32 1.0, %v4154
        %v4156 = vrcp.pop %v3414
        %v4157 = vmul.f32 1.0, %v4156
        %v4158 = vrcp.pop %v3415
        %v4159 = vmul.f32 1.0, %v4158
        %v4160 = vrcp.pop %v3416
        %v4161 = vmul.f32 1.0, %v4160
        %v4162 = vrcp.pop %v3417
        %v4163 = vmul.f32 1.0, %v4162
        %v4164 = vrcp.pop %v3418
        %v4165 = vmul.f32 1.0, %v4164
        %v4166 = vrcp.pop %v3419
        %v4167 = vmul.f32 1.0, %v4166
        %v4168 = vrcp.pop %v3420
        %v4169 = vmul.f32 1.0, %v4168
        %v4170 = vrcp.pop %v3421
        %v4171 = vmul.f32 1.0, %v4170
        %v4172 = vrcp.pop %v3422
        %v4173 = vmul.f32 1.0, %v4172
        %v4174 = vrcp.pop %v3423
        %v4175 = vmul.f32 1.0, %v4174
        %v4176 = vrcp.pop %v3424
        %v4177 = vmul.f32 1.0, %v4176
        %v4178 = vrcp.pop %v3425
        %v4179 = vmul.f32 1.0, %v4178
        %v4180 = vrcp.pop %v3426
        %v4181 = vmul.f32 1.0, %v4180
        %v4182 = vrcp.pop %v3427
        %v4183 = vmul.f32 1.0, %v4182
        %v4184 = vrcp.pop %v3428
        %v4185 = vmul.f32 1.0, %v4184
        %v4186 = vrcp.pop %v3429
        %v4187 = vmul.f32 1.0, %v4186
        %v4188 = vrcp.pop %v3430
        %v4189 = vmul.f32 1.0, %v4188
        %v4190 = vrcp.pop %v3431
        %v4191 = vmul.f32 1.0, %v4190
        %v4192 = vrcp.pop %v3432
        %v4193 = vmul.f32 1.0, %v4192
        %v4194 = vrcp.pop %v3433
        %v4195 = vmul.f32 1.0, %v4194
        %v4196 = vrcp.pop %v3434
        %v4197 = vmul.f32 1.0, %v4196
        %v4198 = vrcp.pop %v3435
        %v4199 = vmul.f32 1.0, %v4198
        %v4200 = vrcp.pop %v3436
        %v4201 = vmul.f32 1.0, %v4200
        %v4202 = vrcp.pop %v3437
        %v4203 = vmul.f32 1.0, %v4202
        %v4204 = vrcp.pop %v3438
        %v4205 = vmul.f32 1.0, %v4204
        %v4206 = vrcp.pop %v3439
        %v4207 = vmul.f32 1.0, %v4206
        %v4208 = vmul.f32 %v781, %v3441
        %v4209 = vmul.f32 %v783, %v3443
        %v4210 = vmul.f32 %v974, %v3445
        %v4211 = vmul.f32 %v976, %v3447
        %v4212 = vmul.f32 %v1167, %v3449
        %v4213 = vmul.f32 %v1169, %v3451
        %v4214 = vmul.f32 %v1360, %v3453
        %v4215 = vmul.f32 %v1362, %v3455
        %v4216 = vmul.f32 %v1553, %v3457
        %v4217 = vmul.f32 %v1555, %v3459
        %v4218 = vmul.f32 %v1746, %v3461
        %v4219 = vmul.f32 %v1748, %v3463
        %v4220 = vmul.f32 %v785, %v3465
        %v4221 = vmul.f32 %v787, %v3467
        %v4222 = vmul.f32 %v978, %v3469
        %v4223 = vmul.f32 %v980, %v3471
        %v4224 = vmul.f32 %v1171, %v3473
        %v4225 = vmul.f32 %v1173, %v3475
        %v4226 = vmul.f32 %v1364, %v3477
        %v4227 = vmul.f32 %v1366, %v3479
        %v4228 = vmul.f32 %v1557, %v3481
        %v4229 = vmul.f32 %v1559, %v3483
        %v4230 = vmul.f32 %v1750, %v3485
        %v4231 = vmul.f32 %v1752, %v3487
        %v4232 = vmul.f32 %v791, %v3489
        %v4233 = vmul.f32 %v793, %v3491
        %v4234 = vmul.f32 %v984, %v3493
        %v4235 = vmul.f32 %v986, %v3495
        %v4236 = vmul.f32 %v1177, %v3497
        %v4237 = vmul.f32 %v1179, %v3499
        %v4238 = vmul.f32 %v1370, %v3501
        %v4239 = vmul.f32 %v1372, %v3503
        %v4240 = vmul.f32 %v1563, %v3505
        %v4241 = vmul.f32 %v1565, %v3507
        %v4242 = vmul.f32 %v1756, %v3509
        %v4243 = vmul.f32 %v1758, %v3511
        %v4244 = vmul.f32 %v795, %v3513
        %v4245 = vmul.f32 %v797, %v3515
        %v4246 = vmul.f32 %v988, %v3517
        %v4247 = vmul.f32 %v990, %v3519
        %v4248 = vmul.f32 %v1181, %v3521
        %v4249 = vmul.f32 %v1183, %v3523
        %v4250 = vmul.f32 %v1374, %v3525
        %v4251 = vmul.f32 %v1376, %v3527
        %v4252 = vmul.f32 %v1567, %v3529
        %v4253 = vmul.f32 %v1569, %v3531
        %v4254 = vmul.f32 %v1760, %v3533
        %v4255 = vmul.f32 %v1762, %v3535
        %v4256 = vmul.f32 %v801, %v3537
        %v4257 = vmul.f32 %v803, %v3539
        %v4258 = vmul.f32 %v994, %v3541
        %v4259 = vmul.f32 %v996, %v3543
        %v4260 = vmul.f32 %v1187, %v3545
        %v4261 = vmul.f32 %v1189, %v3547
        %v4262 = vmul.f32 %v1380, %v3549
        %v4263 = vmul.f32 %v1382, %v3551
        %v4264 = vmul.f32 %v1573, %v3553
        %v4265 = vmul.f32 %v1575, %v3555
        %v4266 = vmul.f32 %v1766, %v3557
        %v4267 = vmul.f32 %v1768, %v3559
        %v4268 = vmul.f32 %v805, %v3561
        %v4269 = vmul.f32 %v807, %v3563
        %v4270 = vmul.f32 %v998, %v3565
        %v4271 = vmul.f32 %v1000, %v3567
        %v4272 = vmul.f32 %v1191, %v3569
        %v4273 = vmul.f32 %v1193, %v3571
        %v4274 = vmul.f32 %v1384, %v3573
        %v4275 = vmul.f32 %v1386, %v3575
        %v4276 = vmul.f32 %v1577, %v3577
        %v4277 = vmul.f32 %v1579, %v3579
        %v4278 = vmul.f32 %v1770, %v3581
        %v4279 = vmul.f32 %v1772, %v3583
        %v4280 = vmul.f32 %v811, %v3585
        %v4281 = vmul.f32 %v813, %v3587
        %v4282 = vmul.f32 %v1004, %v3589
        %v4283 = vmul.f32 %v1006, %v3591
        %v4284 = vmul.f32 %v1197, %v3593
        %v4285 = vmul.f32 %v1199, %v3595
        %v4286 = vmul.f32 %v1390, %v3597
        %v4287 = vmul.f32 %v1392, %v3599
        %v4288 = vmul.f32 %v1583, %v3601
        %v4289 = vmul.f32 %v1585, %v3603
        %v4290 = vmul.f32 %v1776, %v3605
        %v4291 = vmul.f32 %v1778, %v3607
        %v4292 = vmul.f32 %v815, %v3609
        %v4293 = vmul.f32 %v817, %v3611
        %v4294 = vmul.f32 %v1008, %v3613
        %v4295 = vmul.f32 %v1010, %v3615
        %v4296 = vmul.f32 %v1201, %v3617
        %v4297 = vmul.f32 %v1203, %v3619
        %v4298 = vmul.f32 %v1394, %v3621
        %v4299 = vmul.f32 %v1396, %v3623
        %v4300 = vmul.f32 %v1587, %v3625
        %v4301 = vmul.f32 %v1589, %v3627
        %v4302 = vmul.f32 %v1780, %v3629
        %v4303 = vmul.f32 %v1782, %v3631
        %v4304 = vmul.f32 %v821, %v3633
        %v4305 = vmul.f32 %v823, %v3635
        %v4306 = vmul.f32 %v1014, %v3637
        %v4307 = vmul.f32 %v1016, %v3639
        %v4308 = vmul.f32 %v1207, %v3641
        %v4309 = vmul.f32 %v1209, %v3643
        %v4310 = vmul.f32 %v1400, %v3645
        %v4311 = vmul.f32 %v1402, %v3647
        %v4312 = vmul.f32 %v1593, %v3649
        %v4313 = vmul.f32 %v1595, %v3651
        %v4314 = vmul.f32 %v1786, %v3653
        %v4315 = vmul.f32 %v1788, %v3655
        %v4316 = vmul.f32 %v825, %v3657
        %v4317 = vmul.f32 %v827, %v3659
        %v4318 = vmul.f32 %v1018, %v3661
        %v4319 = vmul.f32 %v1020, %v3663
        %v4320 = vmul.f32 %v1211, %v3665
        %v4321 = vmul.f32 %v1213, %v3667
        %v4322 = vmul.f32 %v1404, %v3669
        %v4323 = vmul.f32 %v1406, %v3671
        %v4324 = vmul.f32 %v1597, %v3673
        %v4325 = vmul.f32 %v1599, %v3675
        %v4326 = vmul.f32 %v1790, %v3677
        %v4327 = vmul.f32 %v1792, %v3679
        %v4328 = vmul.f32 %v831, %v3681
        %v4329 = vmul.f32 %v833, %v3683
        %v4330 = vmul.f32 %v1024, %v3685
        %v4331 = vmul.f32 %v1026, %v3687
        %v4332 = vmul.f32 %v1217, %v3689
        %v4333 = vmul.f32 %v1219, %v3691
        %v4334 = vmul.f32 %v1410, %v3693
        %v4335 = vmul.f32 %v1412, %v3695
        %v4336 = vmul.f32 %v1603, %v3697
        %v4337 = vmul.f32 %v1605, %v3699
        %v4338 = vmul.f32 %v1796, %v3701
        %v4339 = vmul.f32 %v1798, %v3703
        %v4340 = vmul.f32 %v835, %v3705
        %v4341 = vmul.f32 %v837, %v3707
        %v4342 = vmul.f32 %v1028, %v3709
        %v4343 = vmul.f32 %v1030, %v3711
        %v4344 = vmul.f32 %v1221, %v3713
        %v4345 = vmul.f32 %v1223, %v3715
        %v4346 = vmul.f32 %v1414, %v3717
        %v4347 = vmul.f32 %v1416, %v3719
        %v4348 = vmul.f32 %v1607, %v3721
        %v4349 = vmul.f32 %v1609, %v3723
        %v4350 = vmul.f32 %v1800, %v3725
        %v4351 = vmul.f32 %v1802, %v3727
        %v4352 = vmul.f32 %v841, %v3729
        %v4353 = vmul.f32 %v843, %v3731
        %v4354 = vmul.f32 %v1034, %v3733
        %v4355 = vmul.f32 %v1036, %v3735
        %v4356 = vmul.f32 %v1227, %v3737
        %v4357 = vmul.f32 %v1229, %v3739
        %v4358 = vmul.f32 %v1420, %v3741
        %v4359 = vmul.f32 %v1422, %v3743
        %v4360 = vmul.f32 %v1613, %v3745
        %v4361 = vmul.f32 %v1615, %v3747
        %v4362 = vmul.f32 %v1806, %v3749
        %v4363 = vmul.f32 %v1808, %v3751
        %v4364 = vmul.f32 %v845, %v3753
        %v4365 = vmul.f32 %v847, %v3755
        %v4366 = vmul.f32 %v1038, %v3757
        %v4367 = vmul.f32 %v1040, %v3759
        %v4368 = vmul.f32 %v1231, %v3761
        %v4369 = vmul.f32 %v1233, %v3763
        %v4370 = vmul.f32 %v1424, %v3765
        %v4371 = vmul.f32 %v1426, %v3767
        %v4372 = vmul.f32 %v1617, %v3769
        %v4373 = vmul.f32 %v1619, %v3771
        %v4374 = vmul.f32 %v1810, %v3773
        %v4375 = vmul.f32 %v1812, %v3775
        %v4376 = vmul.f32 %v851, %v3777
        %v4377 = vmul.f32 %v853, %v3779
        %v4378 = vmul.f32 %v1044, %v3781
        %v4379 = vmul.f32 %v1046, %v3783
        %v4380 = vmul.f32 %v1237, %v3785
        %v4381 = vmul.f32 %v1239, %v3787
        %v4382 = vmul.f32 %v1430, %v3789
        %v4383 = vmul.f32 %v1432, %v3791
        %v4384 = vmul.f32 %v1623, %v3793
        %v4385 = vmul.f32 %v1625, %v3795
        %v4386 = vmul.f32 %v1816, %v3797
        %v4387 = vmul.f32 %v1818, %v3799
        %v4388 = vmul.f32 %v855, %v3801
        %v4389 = vmul.f32 %v857, %v3803
        %v4390 = vmul.f32 %v1048, %v3805
        %v4391 = vmul.f32 %v1050, %v3807
        %v4392 = vmul.f32 %v1241, %v3809
        %v4393 = vmul.f32 %v1243, %v3811
        %v4394 = vmul.f32 %v1434, %v3813
        %v4395 = vmul.f32 %v1436, %v3815
        %v4396 = vmul.f32 %v1627, %v3817
        %v4397 = vmul.f32 %v1629, %v3819
        %v4398 = vmul.f32 %v1820, %v3821
        %v4399 = vmul.f32 %v1822, %v3823
        %v4400 = vmul.f32 %v861, %v3825
        %v4401 = vmul.f32 %v863, %v3827
        %v4402 = vmul.f32 %v1054, %v3829
        %v4403 = vmul.f32 %v1056, %v3831
        %v4404 = vmul.f32 %v1247, %v3833
        %v4405 = vmul.f32 %v1249, %v3835
        %v4406 = vmul.f32 %v1440, %v3837
        %v4407 = vmul.f32 %v1442, %v3839
        %v4408 = vmul.f32 %v1633, %v3841
        %v4409 = vmul.f32 %v1635, %v3843
        %v4410 = vmul.f32 %v1826, %v3845
        %v4411 = vmul.f32 %v1828, %v3847
        %v4412 = vmul.f32 %v865, %v3849
        %v4413 = vmul.f32 %v867, %v3851
        %v4414 = vmul.f32 %v1058, %v3853
        %v4415 = vmul.f32 %v1060, %v3855
        %v4416 = vmul.f32 %v1251, %v3857
        %v4417 = vmul.f32 %v1253, %v3859
        %v4418 = vmul.f32 %v1444, %v3861
        %v4419 = vmul.f32 %v1446, %v3863
        %v4420 = vmul.f32 %v1637, %v3865
        %v4421 = vmul.f32 %v1639, %v3867
        %v4422 = vmul.f32 %v1830, %v3869
        %v4423 = vmul.f32 %v1832, %v3871
        %v4424 = vmul.f32 %v871, %v3873
        %v4425 = vmul.f32 %v873, %v3875
        %v4426 = vmul.f32 %v1064, %v3877
        %v4427 = vmul.f32 %v1066, %v3879
        %v4428 = vmul.f32 %v1257, %v3881
        %v4429 = vmul.f32 %v1259, %v3883
        %v4430 = vmul.f32 %v1450, %v3885
        %v4431 = vmul.f32 %v1452, %v3887
        %v4432 = vmul.f32 %v1643, %v3889
        %v4433 = vmul.f32 %v1645, %v3891
        %v4434 = vmul.f32 %v1836, %v3893
        %v4435 = vmul.f32 %v1838, %v3895
        %v4436 = vmul.f32 %v875, %v3897
        %v4437 = vmul.f32 %v877, %v3899
        %v4438 = vmul.f32 %v1068, %v3901
        %v4439 = vmul.f32 %v1070, %v3903
        %v4440 = vmul.f32 %v1261, %v3905
        %v4441 = vmul.f32 %v1263, %v3907
        %v4442 = vmul.f32 %v1454, %v3909
        %v4443 = vmul.f32 %v1456, %v3911
        %v4444 = vmul.f32 %v1647, %v3913
        %v4445 = vmul.f32 %v1649, %v3915
        %v4446 = vmul.f32 %v1840, %v3917
        %v4447 = vmul.f32 %v1842, %v3919
        %v4448 = vmul.f32 %v881, %v3921
        %v4449 = vmul.f32 %v883, %v3923
        %v4450 = vmul.f32 %v1074, %v3925
        %v4451 = vmul.f32 %v1076, %v3927
        %v4452 = vmul.f32 %v1267, %v3929
        %v4453 = vmul.f32 %v1269, %v3931
        %v4454 = vmul.f32 %v1460, %v3933
        %v4455 = vmul.f32 %v1462, %v3935
        %v4456 = vmul.f32 %v1653, %v3937
        %v4457 = vmul.f32 %v1655, %v3939
        %v4458 = vmul.f32 %v1846, %v3941
        %v4459 = vmul.f32 %v1848, %v3943
        %v4460 = vmul.f32 %v885, %v3945
        %v4461 = vmul.f32 %v887, %v3947
        %v4462 = vmul.f32 %v1078, %v3949
        %v4463 = vmul.f32 %v1080, %v3951
        %v4464 = vmul.f32 %v1271, %v3953
        %v4465 = vmul.f32 %v1273, %v3955
        %v4466 = vmul.f32 %v1464, %v3957
        %v4467 = vmul.f32 %v1466, %v3959
        %v4468 = vmul.f32 %v1657, %v3961
        %v4469 = vmul.f32 %v1659, %v3963
        %v4470 = vmul.f32 %v1850, %v3965
        %v4471 = vmul.f32 %v1852, %v3967
        %v4472 = vmul.f32 %v891, %v3969
        %v4473 = vmul.f32 %v893, %v3971
        %v4474 = vmul.f32 %v1084, %v3973
        %v4475 = vmul.f32 %v1086, %v3975
        %v4476 = vmul.f32 %v1277, %v3977
        %v4477 = vmul.f32 %v1279, %v3979
        %v4478 = vmul.f32 %v1470, %v3981
        %v4479 = vmul.f32 %v1472, %v3983
        %v4480 = vmul.f32 %v1663, %v3985
        %v4481 = vmul.f32 %v1665, %v3987
        %v4482 = vmul.f32 %v1856, %v3989
        %v4483 = vmul.f32 %v1858, %v3991
        %v4484 = vmul.f32 %v895, %v3993
        %v4485 = vmul.f32 %v897, %v3995
        %v4486 = vmul.f32 %v1088, %v3997
        %v4487 = vmul.f32 %v1090, %v3999
        %v4488 = vmul.f32 %v1281, %v4001
        %v4489 = vmul.f32 %v1283, %v4003
        %v4490 = vmul.f32 %v1474, %v4005
        %v4491 = vmul.f32 %v1476, %v4007
        %v4492 = vmul.f32 %v1667, %v4009
        %v4493 = vmul.f32 %v1669, %v4011
        %v4494 = vmul.f32 %v1860, %v4013
        %v4495 = vmul.f32 %v1862, %v4015
        %v4496 = vmul.f32 %v901, %v4017
        %v4497 = vmul.f32 %v903, %v4019
        %v4498 = vmul.f32 %v1094, %v4021
        %v4499 = vmul.f32 %v1096, %v4023
        %v4500 = vmul.f32 %v1287, %v4025
        %v4501 = vmul.f32 %v1289, %v4027
        %v4502 = vmul.f32 %v1480, %v4029
        %v4503 = vmul.f32 %v1482, %v4031
        %v4504 = vmul.f32 %v1673, %v4033
        %v4505 = vmul.f32 %v1675, %v4035
        %v4506 = vmul.f32 %v1866, %v4037
        %v4507 = vmul.f32 %v1868, %v4039
        %v4508 = vmul.f32 %v905, %v4041
        %v4509 = vmul.f32 %v907, %v4043
        %v4510 = vmul.f32 %v1098, %v4045
        %v4511 = vmul.f32 %v1100, %v4047
        %v4512 = vmul.f32 %v1291, %v4049
        %v4513 = vmul.f32 %v1293, %v4051
        %v4514 = vmul.f32 %v1484, %v4053
        %v4515 = vmul.f32 %v1486, %v4055
        %v4516 = vmul.f32 %v1677, %v4057
        %v4517 = vmul.f32 %v1679, %v4059
        %v4518 = vmul.f32 %v1870, %v4061
        %v4519 = vmul.f32 %v1872, %v4063
        %v4520 = vmul.f32 %v911, %v4065
        %v4521 = vmul.f32 %v913, %v4067
        %v4522 = vmul.f32 %v1104, %v4069
        %v4523 = vmul.f32 %v1106, %v4071
        %v4524 = vmul.f32 %v1297, %v4073
        %v4525 = vmul.f32 %v1299, %v4075
        %v4526 = vmul.f32 %v1490, %v4077
        %v4527 = vmul.f32 %v1492, %v4079
        %v4528 = vmul.f32 %v1683, %v4081
        %v4529 = vmul.f32 %v1685, %v4083
        %v4530 = vmul.f32 %v1876, %v4085
        %v4531 = vmul.f32 %v1878, %v4087
        %v4532 = vmul.f32 %v915, %v4089
        %v4533 = vmul.f32 %v917, %v4091
        %v4534 = vmul.f32 %v1108, %v4093
        %v4535 = vmul.f32 %v1110, %v4095
        %v4536 = vmul.f32 %v1301, %v4097
        %v4537 = vmul.f32 %v1303, %v4099
        %v4538 = vmul.f32 %v1494, %v4101
        %v4539 = vmul.f32 %v1496, %v4103
        %v4540 = vmul.f32 %v1687, %v4105
        %v4541 = vmul.f32 %v1689, %v4107
        %v4542 = vmul.f32 %v1880, %v4109
        %v4543 = vmul.f32 %v1882, %v4111
        %v4544 = vmul.f32 %v921, %v4113
        %v4545 = vmul.f32 %v923, %v4115
        %v4546 = vmul.f32 %v1114, %v4117
        %v4547 = vmul.f32 %v1116, %v4119
        %v4548 = vmul.f32 %v1307, %v4121
        %v4549 = vmul.f32 %v1309, %v4123
        %v4550 = vmul.f32 %v1500, %v4125
        %v4551 = vmul.f32 %v1502, %v4127
        %v4552 = vmul.f32 %v1693, %v4129
        %v4553 = vmul.f32 %v1695, %v4131
        %v4554 = vmul.f32 %v1886, %v4133
        %v4555 = vmul.f32 %v1888, %v4135
        %v4556 = vmul.f32 %v925, %v4137
        %v4557 = vmul.f32 %v927, %v4139
        %v4558 = vmul.f32 %v1118, %v4141
        %v4559 = vmul.f32 %v1120, %v4143
        %v4560 = vmul.f32 %v1311, %v4145
        %v4561 = vmul.f32 %v1313, %v4147
        %v4562 = vmul.f32 %v1504, %v4149
        %v4563 = vmul.f32 %v1506, %v4151
        %v4564 = vmul.f32 %v1697, %v4153
        %v4565 = vmul.f32 %v1699, %v4155
        %v4566 = vmul.f32 %v1890, %v4157
        %v4567 = vmul.f32 %v1892, %v4159
        %v4568 = vmul.f32 %v931, %v4161
        %v4569 = vmul.f32 %v933, %v4163
        %v4570 = vmul.f32 %v1124, %v4165
        %v4571 = vmul.f32 %v1126, %v4167
        %v4572 = vmul.f32 %v1317, %v4169
        %v4573 = vmul.f32 %v1319, %v4171
        %v4574 = vmul.f32 %v1510, %v4173
        %v4575 = vmul.f32 %v1512, %v4175
        %v4576 = vmul.f32 %v1703, %v4177
        %v4577 = vmul.f32 %v1705, %v4179
        %v4578 = vmul.f32 %v1896, %v4181
        %v4579 = vmul.f32 %v1898, %v4183
        %v4580 = vmul.f32 %v935, %v4185
        %v4581 = vmul.f32 %v937, %v4187
        %v4582 = vmul.f32 %v1128, %v4189
        %v4583 = vmul.f32 %v1130, %v4191
        %v4584 = vmul.f32 %v1321, %v4193
        %v4585 = vmul.f32 %v1323, %v4195
        %v4586 = vmul.f32 %v1514, %v4197
        %v4587 = vmul.f32 %v1516, %v4199
        %v4588 = vmul.f32 %v1707, %v4201
        %v4589 = vmul.f32 %v1709, %v4203
        %v4590 = vmul.f32 %v1900, %v4205
        %v4591 = vmul.f32 %v1902, %v4207
        %v4592 = vld [vmem:[#allocation2] sm:$0xff]
        %v4593 = vld [vmem:[#allocation2 + $0x8] sm:$0xff]
        %v4594 = vld [vmem:[#allocation2 + $0x10] sm:$0xff]
        %v4595 = vadd.f32 %v4208, %v4220
        %v4596 = vadd.f32 %v4595, %v4232
        %v4597 = vadd.f32 %v4596, %v4244
        %v4598 = vadd.f32 %v4597, %v4256
        %v4599 = vadd.f32 %v4598, %v4268
        %v4600 = vadd.f32 %v4599, %v4280
        %v4601 = vadd.f32 %v4600, %v4292
        %v4602 = vadd.f32 %v4601, %v4304
        %v4603 = vadd.f32 %v4602, %v4316
        %v4604 = vadd.f32 %v4603, %v4328
        %v4605 = vadd.f32 %v4604, %v4340
        %v4606 = vadd.f32 %v4605, %v4352
        %v4607 = vadd.f32 %v4606, %v4364
        %v4608 = vadd.f32 %v4607, %v4376
        %v4609 = vadd.f32 %v4608, %v4388
        %v4610 = vrot.slane %v4609, 4
        %v4611 = vadd.f32 %v4609, %v4610
        %v4612 = vrot.slane %v4611, 2
        %v4613 = vadd.f32 %v4611, %v4612
        %v4614 = vrot.slane %v4613, 1
        %v4615 = vadd.f32 %v4613, %v4614
        %v4616 = vadd.f32 %v4209, %v4221
        %v4617 = vadd.f32 %v4616, %v4233
        %v4618 = vadd.f32 %v4617, %v4245
        %v4619 = vadd.f32 %v4618, %v4257
        %v4620 = vadd.f32 %v4619, %v4269
        %v4621 = vadd.f32 %v4620, %v4281
        %v4622 = vadd.f32 %v4621, %v4293
        %v4623 = vadd.f32 %v4622, %v4305
        %v4624 = vadd.f32 %v4623, %v4317
        %v4625 = vadd.f32 %v4624, %v4329
        %v4626 = vadd.f32 %v4625, %v4341
        %v4627 = vadd.f32 %v4626, %v4353
        %v4628 = vadd.f32 %v4627, %v4365
        %v4629 = vadd.f32 %v4628, %v4377
        %v4630 = vadd.f32 %v4629, %v4389
        %v4631 = vrot.slane %v4630, 4
        %v4632 = vadd.f32 %v4630, %v4631
        %v4633 = vrot.slane %v4632, 2
        %v4634 = vadd.f32 %v4632, %v4633
        %v4635 = vrot.slane %v4634, 1
        %v4636 = vadd.f32 %v4634, %v4635
        %v4637 = vadd.f32 %v4210, %v4222
        %v4638 = vadd.f32 %v4637, %v4234
        %v4639 = vadd.f32 %v4638, %v4246
        %v4640 = vadd.f32 %v4639, %v4258
        %v4641 = vadd.f32 %v4640, %v4270
        %v4642 = vadd.f32 %v4641, %v4282
        %v4643 = vadd.f32 %v4642, %v4294
        %v4644 = vadd.f32 %v4643, %v4306
        %v4645 = vadd.f32 %v4644, %v4318
        %v4646 = vadd.f32 %v4645, %v4330
        %v4647 = vadd.f32 %v4646, %v4342
        %v4648 = vadd.f32 %v4647, %v4354
        %v4649 = vadd.f32 %v4648, %v4366
        %v4650 = vadd.f32 %v4649, %v4378
        %v4651 = vadd.f32 %v4650, %v4390
        %v4652 = vrot.slane %v4651, 4
        %v4653 = vadd.f32 %v4651, %v4652
        %v4654 = vrot.slane %v4653, 2
        %v4655 = vadd.f32 %v4653, %v4654
        %v4656 = vrot.slane %v4655, 1
        %v4657 = vadd.f32 %v4655, %v4656
        %v4658 = vadd.f32 %v4211, %v4223
        %v4659 = vadd.f32 %v4658, %v4235
        %v4660 = vadd.f32 %v4659, %v4247
        %v4661 = vadd.f32 %v4660, %v4259
        %v4662 = vadd.f32 %v4661, %v4271
        %v4663 = vadd.f32 %v4662, %v4283
        %v4664 = vadd.f32 %v4663, %v4295
        %v4665 = vadd.f32 %v4664, %v4307
        %v4666 = vadd.f32 %v4665, %v4319
        %v4667 = vadd.f32 %v4666, %v4331
        %v4668 = vadd.f32 %v4667, %v4343
        %v4669 = vadd.f32 %v4668, %v4355
        %v4670 = vadd.f32 %v4669, %v4367
        %v4671 = vadd.f32 %v4670, %v4379
        %v4672 = vadd.f32 %v4671, %v4391
        %v4673 = vrot.slane %v4672, 4
        %v4674 = vadd.f32 %v4672, %v4673
        %v4675 = vrot.slane %v4674, 2
        %v4676 = vadd.f32 %v4674, %v4675
        %v4677 = vrot.slane %v4676, 1
        %v4678 = vadd.f32 %v4676, %v4677
        %v4679 = vadd.f32 %v4212, %v4224
        %v4680 = vadd.f32 %v4679, %v4236
        %v4681 = vadd.f32 %v4680, %v4248
        %v4682 = vadd.f32 %v4681, %v4260
        %v4683 = vadd.f32 %v4682, %v4272
        %v4684 = vadd.f32 %v4683, %v4284
        %v4685 = vadd.f32 %v4684, %v4296
        %v4686 = vadd.f32 %v4685, %v4308
        %v4687 = vadd.f32 %v4686, %v4320
        %v4688 = vadd.f32 %v4687, %v4332
        %v4689 = vadd.f32 %v4688, %v4344
        %v4690 = vadd.f32 %v4689, %v4356
        %v4691 = vadd.f32 %v4690, %v4368
        %v4692 = vadd.f32 %v4691, %v4380
        %v4693 = vadd.f32 %v4692, %v4392
        %v4694 = vrot.slane %v4693, 4
        %v4695 = vadd.f32 %v4693, %v4694
        %v4696 = vrot.slane %v4695, 2
        %v4697 = vadd.f32 %v4695, %v4696
        %v4698 = vrot.slane %v4697, 1
        %v4699 = vadd.f32 %v4697, %v4698
        %v4700 = vadd.f32 %v4213, %v4225
        %v4701 = vadd.f32 %v4700, %v4237
        %v4702 = vadd.f32 %v4701, %v4249
        %v4703 = vadd.f32 %v4702, %v4261
        %v4704 = vadd.f32 %v4703, %v4273
        %v4705 = vadd.f32 %v4704, %v4285
        %v4706 = vadd.f32 %v4705, %v4297
        %v4707 = vadd.f32 %v4706, %v4309
        %v4708 = vadd.f32 %v4707, %v4321
        %v4709 = vadd.f32 %v4708, %v4333
        %v4710 = vadd.f32 %v4709, %v4345
        %v4711 = vadd.f32 %v4710, %v4357
        %v4712 = vadd.f32 %v4711, %v4369
        %v4713 = vadd.f32 %v4712, %v4381
        %v4714 = vadd.f32 %v4713, %v4393
        %v4715 = vrot.slane %v4714, 4
        %v4716 = vadd.f32 %v4714, %v4715
        %v4717 = vrot.slane %v4716, 2
        %v4718 = vadd.f32 %v4716, %v4717
        %v4719 = vrot.slane %v4718, 1
        %v4720 = vadd.f32 %v4718, %v4719
        %v4721 = vadd.f32 %v4214, %v4226
        %v4722 = vadd.f32 %v4721, %v4238
        %v4723 = vadd.f32 %v4722, %v4250
        %v4724 = vadd.f32 %v4723, %v4262
        %v4725 = vadd.f32 %v4724, %v4274
        %v4726 = vadd.f32 %v4725, %v4286
        %v4727 = vadd.f32 %v4726, %v4298
        %v4728 = vadd.f32 %v4727, %v4310
        %v4729 = vadd.f32 %v4728, %v4322
        %v4730 = vadd.f32 %v4729, %v4334
        %v4731 = vadd.f32 %v4730, %v4346
        %v4732 = vadd.f32 %v4731, %v4358
        %v4733 = vadd.f32 %v4732, %v4370
        %v4734 = vadd.f32 %v4733, %v4382
        %v4735 = vadd.f32 %v4734, %v4394
        %v4736 = vrot.slane %v4735, 4
        %v4737 = vadd.f32 %v4735, %v4736
        %v4738 = vrot.slane %v4737, 2
        %v4739 = vadd.f32 %v4737, %v4738
        %v4740 = vrot.slane %v4739, 1
        %v4741 = vadd.f32 %v4739, %v4740
        %v4742 = vadd.f32 %v4215, %v4227
        %v4743 = vadd.f32 %v4742, %v4239
        %v4744 = vadd.f32 %v4743, %v4251
        %v4745 = vadd.f32 %v4744, %v4263
        %v4746 = vadd.f32 %v4745, %v4275
        %v4747 = vadd.f32 %v4746, %v4287
        %v4748 = vadd.f32 %v4747, %v4299
        %v4749 = vadd.f32 %v4748, %v4311
        %v4750 = vadd.f32 %v4749, %v4323
        %v4751 = vadd.f32 %v4750, %v4335
        %v4752 = vadd.f32 %v4751, %v4347
        %v4753 = vadd.f32 %v4752, %v4359
        %v4754 = vadd.f32 %v4753, %v4371
        %v4755 = vadd.f32 %v4754, %v4383
        %v4756 = vadd.f32 %v4755, %v4395
        %v4757 = vrot.slane %v4756, 4
        %v4758 = vadd.f32 %v4756, %v4757
        %v4759 = vrot.slane %v4758, 2
        %v4760 = vadd.f32 %v4758, %v4759
        %v4761 = vrot.slane %v4760, 1
        %v4762 = vadd.f32 %v4760, %v4761
        %v4763 = vadd.f32 %v4216, %v4228
        %v4764 = vadd.f32 %v4763, %v4240
        %v4765 = vadd.f32 %v4764, %v4252
        %v4766 = vadd.f32 %v4765, %v4264
        %v4767 = vadd.f32 %v4766, %v4276
        %v4768 = vadd.f32 %v4767, %v4288
        %v4769 = vadd.f32 %v4768, %v4300
        %v4770 = vadd.f32 %v4769, %v4312
        %v4771 = vadd.f32 %v4770, %v4324
        %v4772 = vadd.f32 %v4771, %v4336
        %v4773 = vadd.f32 %v4772, %v4348
        %v4774 = vadd.f32 %v4773, %v4360
        %v4775 = vadd.f32 %v4774, %v4372
        %v4776 = vadd.f32 %v4775, %v4384
        %v4777 = vadd.f32 %v4776, %v4396
        %v4778 = vrot.slane %v4777, 4
        %v4779 = vadd.f32 %v4777, %v4778
        %v4780 = vrot.slane %v4779, 2
        %v4781 = vadd.f32 %v4779, %v4780
        %v4782 = vrot.slane %v4781, 1
        %v4783 = vadd.f32 %v4781, %v4782
        %v4784 = vadd.f32 %v4217, %v4229
        %v4785 = vadd.f32 %v4784, %v4241
        %v4786 = vadd.f32 %v4785, %v4253
        %v4787 = vadd.f32 %v4786, %v4265
        %v4788 = vadd.f32 %v4787, %v4277
        %v4789 = vadd.f32 %v4788, %v4289
        %v4790 = vadd.f32 %v4789, %v4301
        %v4791 = vadd.f32 %v4790, %v4313
        %v4792 = vadd.f32 %v4791, %v4325
        %v4793 = vadd.f32 %v4792, %v4337
        %v4794 = vadd.f32 %v4793, %v4349
        %v4795 = vadd.f32 %v4794, %v4361
        %v4796 = vadd.f32 %v4795, %v4373
        %v4797 = vadd.f32 %v4796, %v4385
        %v4798 = vadd.f32 %v4797, %v4397
        %v4799 = vrot.slane %v4798, 4
        %v4800 = vadd.f32 %v4798, %v4799
        %v4801 = vrot.slane %v4800, 2
        %v4802 = vadd.f32 %v4800, %v4801
        %v4803 = vrot.slane %v4802, 1
        %v4804 = vadd.f32 %v4802, %v4803
        %v4805 = vadd.f32 %v4218, %v4230
        %v4806 = vadd.f32 %v4805, %v4242
        %v4807 = vadd.f32 %v4806, %v4254
        %v4808 = vadd.f32 %v4807, %v4266
        %v4809 = vadd.f32 %v4808, %v4278
        %v4810 = vadd.f32 %v4809, %v4290
        %v4811 = vadd.f32 %v4810, %v4302
        %v4812 = vadd.f32 %v4811, %v4314
        %v4813 = vadd.f32 %v4812, %v4326
        %v4814 = vadd.f32 %v4813, %v4338
        %v4815 = vadd.f32 %v4814, %v4350
        %v4816 = vadd.f32 %v4815, %v4362
        %v4817 = vadd.f32 %v4816, %v4374
        %v4818 = vadd.f32 %v4817, %v4386
        %v4819 = vadd.f32 %v4818, %v4398
        %v4820 = vrot.slane %v4819, 4
        %v4821 = vadd.f32 %v4819, %v4820
        %v4822 = vrot.slane %v4821, 2
        %v4823 = vadd.f32 %v4821, %v4822
        %v4824 = vrot.slane %v4823, 1
        %v4825 = vadd.f32 %v4823, %v4824
        %v4826 = vadd.f32 %v4219, %v4231
        %v4827 = vadd.f32 %v4826, %v4243
        %v4828 = vadd.f32 %v4827, %v4255
        %v4829 = vadd.f32 %v4828, %v4267
        %v4830 = vadd.f32 %v4829, %v4279
        %v4831 = vadd.f32 %v4830, %v4291
        %v4832 = vadd.f32 %v4831, %v4303
        %v4833 = vadd.f32 %v4832, %v4315
        %v4834 = vadd.f32 %v4833, %v4327
        %v4835 = vadd.f32 %v4834, %v4339
        %v4836 = vadd.f32 %v4835, %v4351
        %v4837 = vadd.f32 %v4836, %v4363
        %v4838 = vadd.f32 %v4837, %v4375
        %v4839 = vadd.f32 %v4838, %v4387
        %v4840 = vadd.f32 %v4839, %v4399
        %v4841 = vrot.slane %v4840, 4
        %v4842 = vadd.f32 %v4840, %v4841
        %v4843 = vrot.slane %v4842, 2
        %v4844 = vadd.f32 %v4842, %v4843
        %v4845 = vrot.slane %v4844, 1
        %v4846 = vadd.f32 %v4844, %v4845
        %v4847 = vadd.f32 %v4400, %v4412
        %v4848 = vadd.f32 %v4847, %v4424
        %v4849 = vadd.f32 %v4848, %v4436
        %v4850 = vadd.f32 %v4849, %v4448
        %v4851 = vadd.f32 %v4850, %v4460
        %v4852 = vadd.f32 %v4851, %v4472
        %v4853 = vadd.f32 %v4852, %v4484
        %v4854 = vadd.f32 %v4853, %v4496
        %v4855 = vadd.f32 %v4854, %v4508
        %v4856 = vadd.f32 %v4855, %v4520
        %v4857 = vadd.f32 %v4856, %v4532
        %v4858 = vadd.f32 %v4857, %v4544
        %v4859 = vadd.f32 %v4858, %v4556
        %v4860 = vadd.f32 %v4859, %v4568
        %v4861 = vadd.f32 %v4860, %v4580
        %v4862 = vrot.slane %v4861, 4
        %v4863 = vadd.f32 %v4861, %v4862
        %v4864 = vrot.slane %v4863, 2
        %v4865 = vadd.f32 %v4863, %v4864
        %v4866 = vrot.slane %v4865, 1
        %v4867 = vadd.f32 %v4865, %v4866
        %v4868 = vadd.f32 %v4401, %v4413
        %v4869 = vadd.f32 %v4868, %v4425
        %v4870 = vadd.f32 %v4869, %v4437
        %v4871 = vadd.f32 %v4870, %v4449
        %v4872 = vadd.f32 %v4871, %v4461
        %v4873 = vadd.f32 %v4872, %v4473
        %v4874 = vadd.f32 %v4873, %v4485
        %v4875 = vadd.f32 %v4874, %v4497
        %v4876 = vadd.f32 %v4875, %v4509
        %v4877 = vadd.f32 %v4876, %v4521
        %v4878 = vadd.f32 %v4877, %v4533
        %v4879 = vadd.f32 %v4878, %v4545
        %v4880 = vadd.f32 %v4879, %v4557
        %v4881 = vadd.f32 %v4880, %v4569
        %v4882 = vadd.f32 %v4881, %v4581
        %v4883 = vrot.slane %v4882, 4
        %v4884 = vadd.f32 %v4882, %v4883
        %v4885 = vrot.slane %v4884, 2
        %v4886 = vadd.f32 %v4884, %v4885
        %v4887 = vrot.slane %v4886, 1
        %v4888 = vadd.f32 %v4886, %v4887
        %v4889 = vadd.f32 %v4402, %v4414
        %v4890 = vadd.f32 %v4889, %v4426
        %v4891 = vadd.f32 %v4890, %v4438
        %v4892 = vadd.f32 %v4891, %v4450
        %v4893 = vadd.f32 %v4892, %v4462
        %v4894 = vadd.f32 %v4893, %v4474
        %v4895 = vadd.f32 %v4894, %v4486
        %v4896 = vadd.f32 %v4895, %v4498
        %v4897 = vadd.f32 %v4896, %v4510
        %v4898 = vadd.f32 %v4897, %v4522
        %v4899 = vadd.f32 %v4898, %v4534
        %v4900 = vadd.f32 %v4899, %v4546
        %v4901 = vadd.f32 %v4900, %v4558
        %v4902 = vadd.f32 %v4901, %v4570
        %v4903 = vadd.f32 %v4902, %v4582
        %v4904 = vrot.slane %v4903, 4
        %v4905 = vadd.f32 %v4903, %v4904
        %v4906 = vrot.slane %v4905, 2
        %v4907 = vadd.f32 %v4905, %v4906
        %v4908 = vrot.slane %v4907, 1
        %v4909 = vadd.f32 %v4907, %v4908
        %v4910 = vadd.f32 %v4403, %v4415
        %v4911 = vadd.f32 %v4910, %v4427
        %v4912 = vadd.f32 %v4911, %v4439
        %v4913 = vadd.f32 %v4912, %v4451
        %v4914 = vadd.f32 %v4913, %v4463
        %v4915 = vadd.f32 %v4914, %v4475
        %v4916 = vadd.f32 %v4915, %v4487
        %v4917 = vadd.f32 %v4916, %v4499
        %v4918 = vadd.f32 %v4917, %v4511
        %v4919 = vadd.f32 %v4918, %v4523
        %v4920 = vadd.f32 %v4919, %v4535
        %v4921 = vadd.f32 %v4920, %v4547
        %v4922 = vadd.f32 %v4921, %v4559
        %v4923 = vadd.f32 %v4922, %v4571
        %v4924 = vadd.f32 %v4923, %v4583
        %v4925 = vrot.slane %v4924, 4
        %v4926 = vadd.f32 %v4924, %v4925
        %v4927 = vrot.slane %v4926, 2
        %v4928 = vadd.f32 %v4926, %v4927
        %v4929 = vrot.slane %v4928, 1
        %v4930 = vadd.f32 %v4928, %v4929
        %v4931 = vadd.f32 %v4404, %v4416
        %v4932 = vadd.f32 %v4931, %v4428
        %v4933 = vadd.f32 %v4932, %v4440
        %v4934 = vadd.f32 %v4933, %v4452
        %v4935 = vadd.f32 %v4934, %v4464
        %v4936 = vadd.f32 %v4935, %v4476
        %v4937 = vadd.f32 %v4936, %v4488
        %v4938 = vadd.f32 %v4937, %v4500
        %v4939 = vadd.f32 %v4938, %v4512
        %v4940 = vadd.f32 %v4939, %v4524
        %v4941 = vadd.f32 %v4940, %v4536
        %v4942 = vadd.f32 %v4941, %v4548
        %v4943 = vadd.f32 %v4942, %v4560
        %v4944 = vadd.f32 %v4943, %v4572
        %v4945 = vadd.f32 %v4944, %v4584
        %v4946 = vrot.slane %v4945, 4
        %v4947 = vadd.f32 %v4945, %v4946
        %v4948 = vrot.slane %v4947, 2
        %v4949 = vadd.f32 %v4947, %v4948
        %v4950 = vrot.slane %v4949, 1
        %v4951 = vadd.f32 %v4949, %v4950
        %v4952 = vadd.f32 %v4405, %v4417
        %v4953 = vadd.f32 %v4952, %v4429
        %v4954 = vadd.f32 %v4953, %v4441
        %v4955 = vadd.f32 %v4954, %v4453
        %v4956 = vadd.f32 %v4955, %v4465
        %v4957 = vadd.f32 %v4956, %v4477
        %v4958 = vadd.f32 %v4957, %v4489
        %v4959 = vadd.f32 %v4958, %v4501
        %v4960 = vadd.f32 %v4959, %v4513
        %v4961 = vadd.f32 %v4960, %v4525
        %v4962 = vadd.f32 %v4961, %v4537
        %v4963 = vadd.f32 %v4962, %v4549
        %v4964 = vadd.f32 %v4963, %v4561
        %v4965 = vadd.f32 %v4964, %v4573
        %v4966 = vadd.f32 %v4965, %v4585
        %v4967 = vrot.slane %v4966, 4
        %v4968 = vadd.f32 %v4966, %v4967
        %v4969 = vrot.slane %v4968, 2
        %v4970 = vadd.f32 %v4968, %v4969
        %v4971 = vrot.slane %v4970, 1
        %v4972 = vadd.f32 %v4970, %v4971
        %v4973 = vadd.f32 %v4406, %v4418
        %v4974 = vadd.f32 %v4973, %v4430
        %v4975 = vadd.f32 %v4974, %v4442
        %v4976 = vadd.f32 %v4975, %v4454
        %v4977 = vadd.f32 %v4976, %v4466
        %v4978 = vadd.f32 %v4977, %v4478
        %v4979 = vadd.f32 %v4978, %v4490
        %v4980 = vadd.f32 %v4979, %v4502
        %v4981 = vadd.f32 %v4980, %v4514
        %v4982 = vadd.f32 %v4981, %v4526
        %v4983 = vadd.f32 %v4982, %v4538
        %v4984 = vadd.f32 %v4983, %v4550
        %v4985 = vadd.f32 %v4984, %v4562
        %v4986 = vadd.f32 %v4985, %v4574
        %v4987 = vadd.f32 %v4986, %v4586
        %v4988 = vrot.slane %v4987, 4
        %v4989 = vadd.f32 %v4987, %v4988
        %v4990 = vrot.slane %v4989, 2
        %v4991 = vadd.f32 %v4989, %v4990
        %v4992 = vrot.slane %v4991, 1
        %v4993 = vadd.f32 %v4991, %v4992
        %v4994 = vadd.f32 %v4407, %v4419
        %v4995 = vadd.f32 %v4994, %v4431
        %v4996 = vadd.f32 %v4995, %v4443
        %v4997 = vadd.f32 %v4996, %v4455
        %v4998 = vadd.f32 %v4997, %v4467
        %v4999 = vadd.f32 %v4998, %v4479
        %v5000 = vadd.f32 %v4999, %v4491
        %v5001 = vadd.f32 %v5000, %v4503
        %v5002 = vadd.f32 %v5001, %v4515
        %v5003 = vadd.f32 %v5002, %v4527
        %v5004 = vadd.f32 %v5003, %v4539
        %v5005 = vadd.f32 %v5004, %v4551
        %v5006 = vadd.f32 %v5005, %v4563
        %v5007 = vadd.f32 %v5006, %v4575
        %v5008 = vadd.f32 %v5007, %v4587
        %v5009 = vrot.slane %v5008, 4
        %v5010 = vadd.f32 %v5008, %v5009
        %v5011 = vrot.slane %v5010, 2
        %v5012 = vadd.f32 %v5010, %v5011
        %v5013 = vrot.slane %v5012, 1
        %v5014 = vadd.f32 %v5012, %v5013
        %v5015 = vadd.f32 %v4408, %v4420
        %v5016 = vadd.f32 %v5015, %v4432
        %v5017 = vadd.f32 %v5016, %v4444
        %v5018 = vadd.f32 %v5017, %v4456
        %v5019 = vadd.f32 %v5018, %v4468
        %v5020 = vadd.f32 %v5019, %v4480
        %v5021 = vadd.f32 %v5020, %v4492
        %v5022 = vadd.f32 %v5021, %v4504
        %v5023 = vadd.f32 %v5022, %v4516
        %v5024 = vadd.f32 %v5023, %v4528
        %v5025 = vadd.f32 %v5024, %v4540
        %v5026 = vadd.f32 %v5025, %v4552
        %v5027 = vadd.f32 %v5026, %v4564
        %v5028 = vadd.f32 %v5027, %v4576
        %v5029 = vadd.f32 %v5028, %v4588
        %v5030 = vrot.slane %v5029, 4
        %v5031 = vadd.f32 %v5029, %v5030
        %v5032 = vrot.slane %v5031, 2
        %v5033 = vadd.f32 %v5031, %v5032
        %v5034 = vrot.slane %v5033, 1
        %v5035 = vadd.f32 %v5033, %v5034
        %v5036 = vadd.f32 %v4409, %v4421
        %v5037 = vadd.f32 %v5036, %v4433
        %v5038 = vadd.f32 %v5037, %v4445
        %v5039 = vadd.f32 %v5038, %v4457
        %v5040 = vadd.f32 %v5039, %v4469
        %v5041 = vadd.f32 %v5040, %v4481
        %v5042 = vadd.f32 %v5041, %v4493
        %v5043 = vadd.f32 %v5042, %v4505
        %v5044 = vadd.f32 %v5043, %v4517
        %v5045 = vadd.f32 %v5044, %v4529
        %v5046 = vadd.f32 %v5045, %v4541
        %v5047 = vadd.f32 %v5046, %v4553
        %v5048 = vadd.f32 %v5047, %v4565
        %v5049 = vadd.f32 %v5048, %v4577
        %v5050 = vadd.f32 %v5049, %v4589
        %v5051 = vrot.slane %v5050, 4
        %v5052 = vadd.f32 %v5050, %v5051
        %v5053 = vrot.slane %v5052, 2
        %v5054 = vadd.f32 %v5052, %v5053
        %v5055 = vrot.slane %v5054, 1
        %v5056 = vadd.f32 %v5054, %v5055
        %v5057 = vadd.f32 %v4410, %v4422
        %v5058 = vadd.f32 %v5057, %v4434
        %v5059 = vadd.f32 %v5058, %v4446
        %v5060 = vadd.f32 %v5059, %v4458
        %v5061 = vadd.f32 %v5060, %v4470
        %v5062 = vadd.f32 %v5061, %v4482
        %v5063 = vadd.f32 %v5062, %v4494
        %v5064 = vadd.f32 %v5063, %v4506
        %v5065 = vadd.f32 %v5064, %v4518
        %v5066 = vadd.f32 %v5065, %v4530
        %v5067 = vadd.f32 %v5066, %v4542
        %v5068 = vadd.f32 %v5067, %v4554
        %v5069 = vadd.f32 %v5068, %v4566
        %v5070 = vadd.f32 %v5069, %v4578
        %v5071 = vadd.f32 %v5070, %v4590
        %v5072 = vrot.slane %v5071, 4
        %v5073 = vadd.f32 %v5071, %v5072
        %v5074 = vrot.slane %v5073, 2
        %v5075 = vadd.f32 %v5073, %v5074
        %v5076 = vrot.slane %v5075, 1
        %v5077 = vadd.f32 %v5075, %v5076
        %v5078 = vadd.f32 %v4411, %v4423
        %v5079 = vadd.f32 %v5078, %v4435
        %v5080 = vadd.f32 %v5079, %v4447
        %v5081 = vadd.f32 %v5080, %v4459
        %v5082 = vadd.f32 %v5081, %v4471
        %v5083 = vadd.f32 %v5082, %v4483
        %v5084 = vadd.f32 %v5083, %v4495
        %v5085 = vadd.f32 %v5084, %v4507
        %v5086 = vadd.f32 %v5085, %v4519
        %v5087 = vadd.f32 %v5086, %v4531
        %v5088 = vadd.f32 %v5087, %v4543
        %v5089 = vadd.f32 %v5088, %v4555
        %v5090 = vadd.f32 %v5089, %v4567
        %v5091 = vadd.f32 %v5090, %v4579
        %v5092 = vadd.f32 %v5091, %v4591
        %v5093 = vrot.slane %v5092, 4
        %v5094 = vadd.f32 %v5092, %v5093
        %v5095 = vrot.slane %v5094, 2
        %v5096 = vadd.f32 %v5094, %v5095
        %v5097 = vrot.slane %v5096, 1
        %v5098 = vadd.f32 %v5096, %v5097
        %v5123 = vcombine.low %v4615, %v4636
        %v5124 = vcombine.low %v4657, %v4678
        %v5126 = vunpack.c.l.s4 1983009808
        %v5127 = vunpack.c.0.s8 %v5126
        %v5128 = vlaneseq
        %v5129 = vshrl.u32 %v5128, 7
        %v5130 = vsub.s32 %v5127, %v5129
        %v5131 = vrot.slane %v5123, %v5130
        %v5133 = vunpack.c.l.s4 1983009808
        %v5134 = vunpack.c.0.s8 %v5133
        %v5135 = vlaneseq
        %v5136 = vshrl.u32 %v5135, 7
        %v5137 = vsub.s32 %v5134, %v5136
        %v5138 = vrot.slane %v5124, %v5137
        %v5139 = vcombine.low %v5131, %v5138
        %v5140 = vcombine.low %v4699, %v4720
        %v5141 = vcombine.low %v4741, %v4762
        %v5143 = vunpack.c.l.s4 1983009808
        %v5144 = vunpack.c.0.s8 %v5143
        %v5145 = vlaneseq
        %v5146 = vshrl.u32 %v5145, 7
        %v5147 = vsub.s32 %v5144, %v5146
        %v5148 = vrot.slane %v5140, %v5147
        %v5150 = vunpack.c.l.s4 1983009808
        %v5151 = vunpack.c.0.s8 %v5150
        %v5152 = vlaneseq
        %v5153 = vshrl.u32 %v5152, 7
        %v5154 = vsub.s32 %v5151, %v5153
        %v5155 = vrot.slane %v5141, %v5154
        %v5156 = vcombine.low %v5148, %v5155
        %v5157 = vcombine.low %v4783, %v4804
        %v5158 = vcombine.low %v4825, %v4846
        %v5160 = vunpack.c.l.s4 1983009808
        %v5161 = vunpack.c.0.s8 %v5160
        %v5162 = vlaneseq
        %v5163 = vshrl.u32 %v5162, 7
        %v5164 = vsub.s32 %v5161, %v5163
        %v5165 = vrot.slane %v5157, %v5164
        %v5167 = vunpack.c.l.s4 1983009808
        %v5168 = vunpack.c.0.s8 %v5167
        %v5169 = vlaneseq
        %v5170 = vshrl.u32 %v5169, 7
        %v5171 = vsub.s32 %v5168, %v5170
        %v5172 = vrot.slane %v5158, %v5171
        %v5173 = vcombine.low %v5165, %v5172
        %v5174 = vcombine.low %v4867, %v4888
        %v5175 = vcombine.low %v4909, %v4930
        %v5177 = vunpack.c.l.s4 1983009808
        %v5178 = vunpack.c.0.s8 %v5177
        %v5179 = vlaneseq
        %v5180 = vshrl.u32 %v5179, 7
        %v5181 = vsub.s32 %v5178, %v5180
        %v5182 = vrot.slane %v5174, %v5181
        %v5184 = vunpack.c.l.s4 1983009808
        %v5185 = vunpack.c.0.s8 %v5184
        %v5186 = vlaneseq
        %v5187 = vshrl.u32 %v5186, 7
        %v5188 = vsub.s32 %v5185, %v5187
        %v5189 = vrot.slane %v5175, %v5188
        %v5190 = vcombine.low %v5182, %v5189
        %v5191 = vcombine.low %v4951, %v4972
        %v5192 = vcombine.low %v4993, %v5014
        %v5194 = vunpack.c.l.s4 1983009808
        %v5195 = vunpack.c.0.s8 %v5194
        %v5196 = vlaneseq
        %v5197 = vshrl.u32 %v5196, 7
        %v5198 = vsub.s32 %v5195, %v5197
        %v5199 = vrot.slane %v5191, %v5198
        %v5201 = vunpack.c.l.s4 1983009808
        %v5202 = vunpack.c.0.s8 %v5201
        %v5203 = vlaneseq
        %v5204 = vshrl.u32 %v5203, 7
        %v5205 = vsub.s32 %v5202, %v5204
        %v5206 = vrot.slane %v5192, %v5205
        %v5207 = vcombine.low %v5199, %v5206
        %v5208 = vcombine.low %v5035, %v5056
        %v5209 = vcombine.low %v5077, %v5098
        %v5211 = vunpack.c.l.s4 1983009808
        %v5212 = vunpack.c.0.s8 %v5211
        %v5213 = vlaneseq
        %v5214 = vshrl.u32 %v5213, 7
        %v5215 = vsub.s32 %v5212, %v5214
        %v5216 = vrot.slane %v5208, %v5215
        %v5218 = vunpack.c.l.s4 1983009808
        %v5219 = vunpack.c.0.s8 %v5218
        %v5220 = vlaneseq
        %v5221 = vshrl.u32 %v5220, 7
        %v5222 = vsub.s32 %v5219, %v5221
        %v5223 = vrot.slane %v5209, %v5222
        %v5224 = vcombine.low %v5216, %v5223
        %vm5225 = vcmask 1044484
        %v5226 = vsel %vm5225, %v5139, %v5139
        %vm5227 = vcmask 1046534
        %v5228 = vsel %vm5227, %v5139, %v5226
        %v5229 = vrot.slane %v5190, 7
        %vm5230 = vcmask 1041409
        %v5231 = vsel %vm5230, %v5229, %v5228
        %vm5232 = vcmask 1043459
        %v5233 = vsel %vm5232, %v5229, %v5231
        %vm5234 = vcmask 1045509
        %v5235 = vsel %vm5234, %v5229, %v5233
        %vm5236 = vcmask 1047559
        %v5237 = vsel %vm5236, %v5229, %v5235
        %v5238 = vsel %vm5225, %v5156, %v5156
        %v5239 = vsel %vm5227, %v5156, %v5238
        %v5240 = vrot.slane %v5207, 7
        %v5241 = vsel %vm5230, %v5240, %v5239
        %v5242 = vsel %vm5232, %v5240, %v5241
        %v5243 = vsel %vm5234, %v5240, %v5242
        %v5244 = vsel %vm5236, %v5240, %v5243
        %v5245 = vsel %vm5225, %v5173, %v5173
        %v5246 = vsel %vm5227, %v5173, %v5245
        %v5247 = vrot.slane %v5224, 7
        %v5248 = vsel %vm5230, %v5247, %v5246
        %v5249 = vsel %vm5232, %v5247, %v5248
        %v5250 = vsel %vm5234, %v5247, %v5249
        %v5251 = vsel %vm5236, %v5247, %v5250
        %v5255 = vadd.f32 %v4592, %v5237
        %v5256 = vadd.f32 %v4593, %v5244
        %v5257 = vadd.f32 %v4594, %v5251
        %5258 = vst [vmem:[#allocation2] sm:$0xff] %v5255
        %5259 = vst [vmem:[#allocation2 + $0x8] sm:$0xff] %v5256
        %5260 = vst [vmem:[#allocation2 + $0x10] sm:$0xff] %v5257
        %p5261 = scmp.eq.s32.totalorder %s23, 1
        // Predicated region
        $region90: #{tpu_custom_call.1} parent=76 // pred_check
          %p5262 = pneg %p5261
        $region91: #{tpu_custom_call.1} parent=76 // pred_check_branch
          %5264 = sbr.rel (%p5262) target = $region93
        $region92: #{tpu_custom_call.1} parent=76 // pred_region
          %v5265 = vld [vmem:[#allocation2] sm:$0xff]
          %v5266 = vld [vmem:[#allocation2 + $0x8] sm:$0xff]
          %v5267 = vld [vmem:[#allocation2 + $0x10] sm:$0xff]
          %v5268 = vmul.f32 %v5265, 0.00390625
          %v5269 = vmul.f32 %v5266, 0.00390625
          %v5270 = vmul.f32 %v5267, 0.00390625
          %v5271 = vld [vmem:[#allocation4] sm:$0xff]
          %v5272 = vld [vmem:[#allocation4 + $0x8] sm:$0xff]
          %v5273 = vld [vmem:[#allocation4 + $0x10] sm:$0xff]
          %v5274 = vld [vmem:[#allocation4 + $0x18] sm:$0xff]
          %v5275 = vld [vmem:[#allocation4 + $0x20] sm:$0xff]
          %v5276 = vld [vmem:[#allocation4 + $0x28] sm:$0xff]
          %v5277 = vld [vmem:[#allocation4 + $0x30] sm:$0xff]
          %v5278 = vld [vmem:[#allocation4 + $0x38] sm:$0xff]
          %v5279 = vld [vmem:[#allocation4 + $0x40] sm:$0xff]
          %v5280 = vld [vmem:[#allocation4 + $0x48] sm:$0xff]
          %v5281 = vld [vmem:[#allocation4 + $0x50] sm:$0xff]
          %v5282 = vld [vmem:[#allocation4 + $0x58] sm:$0xff]
          %v5283 = vld [vmem:[#allocation4 + $0x60] sm:$0xff]
          %v5284 = vld [vmem:[#allocation4 + $0x68] sm:$0xff]
          %v5285 = vld [vmem:[#allocation4 + $0x70] sm:$0xff]
          %v5286 = vld [vmem:[#allocation4 + $0x78] sm:$0xff]
          %v5287 = vld [vmem:[#allocation4 + $0x80] sm:$0xff]
          %v5288 = vld [vmem:[#allocation4 + $0x88] sm:$0xff]
          %v5289 = vld [vmem:[#allocation4 + $0x90] sm:$0xff]
          %v5290 = vld [vmem:[#allocation4 + $0x98] sm:$0xff]
          %v5291 = vld [vmem:[#allocation4 + $0xa0] sm:$0xff]
          %v5292 = vld [vmem:[#allocation4 + $0xa8] sm:$0xff]
          %v5293 = vld [vmem:[#allocation4 + $0xb0] sm:$0xff]
          %v5294 = vld [vmem:[#allocation4 + $0xb8] sm:$0xff]
          %v5295 = vld [vmem:[#allocation4 + $0xc0] sm:$0xff]
          %v5296 = vld [vmem:[#allocation4 + $0xc8] sm:$0xff]
          %v5297 = vld [vmem:[#allocation4 + $0xd0] sm:$0xff]
          %v5298 = vld [vmem:[#allocation4 + $0xd8] sm:$0xff]
          %v5299 = vld [vmem:[#allocation4 + $0xe0] sm:$0xff]
          %v5300 = vld [vmem:[#allocation4 + $0xe8] sm:$0xff]
          %v5301 = vld [vmem:[#allocation4 + $0xf0] sm:$0xff]
          %v5302 = vld [vmem:[#allocation4 + $0xf8] sm:$0xff]
          %v5303 = vld [vmem:[#allocation4 + $0x100] sm:$0xff]
          %v5304 = vld [vmem:[#allocation4 + $0x108] sm:$0xff]
          %v5305 = vld [vmem:[#allocation4 + $0x110] sm:$0xff]
          %v5306 = vld [vmem:[#allocation4 + $0x118] sm:$0xff]
          %v5307 = vld [vmem:[#allocation4 + $0x120] sm:$0xff]
          %v5308 = vld [vmem:[#allocation4 + $0x128] sm:$0xff]
          %v5309 = vld [vmem:[#allocation4 + $0x130] sm:$0xff]
          %v5310 = vld [vmem:[#allocation4 + $0x138] sm:$0xff]
          %v5311 = vld [vmem:[#allocation4 + $0x140] sm:$0xff]
          %v5312 = vld [vmem:[#allocation4 + $0x148] sm:$0xff]
          %v5313 = vld [vmem:[#allocation4 + $0x150] sm:$0xff]
          %v5314 = vld [vmem:[#allocation4 + $0x158] sm:$0xff]
          %v5315 = vld [vmem:[#allocation4 + $0x160] sm:$0xff]
          %v5316 = vld [vmem:[#allocation4 + $0x168] sm:$0xff]
          %v5317 = vld [vmem:[#allocation4 + $0x170] sm:$0xff]
          %v5318 = vld [vmem:[#allocation4 + $0x178] sm:$0xff]
          %v5319 = vld [vmem:[#allocation4 + $0x180] sm:$0xff]
          %v5320 = vld [vmem:[#allocation4 + $0x188] sm:$0xff]
          %v5321 = vld [vmem:[#allocation4 + $0x190] sm:$0xff]
          %v5322 = vld [vmem:[#allocation4 + $0x198] sm:$0xff]
          %v5323 = vld [vmem:[#allocation4 + $0x1a0] sm:$0xff]
          %v5324 = vld [vmem:[#allocation4 + $0x1a8] sm:$0xff]
          %v5325 = vld [vmem:[#allocation4 + $0x1b0] sm:$0xff]
          %v5326 = vld [vmem:[#allocation4 + $0x1b8] sm:$0xff]
          %v5327 = vld [vmem:[#allocation4 + $0x1c0] sm:$0xff]
          %v5328 = vld [vmem:[#allocation4 + $0x1c8] sm:$0xff]
          %v5329 = vld [vmem:[#allocation4 + $0x1d0] sm:$0xff]
          %v5330 = vld [vmem:[#allocation4 + $0x1d8] sm:$0xff]
          %v5331 = vld [vmem:[#allocation4 + $0x1e0] sm:$0xff]
          %v5332 = vld [vmem:[#allocation4 + $0x1e8] sm:$0xff]
          %v5333 = vld [vmem:[#allocation4 + $0x1f0] sm:$0xff]
          %v5334 = vld [vmem:[#allocation4 + $0x1f8] sm:$0xff]
          %v5335 = vld [vmem:[#allocation4 + $0x200] sm:$0xff]
          %v5336 = vld [vmem:[#allocation4 + $0x208] sm:$0xff]
          %v5337 = vld [vmem:[#allocation4 + $0x210] sm:$0xff]
          %v5338 = vld [vmem:[#allocation4 + $0x218] sm:$0xff]
          %v5339 = vld [vmem:[#allocation4 + $0x220] sm:$0xff]
          %v5340 = vld [vmem:[#allocation4 + $0x228] sm:$0xff]
          %v5341 = vld [vmem:[#allocation4 + $0x230] sm:$0xff]
          %v5342 = vld [vmem:[#allocation4 + $0x238] sm:$0xff]
          %v5343 = vld [vmem:[#allocation4 + $0x240] sm:$0xff]
          %v5344 = vld [vmem:[#allocation4 + $0x248] sm:$0xff]
          %v5345 = vld [vmem:[#allocation4 + $0x250] sm:$0xff]
          %v5346 = vld [vmem:[#allocation4 + $0x258] sm:$0xff]
          %v5347 = vld [vmem:[#allocation4 + $0x260] sm:$0xff]
          %v5348 = vld [vmem:[#allocation4 + $0x268] sm:$0xff]
          %v5349 = vld [vmem:[#allocation4 + $0x270] sm:$0xff]
          %v5350 = vld [vmem:[#allocation4 + $0x278] sm:$0xff]
          %v5351 = vld [vmem:[#allocation4 + $0x280] sm:$0xff]
          %v5352 = vld [vmem:[#allocation4 + $0x288] sm:$0xff]
          %v5353 = vld [vmem:[#allocation4 + $0x290] sm:$0xff]
          %v5354 = vld [vmem:[#allocation4 + $0x298] sm:$0xff]
          %v5355 = vld [vmem:[#allocation4 + $0x2a0] sm:$0xff]
          %v5356 = vld [vmem:[#allocation4 + $0x2a8] sm:$0xff]
          %v5357 = vld [vmem:[#allocation4 + $0x2b0] sm:$0xff]
          %v5358 = vld [vmem:[#allocation4 + $0x2b8] sm:$0xff]
          %v5359 = vld [vmem:[#allocation4 + $0x2c0] sm:$0xff]
          %v5360 = vld [vmem:[#allocation4 + $0x2c8] sm:$0xff]
          %v5361 = vld [vmem:[#allocation4 + $0x2d0] sm:$0xff]
          %v5362 = vld [vmem:[#allocation4 + $0x2d8] sm:$0xff]
          %v5363 = vld [vmem:[#allocation4 + $0x2e0] sm:$0xff]
          %v5364 = vld [vmem:[#allocation4 + $0x2e8] sm:$0xff]
          %v5365 = vld [vmem:[#allocation4 + $0x2f0] sm:$0xff]
          %v5366 = vld [vmem:[#allocation4 + $0x2f8] sm:$0xff]
          %v5367 = vld [vmem:[#allocation4 + $0x300] sm:$0xff]
          %v5368 = vld [vmem:[#allocation4 + $0x308] sm:$0xff]
          %v5369 = vld [vmem:[#allocation4 + $0x310] sm:$0xff]
          %v5370 = vld [vmem:[#allocation4 + $0x318] sm:$0xff]
          %v5371 = vld [vmem:[#allocation4 + $0x320] sm:$0xff]
          %v5372 = vld [vmem:[#allocation4 + $0x328] sm:$0xff]
          %v5373 = vld [vmem:[#allocation4 + $0x330] sm:$0xff]
          %v5374 = vld [vmem:[#allocation4 + $0x338] sm:$0xff]
          %v5375 = vld [vmem:[#allocation4 + $0x340] sm:$0xff]
          %v5376 = vld [vmem:[#allocation4 + $0x348] sm:$0xff]
          %v5377 = vld [vmem:[#allocation4 + $0x350] sm:$0xff]
          %v5378 = vld [vmem:[#allocation4 + $0x358] sm:$0xff]
          %v5379 = vld [vmem:[#allocation4 + $0x360] sm:$0xff]
          %v5380 = vld [vmem:[#allocation4 + $0x368] sm:$0xff]
          %v5381 = vld [vmem:[#allocation4 + $0x370] sm:$0xff]
          %v5382 = vld [vmem:[#allocation4 + $0x378] sm:$0xff]
          %v5383 = vld [vmem:[#allocation4 + $0x380] sm:$0xff]
          %v5384 = vld [vmem:[#allocation4 + $0x388] sm:$0xff]
          %v5385 = vld [vmem:[#allocation4 + $0x390] sm:$0xff]
          %v5386 = vld [vmem:[#allocation4 + $0x398] sm:$0xff]
          %v5387 = vld [vmem:[#allocation4 + $0x3a0] sm:$0xff]
          %v5388 = vld [vmem:[#allocation4 + $0x3a8] sm:$0xff]
          %v5389 = vld [vmem:[#allocation4 + $0x3b0] sm:$0xff]
          %v5390 = vld [vmem:[#allocation4 + $0x3b8] sm:$0xff]
          %v5391 = vld [vmem:[#allocation4 + $0x3c0] sm:$0xff]
          %v5392 = vld [vmem:[#allocation4 + $0x3c8] sm:$0xff]
          %v5393 = vld [vmem:[#allocation4 + $0x3d0] sm:$0xff]
          %v5394 = vld [vmem:[#allocation4 + $0x3d8] sm:$0xff]
          %v5395 = vld [vmem:[#allocation4 + $0x3e0] sm:$0xff]
          %v5396 = vld [vmem:[#allocation4 + $0x3e8] sm:$0xff]
          %v5397 = vld [vmem:[#allocation4 + $0x3f0] sm:$0xff]
          %v5398 = vld [vmem:[#allocation4 + $0x3f8] sm:$0xff]
          %v5399 = vld [vmem:[#allocation4 + $0x400] sm:$0xff]
          %v5400 = vld [vmem:[#allocation4 + $0x408] sm:$0xff]
          %v5401 = vld [vmem:[#allocation4 + $0x410] sm:$0xff]
          %v5402 = vld [vmem:[#allocation4 + $0x418] sm:$0xff]
          %v5403 = vld [vmem:[#allocation4 + $0x420] sm:$0xff]
          %v5404 = vld [vmem:[#allocation4 + $0x428] sm:$0xff]
          %v5405 = vld [vmem:[#allocation4 + $0x430] sm:$0xff]
          %v5406 = vld [vmem:[#allocation4 + $0x438] sm:$0xff]
          %v5407 = vld [vmem:[#allocation4 + $0x440] sm:$0xff]
          %v5408 = vld [vmem:[#allocation4 + $0x448] sm:$0xff]
          %v5409 = vld [vmem:[#allocation4 + $0x450] sm:$0xff]
          %v5410 = vld [vmem:[#allocation4 + $0x458] sm:$0xff]
          %v5411 = vld [vmem:[#allocation4 + $0x460] sm:$0xff]
          %v5412 = vld [vmem:[#allocation4 + $0x468] sm:$0xff]
          %v5413 = vld [vmem:[#allocation4 + $0x470] sm:$0xff]
          %v5414 = vld [vmem:[#allocation4 + $0x478] sm:$0xff]
          %v5415 = vld [vmem:[#allocation4 + $0x480] sm:$0xff]
          %v5416 = vld [vmem:[#allocation4 + $0x488] sm:$0xff]
          %v5417 = vld [vmem:[#allocation4 + $0x490] sm:$0xff]
          %v5418 = vld [vmem:[#allocation4 + $0x498] sm:$0xff]
          %v5419 = vld [vmem:[#allocation4 + $0x4a0] sm:$0xff]
          %v5420 = vld [vmem:[#allocation4 + $0x4a8] sm:$0xff]
          %v5421 = vld [vmem:[#allocation4 + $0x4b0] sm:$0xff]
          %v5422 = vld [vmem:[#allocation4 + $0x4b8] sm:$0xff]
          %v5423 = vld [vmem:[#allocation4 + $0x4c0] sm:$0xff]
          %v5424 = vld [vmem:[#allocation4 + $0x4c8] sm:$0xff]
          %v5425 = vld [vmem:[#allocation4 + $0x4d0] sm:$0xff]
          %v5426 = vld [vmem:[#allocation4 + $0x4d8] sm:$0xff]
          %v5427 = vld [vmem:[#allocation4 + $0x4e0] sm:$0xff]
          %v5428 = vld [vmem:[#allocation4 + $0x4e8] sm:$0xff]
          %v5429 = vld [vmem:[#allocation4 + $0x4f0] sm:$0xff]
          %v5430 = vld [vmem:[#allocation4 + $0x4f8] sm:$0xff]
          %v5431 = vld [vmem:[#allocation4 + $0x500] sm:$0xff]
          %v5432 = vld [vmem:[#allocation4 + $0x508] sm:$0xff]
          %v5433 = vld [vmem:[#allocation4 + $0x510] sm:$0xff]
          %v5434 = vld [vmem:[#allocation4 + $0x518] sm:$0xff]
          %v5435 = vld [vmem:[#allocation4 + $0x520] sm:$0xff]
          %v5436 = vld [vmem:[#allocation4 + $0x528] sm:$0xff]
          %v5437 = vld [vmem:[#allocation4 + $0x530] sm:$0xff]
          %v5438 = vld [vmem:[#allocation4 + $0x538] sm:$0xff]
          %v5439 = vld [vmem:[#allocation4 + $0x540] sm:$0xff]
          %v5440 = vld [vmem:[#allocation4 + $0x548] sm:$0xff]
          %v5441 = vld [vmem:[#allocation4 + $0x550] sm:$0xff]
          %v5442 = vld [vmem:[#allocation4 + $0x558] sm:$0xff]
          %v5443 = vld [vmem:[#allocation4 + $0x560] sm:$0xff]
          %v5444 = vld [vmem:[#allocation4 + $0x568] sm:$0xff]
          %v5445 = vld [vmem:[#allocation4 + $0x570] sm:$0xff]
          %v5446 = vld [vmem:[#allocation4 + $0x578] sm:$0xff]
          %v5447 = vld [vmem:[#allocation4 + $0x580] sm:$0xff]
          %v5448 = vld [vmem:[#allocation4 + $0x588] sm:$0xff]
          %v5449 = vld [vmem:[#allocation4 + $0x590] sm:$0xff]
          %v5450 = vld [vmem:[#allocation4 + $0x598] sm:$0xff]
          %v5451 = vld [vmem:[#allocation4 + $0x5a0] sm:$0xff]
          %v5452 = vld [vmem:[#allocation4 + $0x5a8] sm:$0xff]
          %v5453 = vld [vmem:[#allocation4 + $0x5b0] sm:$0xff]
          %v5454 = vld [vmem:[#allocation4 + $0x5b8] sm:$0xff]
          %v5455 = vld [vmem:[#allocation4 + $0x5c0] sm:$0xff]
          %v5456 = vld [vmem:[#allocation4 + $0x5c8] sm:$0xff]
          %v5457 = vld [vmem:[#allocation4 + $0x5d0] sm:$0xff]
          %v5458 = vld [vmem:[#allocation4 + $0x5d8] sm:$0xff]
          %v5459 = vld [vmem:[#allocation4 + $0x5e0] sm:$0xff]
          %v5460 = vld [vmem:[#allocation4 + $0x5e8] sm:$0xff]
          %v5461 = vld [vmem:[#allocation4 + $0x5f0] sm:$0xff]
          %v5462 = vld [vmem:[#allocation4 + $0x5f8] sm:$0xff]
          %v5463 = vld [vmem:[%s4] sm:$0x1]
          %v5465 = vlaneseq
          %v5466 = vshrl.u32 %v5465, 7
          %v5467 = vsub.s32 0, %v5466
          %v5468 = vrot.slane %v5463, %v5467
          %v5473 = vcombine.high %v5268, %v5268
          %v5475 = vunpack.c.l.s4 1983009808
          %v5476 = vunpack.c.0.s8 %v5475
          %v5477 = vlaneseq
          %v5478 = vshrl.u32 %v5477, 7
          %v5479 = vsub.s32 %v5476, %v5478
          %v5480 = vrot.slane %v5268, %v5479
          %v5482 = vunpack.c.l.s4 1983009808
          %v5483 = vunpack.c.0.s8 %v5482
          %v5484 = vlaneseq
          %v5485 = vshrl.u32 %v5484, 7
          %v5486 = vsub.s32 %v5483, %v5485
          %v5487 = vrot.slane %v5473, %v5486
          %v5488 = vcombine.high %v5480, %v5480
          %v5489 = vcombine.high %v5487, %v5487
          %v5490 = vcombine.high %v5269, %v5269
          %v5492 = vunpack.c.l.s4 1983009808
          %v5493 = vunpack.c.0.s8 %v5492
          %v5494 = vlaneseq
          %v5495 = vshrl.u32 %v5494, 7
          %v5496 = vsub.s32 %v5493, %v5495
          %v5497 = vrot.slane %v5269, %v5496
          %v5499 = vunpack.c.l.s4 1983009808
          %v5500 = vunpack.c.0.s8 %v5499
          %v5501 = vlaneseq
          %v5502 = vshrl.u32 %v5501, 7
          %v5503 = vsub.s32 %v5500, %v5502
          %v5504 = vrot.slane %v5490, %v5503
          %v5505 = vcombine.high %v5497, %v5497
          %v5506 = vcombine.high %v5504, %v5504
          %v5507 = vcombine.high %v5270, %v5270
          %v5509 = vunpack.c.l.s4 1983009808
          %v5510 = vunpack.c.0.s8 %v5509
          %v5511 = vlaneseq
          %v5512 = vshrl.u32 %v5511, 7
          %v5513 = vsub.s32 %v5510, %v5512
          %v5514 = vrot.slane %v5270, %v5513
          %v5516 = vunpack.c.l.s4 1983009808
          %v5517 = vunpack.c.0.s8 %v5516
          %v5518 = vlaneseq
          %v5519 = vshrl.u32 %v5518, 7
          %v5520 = vsub.s32 %v5517, %v5519
          %v5521 = vrot.slane %v5507, %v5520
          %v5522 = vcombine.high %v5514, %v5514
          %v5523 = vcombine.high %v5521, %v5521
          %5536 = vmatprep.subr.mxu0 0.0
          %5537 = vmatpush1.msra.mxu0 %v5271
          %5538 = vmatprep.subr.mxu0 0.0
          %5539 = vmatpush1.msra.mxu0 %v5272
          %5540 = vmatprep.subr.mxu0 0.0
          %5541 = vmatpush1.msra.mxu0 %v5273
          %5542 = vmatprep.subr.mxu0 0.0
          %5543 = vmatpush1.msra.mxu0 %v5274
          %5544 = vmatprep.subr.mxu0 0.0
          %5545 = vmatpush1.msra.mxu0 %v5275
          %5546 = vmatprep.subr.mxu0 0.0
          %5547 = vmatpush1.msra.mxu0 %v5276
          %5548 = vmatprep.subr.mxu0 0.0
          %5549 = vmatpush1.msra.mxu0 %v5277
          %5550 = vmatprep.subr.mxu0 0.0
          %5551 = vmatpush1.msra.mxu0 %v5278
          %5552 = vmatprep.subr.mxu0 0.0
          %5553 = vmatpush1.msra.mxu0 %v5279
          %5554 = vmatprep.subr.mxu0 0.0
          %5555 = vmatpush1.msra.mxu0 %v5280
          %5556 = vmatprep.subr.mxu0 0.0
          %5557 = vmatpush1.msra.mxu0 %v5281
          %5558 = vmatprep.subr.mxu0 0.0
          %5559 = vmatpush1.msra.mxu0 %v5282
          %5560 = vmatprep.subr.mxu0 0.0
          %5561 = vmatpush1.msra.mxu0 %v5283
          %5562 = vmatprep.subr.mxu0 0.0
          %5563 = vmatpush1.msra.mxu0 %v5284
          %5564 = vmatprep.subr.mxu0 0.0
          %5565 = vmatpush1.msra.mxu0 %v5285
          %5566 = vmatprep.subr.mxu0 0.0
          %5567 = vmatpush1.msra.mxu0 %v5286
          %5568 = vmatprep.subr.mxu0 0.0
          %5569 = vmatpush1.msra.mxu0 %v5287
          %5570 = vmatprep.subr.mxu0 0.0
          %5571 = vmatpush1.msra.mxu0 %v5288
          %5572 = vmatprep.subr.mxu0 0.0
          %5573 = vmatpush1.msra.mxu0 %v5289
          %5574 = vmatprep.subr.mxu0 0.0
          %5575 = vmatpush1.msra.mxu0 %v5290
          %5576 = vmatprep.subr.mxu0 0.0
          %5577 = vmatpush1.msra.mxu0 %v5291
          %5578 = vmatprep.subr.mxu0 0.0
          %5579 = vmatpush1.msra.mxu0 %v5292
          %5580 = vmatprep.subr.mxu0 0.0
          %5581 = vmatpush1.msra.mxu0 %v5293
          %5582 = vmatprep.subr.mxu0 0.0
          %5583 = vmatpush1.msra.mxu0 %v5294
          %5584 = vmatprep.subr.mxu0 0.0
          %5585 = vmatpush1.msra.mxu0 %v5295
          %5586 = vmatprep.subr.mxu0 0.0
          %5587 = vmatpush1.msra.mxu0 %v5296
          %5588 = vmatprep.subr.mxu0 0.0
          %5589 = vmatpush1.msra.mxu0 %v5297
          %5590 = vmatprep.subr.mxu0 0.0
          %5591 = vmatpush1.msra.mxu0 %v5298
          %5592 = vmatprep.subr.mxu0 0.0
          %5593 = vmatpush1.msra.mxu0 %v5299
          %5594 = vmatprep.subr.mxu0 0.0
          %5595 = vmatpush1.msra.mxu0 %v5300
          %5596 = vmatprep.subr.mxu0 0.0
          %5597 = vmatpush1.msra.mxu0 %v5301
          %5598 = vmatprep.subr.mxu0 0.0
          %5599 = vmatpush1.msra.mxu0 %v5302
          %5600 = vmatprep.mubr.f32.mxu0 %v5488
          %5601 = vmatmul.mubr.f32.gmra.mrb[0].mxu0 %v5480
          %v5602 = vpop.f32.mrb[0].mxu0
          %v5603 = vadd.f32 %v5468, %v5602
          %v5604 = vpop.f32.mrb[0].mxu0
          %5605 = vdwg.mxu0
          %5606 = vmatprep.subr.mxu0 0.0
          %5607 = vmatpush1.msra.mxu0 %v5303
          %5608 = vmatprep.subr.mxu0 0.0
          %5609 = vmatpush1.msra.mxu0 %v5304
          %5610 = vmatprep.subr.mxu0 0.0
          %5611 = vmatpush1.msra.mxu0 %v5305
          %5612 = vmatprep.subr.mxu0 0.0
          %5613 = vmatpush1.msra.mxu0 %v5306
          %5614 = vmatprep.subr.mxu0 0.0
          %5615 = vmatpush1.msra.mxu0 %v5307
          %5616 = vmatprep.subr.mxu0 0.0
          %5617 = vmatpush1.msra.mxu0 %v5308
          %5618 = vmatprep.subr.mxu0 0.0
          %5619 = vmatpush1.msra.mxu0 %v5309
          %5620 = vmatprep.subr.mxu0 0.0
          %5621 = vmatpush1.msra.mxu0 %v5310
          %5622 = vmatprep.subr.mxu0 0.0
          %5623 = vmatpush1.msra.mxu0 %v5311
          %5624 = vmatprep.subr.mxu0 0.0
          %5625 = vmatpush1.msra.mxu0 %v5312
          %5626 = vmatprep.subr.mxu0 0.0
          %5627 = vmatpush1.msra.mxu0 %v5313
          %5628 = vmatprep.subr.mxu0 0.0
          %5629 = vmatpush1.msra.mxu0 %v5314
          %5630 = vmatprep.subr.mxu0 0.0
          %5631 = vmatpush1.msra.mxu0 %v5315
          %5632 = vmatprep.subr.mxu0 0.0
          %5633 = vmatpush1.msra.mxu0 %v5316
          %5634 = vmatprep.subr.mxu0 0.0
          %5635 = vmatpush1.msra.mxu0 %v5317
          %5636 = vmatprep.subr.mxu0 0.0
          %5637 = vmatpush1.msra.mxu0 %v5318
          %5638 = vmatprep.subr.mxu0 0.0
          %5639 = vmatpush1.msra.mxu0 %v5319
          %5640 = vmatprep.subr.mxu0 0.0
          %5641 = vmatpush1.msra.mxu0 %v5320
          %5642 = vmatprep.subr.mxu0 0.0
          %5643 = vmatpush1.msra.mxu0 %v5321
          %5644 = vmatprep.subr.mxu0 0.0
          %5645 = vmatpush1.msra.mxu0 %v5322
          %5646 = vmatprep.subr.mxu0 0.0
          %5647 = vmatpush1.msra.mxu0 %v5323
          %5648 = vmatprep.subr.mxu0 0.0
          %5649 = vmatpush1.msra.mxu0 %v5324
          %5650 = vmatprep.subr.mxu0 0.0
          %5651 = vmatpush1.msra.mxu0 %v5325
          %5652 = vmatprep.subr.mxu0 0.0
          %5653 = vmatpush1.msra.mxu0 %v5326
          %5654 = vmatprep.subr.mxu0 0.0
          %5655 = vmatpush1.msra.mxu0 %v5327
          %5656 = vmatprep.subr.mxu0 0.0
          %5657 = vmatpush1.msra.mxu0 %v5328
          %5658 = vmatprep.subr.mxu0 0.0
          %5659 = vmatpush1.msra.mxu0 %v5329
          %5660 = vmatprep.subr.mxu0 0.0
          %5661 = vmatpush1.msra.mxu0 %v5330
          %5662 = vmatprep.subr.mxu0 0.0
          %5663 = vmatpush1.msra.mxu0 %v5331
          %5664 = vmatprep.subr.mxu0 0.0
          %5665 = vmatpush1.msra.mxu0 %v5332
          %5666 = vmatprep.subr.mxu0 0.0
          %5667 = vmatpush1.msra.mxu0 %v5333
          %5668 = vmatprep.subr.mxu0 0.0
          %5669 = vmatpush1.msra.mxu0 %v5334
          %5670 = vmatprep.mubr.f32.mxu0 %v5489
          %5671 = vmatmul.mubr.f32.gmra.mrb[0].mxu0 %v5487
          %v5672 = vpop.f32.mrb[0].mxu0
          %v5673 = vadd.f32 %v5603, %v5672
          %v5674 = vpop.f32.mrb[0].mxu0
          %5675 = vdwg.mxu0
          %5676 = vmatprep.subr.mxu0 0.0
          %5677 = vmatpush1.msra.mxu0 %v5335
          %5678 = vmatprep.subr.mxu0 0.0
          %5679 = vmatpush1.msra.mxu0 %v5336
          %5680 = vmatprep.subr.mxu0 0.0
          %5681 = vmatpush1.msra.mxu0 %v5337
          %5682 = vmatprep.subr.mxu0 0.0
          %5683 = vmatpush1.msra.mxu0 %v5338
          %5684 = vmatprep.subr.mxu0 0.0
          %5685 = vmatpush1.msra.mxu0 %v5339
          %5686 = vmatprep.subr.mxu0 0.0
          %5687 = vmatpush1.msra.mxu0 %v5340
          %5688 = vmatprep.subr.mxu0 0.0
          %5689 = vmatpush1.msra.mxu0 %v5341
          %5690 = vmatprep.subr.mxu0 0.0
          %5691 = vmatpush1.msra.mxu0 %v5342
          %5692 = vmatprep.subr.mxu0 0.0
          %5693 = vmatpush1.msra.mxu0 %v5343
          %5694 = vmatprep.subr.mxu0 0.0
          %5695 = vmatpush1.msra.mxu0 %v5344
          %5696 = vmatprep.subr.mxu0 0.0
          %5697 = vmatpush1.msra.mxu0 %v5345
          %5698 = vmatprep.subr.mxu0 0.0
          %5699 = vmatpush1.msra.mxu0 %v5346
          %5700 = vmatprep.subr.mxu0 0.0
          %5701 = vmatpush1.msra.mxu0 %v5347
          %5702 = vmatprep.subr.mxu0 0.0
          %5703 = vmatpush1.msra.mxu0 %v5348
          %5704 = vmatprep.subr.mxu0 0.0
          %5705 = vmatpush1.msra.mxu0 %v5349
          %5706 = vmatprep.subr.mxu0 0.0
          %5707 = vmatpush1.msra.mxu0 %v5350
          %5708 = vmatprep.subr.mxu0 0.0
          %5709 = vmatpush1.msra.mxu0 %v5351
          %5710 = vmatprep.subr.mxu0 0.0
          %5711 = vmatpush1.msra.mxu0 %v5352
          %5712 = vmatprep.subr.mxu0 0.0
          %5713 = vmatpush1.msra.mxu0 %v5353
          %5714 = vmatprep.subr.mxu0 0.0
          %5715 = vmatpush1.msra.mxu0 %v5354
          %5716 = vmatprep.subr.mxu0 0.0
          %5717 = vmatpush1.msra.mxu0 %v5355
          %5718 = vmatprep.subr.mxu0 0.0
          %5719 = vmatpush1.msra.mxu0 %v5356
          %5720 = vmatprep.subr.mxu0 0.0
          %5721 = vmatpush1.msra.mxu0 %v5357
          %5722 = vmatprep.subr.mxu0 0.0
          %5723 = vmatpush1.msra.mxu0 %v5358
          %5724 = vmatprep.subr.mxu0 0.0
          %5725 = vmatpush1.msra.mxu0 %v5359
          %5726 = vmatprep.subr.mxu0 0.0
          %5727 = vmatpush1.msra.mxu0 %v5360
          %5728 = vmatprep.subr.mxu0 0.0
          %5729 = vmatpush1.msra.mxu0 %v5361
          %5730 = vmatprep.subr.mxu0 0.0
          %5731 = vmatpush1.msra.mxu0 %v5362
          %5732 = vmatprep.subr.mxu0 0.0
          %5733 = vmatpush1.msra.mxu0 %v5363
          %5734 = vmatprep.subr.mxu0 0.0
          %5735 = vmatpush1.msra.mxu0 %v5364
          %5736 = vmatprep.subr.mxu0 0.0
          %5737 = vmatpush1.msra.mxu0 %v5365
          %5738 = vmatprep.subr.mxu0 0.0
          %5739 = vmatpush1.msra.mxu0 %v5366
          %5740 = vmatprep.mubr.f32.mxu0 %v5505
          %5741 = vmatmul.mubr.f32.gmra.mrb[0].mxu0 %v5497
          %v5742 = vpop.f32.mrb[0].mxu0
          %v5743 = vadd.f32 %v5673, %v5742
          %v5744 = vpop.f32.mrb[0].mxu0
          %5745 = vdwg.mxu0
          %5746 = vmatprep.subr.mxu0 0.0
          %5747 = vmatpush1.msra.mxu0 %v5367
          %5748 = vmatprep.subr.mxu0 0.0
          %5749 = vmatpush1.msra.mxu0 %v5368
          %5750 = vmatprep.subr.mxu0 0.0
          %5751 = vmatpush1.msra.mxu0 %v5369
          %5752 = vmatprep.subr.mxu0 0.0
          %5753 = vmatpush1.msra.mxu0 %v5370
          %5754 = vmatprep.subr.mxu0 0.0
          %5755 = vmatpush1.msra.mxu0 %v5371
          %5756 = vmatprep.subr.mxu0 0.0
          %5757 = vmatpush1.msra.mxu0 %v5372
          %5758 = vmatprep.subr.mxu0 0.0
          %5759 = vmatpush1.msra.mxu0 %v5373
          %5760 = vmatprep.subr.mxu0 0.0
          %5761 = vmatpush1.msra.mxu0 %v5374
          %5762 = vmatprep.subr.mxu0 0.0
          %5763 = vmatpush1.msra.mxu0 %v5375
          %5764 = vmatprep.subr.mxu0 0.0
          %5765 = vmatpush1.msra.mxu0 %v5376
          %5766 = vmatprep.subr.mxu0 0.0
          %5767 = vmatpush1.msra.mxu0 %v5377
          %5768 = vmatprep.subr.mxu0 0.0
          %5769 = vmatpush1.msra.mxu0 %v5378
          %5770 = vmatprep.subr.mxu0 0.0
          %5771 = vmatpush1.msra.mxu0 %v5379
          %5772 = vmatprep.subr.mxu0 0.0
          %5773 = vmatpush1.msra.mxu0 %v5380
          %5774 = vmatprep.subr.mxu0 0.0
          %5775 = vmatpush1.msra.mxu0 %v5381
          %5776 = vmatprep.subr.mxu0 0.0
          %5777 = vmatpush1.msra.mxu0 %v5382
          %5778 = vmatprep.subr.mxu0 0.0
          %5779 = vmatpush1.msra.mxu0 %v5383
          %5780 = vmatprep.subr.mxu0 0.0
          %5781 = vmatpush1.msra.mxu0 %v5384
          %5782 = vmatprep.subr.mxu0 0.0
          %5783 = vmatpush1.msra.mxu0 %v5385
          %5784 = vmatprep.subr.mxu0 0.0
          %5785 = vmatpush1.msra.mxu0 %v5386
          %5786 = vmatprep.subr.mxu0 0.0
          %5787 = vmatpush1.msra.mxu0 %v5387
          %5788 = vmatprep.subr.mxu0 0.0
          %5789 = vmatpush1.msra.mxu0 %v5388
          %5790 = vmatprep.subr.mxu0 0.0
          %5791 = vmatpush1.msra.mxu0 %v5389
          %5792 = vmatprep.subr.mxu0 0.0
          %5793 = vmatpush1.msra.mxu0 %v5390
          %5794 = vmatprep.subr.mxu0 0.0
          %5795 = vmatpush1.msra.mxu0 %v5391
          %5796 = vmatprep.subr.mxu0 0.0
          %5797 = vmatpush1.msra.mxu0 %v5392
          %5798 = vmatprep.subr.mxu0 0.0
          %5799 = vmatpush1.msra.mxu0 %v5393
          %5800 = vmatprep.subr.mxu0 0.0
          %5801 = vmatpush1.msra.mxu0 %v5394
          %5802 = vmatprep.subr.mxu0 0.0
          %5803 = vmatpush1.msra.mxu0 %v5395
          %5804 = vmatprep.subr.mxu0 0.0
          %5805 = vmatpush1.msra.mxu0 %v5396
          %5806 = vmatprep.subr.mxu0 0.0
          %5807 = vmatpush1.msra.mxu0 %v5397
          %5808 = vmatprep.subr.mxu0 0.0
          %5809 = vmatpush1.msra.mxu0 %v5398
          %5810 = vmatprep.mubr.f32.mxu0 %v5506
          %5811 = vmatmul.mubr.f32.gmra.mrb[0].mxu0 %v5504
          %v5812 = vpop.f32.mrb[0].mxu0
          %v5813 = vadd.f32 %v5743, %v5812
          %v5814 = vpop.f32.mrb[0].mxu0
          %5815 = vdwg.mxu0
          %5816 = vmatprep.subr.mxu0 0.0
          %5817 = vmatpush1.msra.mxu0 %v5399
          %5818 = vmatprep.subr.mxu0 0.0
          %5819 = vmatpush1.msra.mxu0 %v5400
          %5820 = vmatprep.subr.mxu0 0.0
          %5821 = vmatpush1.msra.mxu0 %v5401
          %5822 = vmatprep.subr.mxu0 0.0
          %5823 = vmatpush1.msra.mxu0 %v5402
          %5824 = vmatprep.subr.mxu0 0.0
          %5825 = vmatpush1.msra.mxu0 %v5403
          %5826 = vmatprep.subr.mxu0 0.0
          %5827 = vmatpush1.msra.mxu0 %v5404
          %5828 = vmatprep.subr.mxu0 0.0
          %5829 = vmatpush1.msra.mxu0 %v5405
          %5830 = vmatprep.subr.mxu0 0.0
          %5831 = vmatpush1.msra.mxu0 %v5406
          %5832 = vmatprep.subr.mxu0 0.0
          %5833 = vmatpush1.msra.mxu0 %v5407
          %5834 = vmatprep.subr.mxu0 0.0
          %5835 = vmatpush1.msra.mxu0 %v5408
          %5836 = vmatprep.subr.mxu0 0.0
          %5837 = vmatpush1.msra.mxu0 %v5409
          %5838 = vmatprep.subr.mxu0 0.0
          %5839 = vmatpush1.msra.mxu0 %v5410
          %5840 = vmatprep.subr.mxu0 0.0
          %5841 = vmatpush1.msra.mxu0 %v5411
          %5842 = vmatprep.subr.mxu0 0.0
          %5843 = vmatpush1.msra.mxu0 %v5412
          %5844 = vmatprep.subr.mxu0 0.0
          %5845 = vmatpush1.msra.mxu0 %v5413
          %5846 = vmatprep.subr.mxu0 0.0
          %5847 = vmatpush1.msra.mxu0 %v5414
          %5848 = vmatprep.subr.mxu0 0.0
          %5849 = vmatpush1.msra.mxu0 %v5415
          %5850 = vmatprep.subr.mxu0 0.0
          %5851 = vmatpush1.msra.mxu0 %v5416
          %5852 = vmatprep.subr.mxu0 0.0
          %5853 = vmatpush1.msra.mxu0 %v5417
          %5854 = vmatprep.subr.mxu0 0.0
          %5855 = vmatpush1.msra.mxu0 %v5418
          %5856 = vmatprep.subr.mxu0 0.0
          %5857 = vmatpush1.msra.mxu0 %v5419
          %5858 = vmatprep.subr.mxu0 0.0
          %5859 = vmatpush1.msra.mxu0 %v5420
          %5860 = vmatprep.subr.mxu0 0.0
          %5861 = vmatpush1.msra.mxu0 %v5421
          %5862 = vmatprep.subr.mxu0 0.0
          %5863 = vmatpush1.msra.mxu0 %v5422
          %5864 = vmatprep.subr.mxu0 0.0
          %5865 = vmatpush1.msra.mxu0 %v5423
          %5866 = vmatprep.subr.mxu0 0.0
          %5867 = vmatpush1.msra.mxu0 %v5424
          %5868 = vmatprep.subr.mxu0 0.0
          %5869 = vmatpush1.msra.mxu0 %v5425
          %5870 = vmatprep.subr.mxu0 0.0
          %5871 = vmatpush1.msra.mxu0 %v5426
          %5872 = vmatprep.subr.mxu0 0.0
          %5873 = vmatpush1.msra.mxu0 %v5427
          %5874 = vmatprep.subr.mxu0 0.0
          %5875 = vmatpush1.msra.mxu0 %v5428
          %5876 = vmatprep.subr.mxu0 0.0
          %5877 = vmatpush1.msra.mxu0 %v5429
          %5878 = vmatprep.subr.mxu0 0.0
          %5879 = vmatpush1.msra.mxu0 %v5430
          %5880 = vmatprep.mubr.f32.mxu0 %v5522
          %5881 = vmatmul.mubr.f32.gmra.mrb[0].mxu0 %v5514
          %v5882 = vpop.f32.mrb[0].mxu0
          %v5883 = vadd.f32 %v5813, %v5882
          %v5884 = vpop.f32.mrb[0].mxu0
          %5885 = vdwg.mxu0
          %5886 = vmatprep.subr.mxu0 0.0
          %5887 = vmatpush1.msra.mxu0 %v5431
          %5888 = vmatprep.subr.mxu0 0.0
          %5889 = vmatpush1.msra.mxu0 %v5432
          %5890 = vmatprep.subr.mxu0 0.0
          %5891 = vmatpush1.msra.mxu0 %v5433
          %5892 = vmatprep.subr.mxu0 0.0
          %5893 = vmatpush1.msra.mxu0 %v5434
          %5894 = vmatprep.subr.mxu0 0.0
          %5895 = vmatpush1.msra.mxu0 %v5435
          %5896 = vmatprep.subr.mxu0 0.0
          %5897 = vmatpush1.msra.mxu0 %v5436
          %5898 = vmatprep.subr.mxu0 0.0
          %5899 = vmatpush1.msra.mxu0 %v5437
          %5900 = vmatprep.subr.mxu0 0.0
          %5901 = vmatpush1.msra.mxu0 %v5438
          %5902 = vmatprep.subr.mxu0 0.0
          %5903 = vmatpush1.msra.mxu0 %v5439
          %5904 = vmatprep.subr.mxu0 0.0
          %5905 = vmatpush1.msra.mxu0 %v5440
          %5906 = vmatprep.subr.mxu0 0.0
          %5907 = vmatpush1.msra.mxu0 %v5441
          %5908 = vmatprep.subr.mxu0 0.0
          %5909 = vmatpush1.msra.mxu0 %v5442
          %5910 = vmatprep.subr.mxu0 0.0
          %5911 = vmatpush1.msra.mxu0 %v5443
          %5912 = vmatprep.subr.mxu0 0.0
          %5913 = vmatpush1.msra.mxu0 %v5444
          %5914 = vmatprep.subr.mxu0 0.0
          %5915 = vmatpush1.msra.mxu0 %v5445
          %5916 = vmatprep.subr.mxu0 0.0
          %5917 = vmatpush1.msra.mxu0 %v5446
          %5918 = vmatprep.subr.mxu0 0.0
          %5919 = vmatpush1.msra.mxu0 %v5447
          %5920 = vmatprep.subr.mxu0 0.0
          %5921 = vmatpush1.msra.mxu0 %v5448
          %5922 = vmatprep.subr.mxu0 0.0
          %5923 = vmatpush1.msra.mxu0 %v5449
          %5924 = vmatprep.subr.mxu0 0.0
          %5925 = vmatpush1.msra.mxu0 %v5450
          %5926 = vmatprep.subr.mxu0 0.0
          %5927 = vmatpush1.msra.mxu0 %v5451
          %5928 = vmatprep.subr.mxu0 0.0
          %5929 = vmatpush1.msra.mxu0 %v5452
          %5930 = vmatprep.subr.mxu0 0.0
          %5931 = vmatpush1.msra.mxu0 %v5453
          %5932 = vmatprep.subr.mxu0 0.0
          %5933 = vmatpush1.msra.mxu0 %v5454
          %5934 = vmatprep.subr.mxu0 0.0
          %5935 = vmatpush1.msra.mxu0 %v5455
          %5936 = vmatprep.subr.mxu0 0.0
          %5937 = vmatpush1.msra.mxu0 %v5456
          %5938 = vmatprep.subr.mxu0 0.0
          %5939 = vmatpush1.msra.mxu0 %v5457
          %5940 = vmatprep.subr.mxu0 0.0
          %5941 = vmatpush1.msra.mxu0 %v5458
          %5942 = vmatprep.subr.mxu0 0.0
          %5943 = vmatpush1.msra.mxu0 %v5459
          %5944 = vmatprep.subr.mxu0 0.0
          %5945 = vmatpush1.msra.mxu0 %v5460
          %5946 = vmatprep.subr.mxu0 0.0
          %5947 = vmatpush1.msra.mxu0 %v5461
          %5948 = vmatprep.subr.mxu0 0.0
          %5949 = vmatpush1.msra.mxu0 %v5462
          %5950 = vmatprep.mubr.f32.mxu0 %v5523
          %5951 = vmatmul.mubr.f32.gmra.mrb[0].mxu0 %v5521
          %v5952 = vpop.f32.mrb[0].mxu0
          %v5953 = vadd.f32 %v5883, %v5952
          %v5954 = vpop.f32.mrb[0].mxu0
          %5955 = vdwg.mxu0
          %5956 = vst [vmem:[#allocation7] sm:$0x3] %v5953
        $region93: #{tpu_custom_call.1} parent=76 // pred_fallthru
          _
        // Predicated region
        $region94: #{tpu_custom_call.1} parent=76 // pred_check
          %p5957 = pneg %p160
        $region95: #{tpu_custom_call.1} parent=76 // pred_check_branch
          %5959 = sbr.rel (%p5957) target = $region97
        $region96: #{tpu_custom_call.1} parent=76 // pred_region
          %s5961 = ssub.s32 32, 32
          %5962 = vsyncadd [#allocation6], %s5961
          %s5963 = smul.addr %s22, 32
          %s5964 = scalar_lea.hbm %s5, %s5963
          %s5966 = sshll.u32 [#allocation7], 4
          %s5967 = int_to_ptr.vmem [resolvable:$true] %s5966
          %5969 = dma.vmem_to_hbm [thread:$0]  %s5967, 32, %s5964, [#allocation6]
        $region97: #{tpu_custom_call.1} parent=76 // pred_fallthru
          _
        // Predicated region
        $region98: #{tpu_custom_call.1} parent=76 // pred_check
          %p5970 = pneg %p160
        $region99: #{tpu_custom_call.1} parent=76 // pred_check_branch
          %5972 = sbr.rel (%p5970) target = $region101
        $region100: #{tpu_custom_call.1} parent=76 // pred_region
          %5973 = dma.done [#allocation6], 32
        $region101: #{tpu_custom_call.1} parent=76 // pred_fallthru
          _
      $region77: #{tpu_custom_call.1} parent=5 // pred_fallthru
        _
      %p5974 = scmp.le.s32.totalorder 2, %s13
      // Predicated region
      $region102: #{tpu_custom_call.1} parent=5 // pred_check
        %p5975 = pneg %p5974
      $region103: #{tpu_custom_call.1} parent=5 // pred_check_branch
        %5977 = sbr.rel (%p5975) target = $region105
      $region104: #{tpu_custom_call.1} parent=5 // pred_region
        %s5978 = ssub.s32 %s13, 2
      $region105: #{tpu_custom_call.1} parent=5 // pred_fallthru
        _
    $region6: #{tpu_custom_call.1} parent=1 // loop_footer
      %s17 = sadd.s32 1, %s13
    $region7: #{tpu_custom_call.1} parent=1 // loop_footer_branch
      %12 = sbr.rel target = $region3
    $region8: #{tpu_custom_call.1} parent=1 // loop_exit
      _
    %5979 = vsyncpa [#allocation5], 1
    %s5980 = scalar_lea.sflag [#allocation5], 1
    %5981 = vsyncpa %s5980, 1
    %5982 = vsyncpa [#allocation6], 1
    %s5983 = scalar_lea.sflag [#allocation6], 1
    %5984 = vsyncpa %s5983, 1

</llo_original>
